<compile_context>
chip_gen: v5e
topology: v5e:2x2
jax: 0.10.0
libtpu: 0.0.40
codegen_flags: <defaults>
</compile_context>

<pallas_src>
import jax
import jax.numpy as jnp
from jax.experimental import pallas as pl
from jax.experimental.pallas import tpu as pltpu

EPS = 1e-5


def _fill_reflect_pad(pad_ref, src):
    """Write ReflectionPad2d(1)(src) into pad_ref, an (H+2, W+2, C) VMEM scratch.

    Interior store + 2 column strips + 2 full-row copies: O((H + W) * C) halo
    traffic instead of full-tensor concatenates.
    """
    H, W, _ = src.shape
    pad_ref[1:H + 1, 1:W + 1, :] = src
    # Left / right halo columns: reflect source columns 1 and W-2.
    pad_ref[1:H + 1, 0:1, :] = src[:, 1:2, :]
    pad_ref[1:H + 1, W + 1:W + 2, :] = src[:, W - 2:W - 1, :]
    # Top / bottom halo rows (corners included): reflect padded rows 2 and H-1.
    pad_ref[0:1, :, :] = pad_ref[2:3, :, :]
    pad_ref[H + 1:H + 2, :, :] = pad_ref[H - 1:H, :, :]


def _conv3x3(pad_ref, w_ref, H, W, C):
    """3x3 valid conv of the padded scratch with weights (3, 3C, C).

    Builds only an (H+2, W, 3C) column slab; issues 3 accumulated K=3C matmuls
    (one per kernel-row shift), each flattened to one M = H*W jnp.dot with fp32
    accumulation.  cols last-dim layout (kj*C + cin) matches w rows.
    """
    xp = pad_ref[...]                                              # (H+2, W+2, C)
    cols = jnp.concatenate([xp[:, j:j + W, :] for j in range(3)], axis=-1)
    acc = jnp.zeros((H * W, C), jnp.float32)
    for ki in range(3):
        lhs = cols[ki:ki + H].reshape(H * W, 3 * C)                # (H*W, 3C)
        acc = acc + jnp.dot(lhs, w_ref[ki],
                            preferred_element_type=jnp.float32)
    return acc                                                      # (H*W, C) f32


def _instance_norm(y, hw):
    """InstanceNorm2d (affine=False, biased variance) on (H*W, C) fp32.

    Single statistics pass (sum and sum-of-squares together), then one
    normalize pass; all accumulation in fp32.
    """
    inv_hw = 1.0 / hw
    s1 = jnp.sum(y, axis=0, keepdims=True)
    s2 = jnp.sum(y * y, axis=0, keepdims=True)
    mean = s1 * inv_hw
    var = jnp.maximum(s2 * inv_hw - mean * mean, 0.0)
    return (y - mean) * jax.lax.rsqrt(var + EPS)


def resnet_block_kernel(x_ref, w1_ref, w2_ref, o_ref, pad_ref):
    _, H, W, C = x_ref.shape
    hw = H * W
    cdt = pad_ref.dtype                                             # MXU operand dtype

    x = x_ref[0]                                                    # (H, W, C) f32 residual

    # conv block, branch 1: reflect pad -> conv3x3 -> IN -> ReLU (bias cancels under IN)
    _fill_reflect_pad(pad_ref, x.astype(cdt))
    y1 = _conv3x3(pad_ref, w1_ref, H, W, C)
    h = jnp.maximum(_instance_norm(y1, hw), 0.0)                    # (H*W, C) f32

    # conv block, branch 2: reflect pad -> conv3x3 -> IN (same scratch reused)
    _fill_reflect_pad(pad_ref, h.reshape(H, W, C).astype(cdt))
    y2 = _conv3x3(pad_ref, w2_ref, H, W, C)
    h2 = _instance_norm(y2, hw)

    # residual connection
    o_ref[0] = (x + h2.reshape(H, W, C)).astype(o_ref.dtype)


def _vmem_limit_bytes():
    """Generation-dependent limit: 3/4 of physical VMEM (96 MiB v5e/v6e, 48 MiB v7x)."""
    try:
        cap = int(pltpu.get_tpu_info().vmem_capacity_bytes)
    except Exception:
        cap = 128 * 1024 * 1024
    return (cap * 3) // 4


def resnet_block(x_nchw, w1, w2, b1=None, b2=None, *, conv_dtype=jnp.bfloat16):
    """ResnetBlock forward.

    x_nchw: (N, C, H, W) float32.  w*: (9, C_in, C_out) with k = 3*ki + kj.
    b1 / b2 are accepted for interface parity with the PyTorch module but never
    loaded: a per-channel conv bias before InstanceNorm2d(affine=False) is
    exactly cancelled by the mean subtraction.
    conv_dtype: MXU operand dtype. Default bf16 on ALL generations (v5e too):
    only the matmul operands are bf16, elementwise / IN math stays fp32.
    """
    del b1, b2                                                      # exact no-ops under IN
    N, C, H, W = x_nchw.shape
    x = jnp.transpose(x_nchw, (0, 2, 3, 1))                         # NHWC, channels -> lanes
    w1f = w1.reshape(3, 3 * C, C).astype(conv_dtype)                # (ki, kj*C + cin, cout)
    w2f = w2.reshape(3, 3 * C, C).astype(conv_dtype)

    out = pl.pallas_call(
        resnet_block_kernel,
        out_shape=jax.ShapeDtypeStruct((N, H, W, C), x.dtype),
        grid=(N,),
        in_specs=[
            pl.BlockSpec((1, H, W, C), lambda n: (n, 0, 0, 0)),
            # Constant index_map + single buffer: each weight is DMA'd once and
            # never double-buffered.
            pl.BlockSpec((3, 3 * C, C), lambda n: (0, 0, 0),
                         pipeline_mode=pl.Buffered(1)),
            pl.BlockSpec((3, 3 * C, C), lambda n: (0, 0, 0),
                         pipeline_mode=pl.Buffered(1)),
        ],
        out_specs=pl.BlockSpec((1, H, W, C), lambda n: (n, 0, 0, 0)),
        scratch_shapes=[pltpu.VMEM((H + 2, W + 2, C), conv_dtype)],  # reused pad buffer
        compiler_params=pltpu.CompilerParams(
            dimension_semantics=("parallel",),        # megacore split over batch
            vmem_limit_bytes=_vmem_limit_bytes(),
        ),
    )(x, w1f, w2f)

    return jnp.transpose(out, (0, 3, 1, 2))                         # back to NCHW


def ref_forward(x_nchw, w1, b1, w2, b2):
    """Pure-JAX reference of the same ResnetBlock forward (WITH conv biases)."""
    x = jnp.transpose(x_nchw, (0, 2, 3, 1))
    C = x.shape[-1]

    def conv_norm(inp, w, b):
        xp = jnp.pad(inp, ((0, 0), (1, 1), (1, 1), (0, 0)), mode='reflect')
        k = w.reshape(3, 3, C, C)                                    # HWIO
        y = jax.lax.conv_general_dilated(
            xp, k, window_strides=(1, 1), padding='VALID',
            dimension_numbers=('NHWC', 'HWIO', 'NHWC')) + b.reshape(1, 1, 1, C)
        m = jnp.mean(y, axis=(1, 2), keepdims=True)
        v = jnp.mean((y - m) ** 2, axis=(1, 2), keepdims=True)
        return (y - m) * jax.lax.rsqrt(v + EPS)

    h = jnp.maximum(conv_norm(x, w1, b1), 0.0)
    h = conv_norm(h, w2, b2)
    return jnp.transpose(x + h, (0, 3, 1, 2))


if __name__ == "__main__":
    # Small, module-consistent shapes: dim (channels) = 4, batch = 2, spatial = 16.
    N, C, H, W = 2, 4, 16, 16

    key = jax.random.PRNGKey(0)
    kx, kw1, kb1, kw2, kb2 = jax.random.split(key, 5)

    x = jax.random.normal(kx, (N, C, H, W), dtype=jnp.float32)
    # Conv2d(dim, dim, 3) weights; stored as (9, C_in, C_out) with k = 3*ki + kj.
    fan_in = C * 3 * 3
    bound = 1.0 / (fan_in ** 0.5)
    w1 = jax.random.uniform(kw1, (9, C, C), jnp.float32, -bound, bound)
    b1 = jax.random.uniform(kb1, (1, C), jnp.float32, -bound, bound)
    w2 = jax.random.uniform(kw2, (9, C, C), jnp.float32, -bound, bound)
    b2 = jax.random.uniform(kb2, (1, C), jnp.float32, -bound, bound)

    # Reference INCLUDES the conv biases; the kernel drops them (they cancel
    # exactly under InstanceNorm2d(affine=False)).
    ref = jax.block_until_ready(ref_forward(x, w1, b1, w2, b2))

    # fp32 MXU operands: tight check vs. the fp32 reference.
    out = jax.block_until_ready(resnet_block(x, w1, w2, b1, b2, conv_dtype=jnp.float32))
    assert out.shape == (N, C, H, W)
    assert float(jnp.max(jnp.abs(out - ref))) < 1e-3, "fp32 kernel mismatch vs JAX reference"

    # bf16 MXU operands with fp32 accumulation (default fast path): loose check.
    out_bf16 = jax.block_until_ready(resnet_block(x, w1, w2, b1, b2))
    assert float(jnp.max(jnp.abs(out_bf16 - ref))) < 2e-1, "bf16 kernel mismatch vs JAX reference"

    print("KERNEL_OK")
</pallas_src>

<mosaic_0001>
module attributes {stable_mosaic.version = 11 : i64} {
  func.func @resnet_block_kernel(%arg0: i32, %arg1: memref<1x16x16x4xf32, #tpu.memory_space<vmem>>, %arg2: memref<3x12x4xf32, #tpu.memory_space<vmem>>, %arg3: memref<3x12x4xf32, #tpu.memory_space<vmem>>, %arg4: memref<1x16x16x4xf32, #tpu.memory_space<vmem>>, %arg5: memref<18x18x4xf32, #tpu.memory_space<vmem>>) attributes {dimension_semantics = [#tpu.dimension_semantics<parallel>], iteration_bounds = array<i64: 2>, scalar_prefetch = 0 : i64, scratch_operands = 1 : i64, tpu.core_type = #tpu.core_type<tc>, window_params = [{transform_indices = @transform_0, window_bounds = array<i64: 1, 16, 16, 4>}, {pipeline_mode = #tpu.pipeline_mode<synchronous>, transform_indices = @transform_1, window_bounds = array<i64: 3, 12, 4>}, {pipeline_mode = #tpu.pipeline_mode<synchronous>, transform_indices = @transform_2, window_bounds = array<i64: 3, 12, 4>}, {transform_indices = @transform_3, window_bounds = array<i64: 1, 16, 16, 4>}]} {
    %c0 = arith.constant 0 : index
    %c0_0 = arith.constant 0 : index
    %c0_1 = arith.constant 0 : index
    %c0_2 = arith.constant 0 : index
    %0 = vector.load %arg1[%c0, %c0_0, %c0_1, %c0_2] : memref<1x16x16x4xf32, #tpu.memory_space<vmem>>, vector<1x16x16x4xf32>
    %1 = vector.shape_cast %0 : vector<1x16x16x4xf32> to vector<16x16x4xf32>
    %c1 = arith.constant 1 : index
    %c1_3 = arith.constant 1 : index
    %c0_4 = arith.constant 0 : index
    %2 = vector.load %arg5[%c1, %c1_3, %c0_4] : memref<18x18x4xf32, #tpu.memory_space<vmem>>, vector<16x16x4xf32>
    tpu.vector_store %arg5[%c1, %c1_3, %c0_4], %1 {strides = array<i32>} : memref<18x18x4xf32, #tpu.memory_space<vmem>>, vector<16x16x4xf32>,
    %3 = vector.extract_strided_slice %1 {offsets = [0, 1, 0], sizes = [16, 1, 4], strides = [1, 1, 1]} : vector<16x16x4xf32> to vector<16x1x4xf32>
    %c1_5 = arith.constant 1 : index
    %c0_6 = arith.constant 0 : index
    %c0_7 = arith.constant 0 : index
    %4 = vector.load %arg5[%c1_5, %c0_6, %c0_7] : memref<18x18x4xf32, #tpu.memory_space<vmem>>, vector<16x1x4xf32>
    tpu.vector_store %arg5[%c1_5, %c0_6, %c0_7], %3 {strides = array<i32>} : memref<18x18x4xf32, #tpu.memory_space<vmem>>, vector<16x1x4xf32>,
    %5 = vector.extract_strided_slice %1 {offsets = [0, 14, 0], sizes = [16, 1, 4], strides = [1, 1, 1]} : vector<16x16x4xf32> to vector<16x1x4xf32>
    %c1_8 = arith.constant 1 : index
    %c17 = arith.constant 17 : index
    %c0_9 = arith.constant 0 : index
    %6 = vector.load %arg5[%c1_8, %c17, %c0_9] : memref<18x18x4xf32, #tpu.memory_space<vmem>>, vector<16x1x4xf32>
    tpu.vector_store %arg5[%c1_8, %c17, %c0_9], %5 {strides = array<i32>} : memref<18x18x4xf32, #tpu.memory_space<vmem>>, vector<16x1x4xf32>,
    %c2 = arith.constant 2 : index
    %c0_10 = arith.constant 0 : index
    %c0_11 = arith.constant 0 : index
    %7 = vector.load %arg5[%c2, %c0_10, %c0_11] : memref<18x18x4xf32, #tpu.memory_space<vmem>>, vector<1x18x4xf32>
    %c0_12 = arith.constant 0 : index
    %c0_13 = arith.constant 0 : index
    %c0_14 = arith.constant 0 : index
    %8 = vector.load %arg5[%c0_12, %c0_13, %c0_14] : memref<18x18x4xf32, #tpu.memory_space<vmem>>, vector<1x18x4xf32>
    tpu.vector_store %arg5[%c0_12, %c0_13, %c0_14], %7 {strides = array<i32>} : memref<18x18x4xf32, #tpu.memory_space<vmem>>, vector<1x18x4xf32>,
    %c15 = arith.constant 15 : index
    %c0_15 = arith.constant 0 : index
    %c0_16 = arith.constant 0 : index
    %9 = vector.load %arg5[%c15, %c0_15, %c0_16] : memref<18x18x4xf32, #tpu.memory_space<vmem>>, vector<1x18x4xf32>
    %c17_17 = arith.constant 17 : index
    %c0_18 = arith.constant 0 : index
    %c0_19 = arith.constant 0 : index
    %10 = vector.load %arg5[%c17_17, %c0_18, %c0_19] : memref<18x18x4xf32, #tpu.memory_space<vmem>>, vector<1x18x4xf32>
    tpu.vector_store %arg5[%c17_17, %c0_18, %c0_19], %9 {strides = array<i32>} : memref<18x18x4xf32, #tpu.memory_space<vmem>>, vector<1x18x4xf32>,
    %c0_20 = arith.constant 0 : index
    %c0_21 = arith.constant 0 : index
    %c0_22 = arith.constant 0 : index
    %11 = vector.load %arg5[%c0_20, %c0_21, %c0_22] : memref<18x18x4xf32, #tpu.memory_space<vmem>>, vector<18x18x4xf32>
    %12 = vector.extract_strided_slice %11 {offsets = [0, 0, 0], sizes = [18, 16, 4], strides = [1, 1, 1]} : vector<18x18x4xf32> to vector<18x16x4xf32>
    %13 = vector.extract_strided_slice %11 {offsets = [0, 1, 0], sizes = [18, 16, 4], strides = [1, 1, 1]} : vector<18x18x4xf32> to vector<18x16x4xf32>
    %14 = vector.extract_strided_slice %11 {offsets = [0, 2, 0], sizes = [18, 16, 4], strides = [1, 1, 1]} : vector<18x18x4xf32> to vector<18x16x4xf32>
    %15 = tpu.concatenate %12, %13, %14 in 2 : vector<18x16x4xf32>, vector<18x16x4xf32>, vector<18x16x4xf32> -> vector<18x16x12xf32>
    %cst = arith.constant 0.000000e+00 : f32
    %16 = vector.broadcast %cst : f32 to vector<256x4xf32>
    %17 = vector.extract_strided_slice %15 {offsets = [0, 0, 0], sizes = [16, 16, 12], strides = [1, 1, 1]} : vector<18x16x12xf32> to vector<16x16x12xf32>
    %18 = vector.shape_cast %17 : vector<16x16x12xf32> to vector<256x12xf32>
    %c0_23 = arith.constant 0 : index
    %c0_24 = arith.constant 0 : index
    %c0_25 = arith.constant 0 : index
    %19 = vector.load %arg2[%c0_23, %c0_24, %c0_25] : memref<3x12x4xf32, #tpu.memory_space<vmem>>, vector<1x12x4xf32>
    %20 = vector.shape_cast %19 : vector<1x12x4xf32> to vector<12x4xf32>
    %cst_26 = arith.constant dense<0.000000e+00> : vector<256x4xf32>
    %21 = tpu.matmul %18, %20, %cst_26 {dimension_numbers = #tpu.dot_dimension_numbers<[1], [0], [0], [1], [0, 0, 1, 1], [], []>} : vector<256x12xf32>, vector<12x4xf32>, vector<256x4xf32> -> vector<256x4xf32>
    %22 = arith.addf %16, %21 : vector<256x4xf32>
    %23 = vector.extract_strided_slice %15 {offsets = [1, 0, 0], sizes = [16, 16, 12], strides = [1, 1, 1]} : vector<18x16x12xf32> to vector<16x16x12xf32>
    %24 = vector.shape_cast %23 : vector<16x16x12xf32> to vector<256x12xf32>
    %c1_27 = arith.constant 1 : index
    %c0_28 = arith.constant 0 : index
    %c0_29 = arith.constant 0 : index
    %25 = vector.load %arg2[%c1_27, %c0_28, %c0_29] : memref<3x12x4xf32, #tpu.memory_space<vmem>>, vector<1x12x4xf32>
    %26 = vector.shape_cast %25 : vector<1x12x4xf32> to vector<12x4xf32>
    %cst_30 = arith.constant dense<0.000000e+00> : vector<256x4xf32>
    %27 = tpu.matmul %24, %26, %cst_30 {dimension_numbers = #tpu.dot_dimension_numbers<[1], [0], [0], [1], [0, 0, 1, 1], [], []>} : vector<256x12xf32>, vector<12x4xf32>, vector<256x4xf32> -> vector<256x4xf32>
    %28 = arith.addf %22, %27 : vector<256x4xf32>
    %29 = vector.extract_strided_slice %15 {offsets = [2, 0, 0], sizes = [16, 16, 12], strides = [1, 1, 1]} : vector<18x16x12xf32> to vector<16x16x12xf32>
    %30 = vector.shape_cast %29 : vector<16x16x12xf32> to vector<256x12xf32>
    %c2_31 = arith.constant 2 : index
    %c0_32 = arith.constant 0 : index
    %c0_33 = arith.constant 0 : index
    %31 = vector.load %arg2[%c2_31, %c0_32, %c0_33] : memref<3x12x4xf32, #tpu.memory_space<vmem>>, vector<1x12x4xf32>
    %32 = vector.shape_cast %31 : vector<1x12x4xf32> to vector<12x4xf32>
    %cst_34 = arith.constant dense<0.000000e+00> : vector<256x4xf32>
    %33 = tpu.matmul %30, %32, %cst_34 {dimension_numbers = #tpu.dot_dimension_numbers<[1], [0], [0], [1], [0, 0, 1, 1], [], []>} : vector<256x12xf32>, vector<12x4xf32>, vector<256x4xf32> -> vector<256x4xf32>
    %34 = arith.addf %28, %33 : vector<256x4xf32>
    %cst_35 = arith.constant dense<0.000000e+00> : vector<4xf32>
    %35 = vector.multi_reduction <add>, %34, %cst_35 [0] : vector<256x4xf32> to vector<4xf32>
    %36 = vector.shape_cast %35 : vector<4xf32> to vector<1x4xf32>
    %37 = arith.mulf %34, %34 : vector<256x4xf32>
    %cst_36 = arith.constant dense<0.000000e+00> : vector<4xf32>
    %38 = vector.multi_reduction <add>, %37, %cst_36 [0] : vector<256x4xf32> to vector<4xf32>
    %39 = vector.shape_cast %38 : vector<4xf32> to vector<1x4xf32>
    %cst_37 = arith.constant 3.906250e-03 : f32
    %40 = vector.broadcast %cst_37 : f32 to vector<1x4xf32>
    %41 = arith.mulf %36, %40 : vector<1x4xf32>
    %cst_38 = arith.constant 3.906250e-03 : f32
    %42 = vector.broadcast %cst_38 : f32 to vector<1x4xf32>
    %43 = arith.mulf %39, %42 : vector<1x4xf32>
    %44 = arith.mulf %41, %41 : vector<1x4xf32>
    %45 = arith.subf %43, %44 : vector<1x4xf32>
    %cst_39 = arith.constant 0.000000e+00 : f32
    %46 = vector.broadcast %cst_39 : f32 to vector<1x4xf32>
    %47 = arith.maximumf %45, %46 : vector<1x4xf32>
    %48 = vector.broadcast %41 : vector<1x4xf32> to vector<256x4xf32>
    %49 = arith.subf %34, %48 : vector<256x4xf32>
    %cst_40 = arith.constant 9.99999974E-6 : f32
    %50 = vector.broadcast %cst_40 : f32 to vector<1x4xf32>
    %51 = arith.addf %47, %50 : vector<1x4xf32>
    %52 = math.rsqrt %51 : vector<1x4xf32>
    %53 = vector.broadcast %52 : vector<1x4xf32> to vector<256x4xf32>
    %54 = arith.mulf %49, %53 : vector<256x4xf32>
    %cst_41 = arith.constant 0.000000e+00 : f32
    %55 = vector.broadcast %cst_41 : f32 to vector<256x4xf32>
    %56 = arith.maximumf %54, %55 : vector<256x4xf32>
    %57 = vector.shape_cast %56 : vector<256x4xf32> to vector<16x16x4xf32>
    %c1_42 = arith.constant 1 : index
    %c1_43 = arith.constant 1 : index
    %c0_44 = arith.constant 0 : index
    %58 = vector.load %arg5[%c1_42, %c1_43, %c0_44] : memref<18x18x4xf32, #tpu.memory_space<vmem>>, vector<16x16x4xf32>
    tpu.vector_store %arg5[%c1_42, %c1_43, %c0_44], %57 {strides = array<i32>} : memref<18x18x4xf32, #tpu.memory_space<vmem>>, vector<16x16x4xf32>,
    %59 = vector.extract_strided_slice %57 {offsets = [0, 1, 0], sizes = [16, 1, 4], strides = [1, 1, 1]} : vector<16x16x4xf32> to vector<16x1x4xf32>
    %c1_45 = arith.constant 1 : index
    %c0_46 = arith.constant 0 : index
    %c0_47 = arith.constant 0 : index
    %60 = vector.load %arg5[%c1_45, %c0_46, %c0_47] : memref<18x18x4xf32, #tpu.memory_space<vmem>>, vector<16x1x4xf32>
    tpu.vector_store %arg5[%c1_45, %c0_46, %c0_47], %59 {strides = array<i32>} : memref<18x18x4xf32, #tpu.memory_space<vmem>>, vector<16x1x4xf32>,
    %61 = vector.extract_strided_slice %57 {offsets = [0, 14, 0], sizes = [16, 1, 4], strides = [1, 1, 1]} : vector<16x16x4xf32> to vector<16x1x4xf32>
    %c1_48 = arith.constant 1 : index
    %c17_49 = arith.constant 17 : index
    %c0_50 = arith.constant 0 : index
    %62 = vector.load %arg5[%c1_48, %c17_49, %c0_50] : memref<18x18x4xf32, #tpu.memory_space<vmem>>, vector<16x1x4xf32>
    tpu.vector_store %arg5[%c1_48, %c17_49, %c0_50], %61 {strides = array<i32>} : memref<18x18x4xf32, #tpu.memory_space<vmem>>, vector<16x1x4xf32>,
    %c2_51 = arith.constant 2 : index
    %c0_52 = arith.constant 0 : index
    %c0_53 = arith.constant 0 : index
    %63 = vector.load %arg5[%c2_51, %c0_52, %c0_53] : memref<18x18x4xf32, #tpu.memory_space<vmem>>, vector<1x18x4xf32>
    %c0_54 = arith.constant 0 : index
    %c0_55 = arith.constant 0 : index
    %c0_56 = arith.constant 0 : index
    %64 = vector.load %arg5[%c0_54, %c0_55, %c0_56] : memref<18x18x4xf32, #tpu.memory_space<vmem>>, vector<1x18x4xf32>
    tpu.vector_store %arg5[%c0_54, %c0_55, %c0_56], %63 {strides = array<i32>} : memref<18x18x4xf32, #tpu.memory_space<vmem>>, vector<1x18x4xf32>,
    %c15_57 = arith.constant 15 : index
    %c0_58 = arith.constant 0 : index
    %c0_59 = arith.constant 0 : index
    %65 = vector.load %arg5[%c15_57, %c0_58, %c0_59] : memref<18x18x4xf32, #tpu.memory_space<vmem>>, vector<1x18x4xf32>
    %c17_60 = arith.constant 17 : index
    %c0_61 = arith.constant 0 : index
    %c0_62 = arith.constant 0 : index
    %66 = vector.load %arg5[%c17_60, %c0_61, %c0_62] : memref<18x18x4xf32, #tpu.memory_space<vmem>>, vector<1x18x4xf32>
    tpu.vector_store %arg5[%c17_60, %c0_61, %c0_62], %65 {strides = array<i32>} : memref<18x18x4xf32, #tpu.memory_space<vmem>>, vector<1x18x4xf32>,
    %c0_63 = arith.constant 0 : index
    %c0_64 = arith.constant 0 : index
    %c0_65 = arith.constant 0 : index
    %67 = vector.load %arg5[%c0_63, %c0_64, %c0_65] : memref<18x18x4xf32, #tpu.memory_space<vmem>>, vector<18x18x4xf32>
    %68 = vector.extract_strided_slice %67 {offsets = [0, 0, 0], sizes = [18, 16, 4], strides = [1, 1, 1]} : vector<18x18x4xf32> to vector<18x16x4xf32>
    %69 = vector.extract_strided_slice %67 {offsets = [0, 1, 0], sizes = [18, 16, 4], strides = [1, 1, 1]} : vector<18x18x4xf32> to vector<18x16x4xf32>
    %70 = vector.extract_strided_slice %67 {offsets = [0, 2, 0], sizes = [18, 16, 4], strides = [1, 1, 1]} : vector<18x18x4xf32> to vector<18x16x4xf32>
    %71 = tpu.concatenate %68, %69, %70 in 2 : vector<18x16x4xf32>, vector<18x16x4xf32>, vector<18x16x4xf32> -> vector<18x16x12xf32>
    %cst_66 = arith.constant 0.000000e+00 : f32
    %72 = vector.broadcast %cst_66 : f32 to vector<256x4xf32>
    %73 = vector.extract_strided_slice %71 {offsets = [0, 0, 0], sizes = [16, 16, 12], strides = [1, 1, 1]} : vector<18x16x12xf32> to vector<16x16x12xf32>
    %74 = vector.shape_cast %73 : vector<16x16x12xf32> to vector<256x12xf32>
    %c0_67 = arith.constant 0 : index
    %c0_68 = arith.constant 0 : index
    %c0_69 = arith.constant 0 : index
    %75 = vector.load %arg3[%c0_67, %c0_68, %c0_69] : memref<3x12x4xf32, #tpu.memory_space<vmem>>, vector<1x12x4xf32>
    %76 = vector.shape_cast %75 : vector<1x12x4xf32> to vector<12x4xf32>
    %cst_70 = arith.constant dense<0.000000e+00> : vector<256x4xf32>
    %77 = tpu.matmul %74, %76, %cst_70 {dimension_numbers = #tpu.dot_dimension_numbers<[1], [0], [0], [1], [0, 0, 1, 1], [], []>} : vector<256x12xf32>, vector<12x4xf32>, vector<256x4xf32> -> vector<256x4xf32>
    %78 = arith.addf %72, %77 : vector<256x4xf32>
    %79 = vector.extract_strided_slice %71 {offsets = [1, 0, 0], sizes = [16, 16, 12], strides = [1, 1, 1]} : vector<18x16x12xf32> to vector<16x16x12xf32>
    %80 = vector.shape_cast %79 : vector<16x16x12xf32> to vector<256x12xf32>
    %c1_71 = arith.constant 1 : index
    %c0_72 = arith.constant 0 : index
    %c0_73 = arith.constant 0 : index
    %81 = vector.load %arg3[%c1_71, %c0_72, %c0_73] : memref<3x12x4xf32, #tpu.memory_space<vmem>>, vector<1x12x4xf32>
    %82 = vector.shape_cast %81 : vector<1x12x4xf32> to vector<12x4xf32>
    %cst_74 = arith.constant dense<0.000000e+00> : vector<256x4xf32>
    %83 = tpu.matmul %80, %82, %cst_74 {dimension_numbers = #tpu.dot_dimension_numbers<[1], [0], [0], [1], [0, 0, 1, 1], [], []>} : vector<256x12xf32>, vector<12x4xf32>, vector<256x4xf32> -> vector<256x4xf32>
    %84 = arith.addf %78, %83 : vector<256x4xf32>
    %85 = vector.extract_strided_slice %71 {offsets = [2, 0, 0], sizes = [16, 16, 12], strides = [1, 1, 1]} : vector<18x16x12xf32> to vector<16x16x12xf32>
    %86 = vector.shape_cast %85 : vector<16x16x12xf32> to vector<256x12xf32>
    %c2_75 = arith.constant 2 : index
    %c0_76 = arith.constant 0 : index
    %c0_77 = arith.constant 0 : index
    %87 = vector.load %arg3[%c2_75, %c0_76, %c0_77] : memref<3x12x4xf32, #tpu.memory_space<vmem>>, vector<1x12x4xf32>
    %88 = vector.shape_cast %87 : vector<1x12x4xf32> to vector<12x4xf32>
    %cst_78 = arith.constant dense<0.000000e+00> : vector<256x4xf32>
    %89 = tpu.matmul %86, %88, %cst_78 {dimension_numbers = #tpu.dot_dimension_numbers<[1], [0], [0], [1], [0, 0, 1, 1], [], []>} : vector<256x12xf32>, vector<12x4xf32>, vector<256x4xf32> -> vector<256x4xf32>
    %90 = arith.addf %84, %89 : vector<256x4xf32>
    %cst_79 = arith.constant dense<0.000000e+00> : vector<4xf32>
    %91 = vector.multi_reduction <add>, %90, %cst_79 [0] : vector<256x4xf32> to vector<4xf32>
    %92 = vector.shape_cast %91 : vector<4xf32> to vector<1x4xf32>
    %93 = arith.mulf %90, %90 : vector<256x4xf32>
    %cst_80 = arith.constant dense<0.000000e+00> : vector<4xf32>
    %94 = vector.multi_reduction <add>, %93, %cst_80 [0] : vector<256x4xf32> to vector<4xf32>
    %95 = vector.shape_cast %94 : vector<4xf32> to vector<1x4xf32>
    %cst_81 = arith.constant 3.906250e-03 : f32
    %96 = vector.broadcast %cst_81 : f32 to vector<1x4xf32>
    %97 = arith.mulf %92, %96 : vector<1x4xf32>
    %cst_82 = arith.constant 3.906250e-03 : f32
    %98 = vector.broadcast %cst_82 : f32 to vector<1x4xf32>
    %99 = arith.mulf %95, %98 : vector<1x4xf32>
    %100 = arith.mulf %97, %97 : vector<1x4xf32>
    %101 = arith.subf %99, %100 : vector<1x4xf32>
    %cst_83 = arith.constant 0.000000e+00 : f32
    %102 = vector.broadcast %cst_83 : f32 to vector<1x4xf32>
    %103 = arith.maximumf %101, %102 : vector<1x4xf32>
    %104 = vector.broadcast %97 : vector<1x4xf32> to vector<256x4xf32>
    %105 = arith.subf %90, %104 : vector<256x4xf32>
    %cst_84 = arith.constant 9.99999974E-6 : f32
    %106 = vector.broadcast %cst_84 : f32 to vector<1x4xf32>
    %107 = arith.addf %103, %106 : vector<1x4xf32>
    %108 = math.rsqrt %107 : vector<1x4xf32>
    %109 = vector.broadcast %108 : vector<1x4xf32> to vector<256x4xf32>
    %110 = arith.mulf %105, %109 : vector<256x4xf32>
    %111 = vector.shape_cast %110 : vector<256x4xf32> to vector<16x16x4xf32>
    %112 = arith.addf %1, %111 : vector<16x16x4xf32>
    %c0_85 = arith.constant 0 : index
    %c0_86 = arith.constant 0 : index
    %c0_87 = arith.constant 0 : index
    %c0_88 = arith.constant 0 : index
    %113 = vector.load %arg4[%c0_85, %c0_86, %c0_87, %c0_88] : memref<1x16x16x4xf32, #tpu.memory_space<vmem>>, vector<1x16x16x4xf32>
    %114 = vector.shape_cast %113 : vector<1x16x16x4xf32> to vector<16x16x4xf32>
    %115 = vector.shape_cast %112 : vector<16x16x4xf32> to vector<1x16x16x4xf32>
    tpu.vector_store %arg4[%c0_85, %c0_86, %c0_87, %c0_88], %115 {strides = array<i32>} : memref<1x16x16x4xf32, #tpu.memory_space<vmem>>, vector<1x16x16x4xf32>,
    return
  }
  func.func @transform_0(%arg0: i32) -> (i32, i32, i32, i32) {
    %c0_i32 = arith.constant 0 : i32
    %c0_i32_0 = arith.constant 0 : i32
    %c0_i32_1 = arith.constant 0 : i32
    %c0_i32_2 = arith.constant 0 : i32
    return %arg0, %c0_i32, %c0_i32_0, %c0_i32_1 : i32, i32, i32, i32
  }
  func.func @transform_1(%arg0: i32) -> (i32, i32, i32) {
    %c0_i32 = arith.constant 0 : i32
    %c0_i32_0 = arith.constant 0 : i32
    %c0_i32_1 = arith.constant 0 : i32
    %c0_i32_2 = arith.constant 0 : i32
    return %c0_i32, %c0_i32_0, %c0_i32_1 : i32, i32, i32
  }
  func.func @transform_2(%arg0: i32) -> (i32, i32, i32) {
    %c0_i32 = arith.constant 0 : i32
    %c0_i32_0 = arith.constant 0 : i32
    %c0_i32_1 = arith.constant 0 : i32
    %c0_i32_2 = arith.constant 0 : i32
    return %c0_i32, %c0_i32_0, %c0_i32_1 : i32, i32, i32
  }
  func.func @transform_3(%arg0: i32) -> (i32, i32, i32, i32) {
    %c0_i32 = arith.constant 0 : i32
    %c0_i32_0 = arith.constant 0 : i32
    %c0_i32_1 = arith.constant 0 : i32
    %c0_i32_2 = arith.constant 0 : i32
    return %arg0, %c0_i32, %c0_i32_0, %c0_i32_1 : i32, i32, i32, i32
  }
}

</mosaic_0001>

<llo_original>
// kernel: tpu_custom_call.1
$region0: #{tpu_custom_call.1}
  #allocation0 [shape = 'u32[]', space=smem, size = 0x4, offset = 0x4, fixed_abs, tag = 'smem constant byte address 0x4 - core index']
  #allocation1 [shape = 'u32[72,128]{1,0:T(1,128)}', space=vmem, size = 0x9000, scoped, tag = 'internal scratch']
  #allocation2 [shape = 'f32[18,18,4]{2,1,0:T(8,128)}', space=vmem, size = 0x36000, scoped, tag = 'scratch operand']
  %s0 = inlined_call_operand.vmem [shape: f32[2,16,16,4], index: 0, kind: input, shape index: {}]
  %s1 = inlined_call_operand.vmem [shape: f32[3,12,4], index: 1, kind: input, shape index: {}]
  %s2 = inlined_call_operand.vmem [shape: f32[3,12,4], index: 2, kind: input, shape index: {}]
  %s3 = inlined_call_operand.vmem [shape: f32[2,16,16,4], index: 3, kind: output, shape index: {}]
  %s4 = sld [smem:[#allocation0]]
  $region45: #{tpu_custom_call.1} parent=0
    _
  %s6 = ssub.s32 1, %s4
  %s7 = scalar_select 0, %s6, %s4
  loop: start=0, step=1, limit=4
  $region2: #{tpu_custom_call.1} parent=0 // loop_pre_header
    _
  $region3: #{tpu_custom_call.1} parent=0 // loop_header
    %s9 = sphi 0, %s13
    %p10 = scmp.ge.s32.totalorder %s9, 4
    %s19 = sphi 0, %s21
    %s22 = sphi 0, %s19
    %s23 = sphi 0, %s22
    %s39 = sphi 0, %s23
    %s43 = sphi 0, %s43
    %s45 = sphi 0, %s43
    %s46 = sphi 0, %s45
    %s60 = sphi 0, %s46
    %s64 = sphi 0, %s64
    %s66 = sphi 0, %s64
    %s67 = sphi 0, %s66
    %s81 = sphi 0, %s67
    %s87 = sphi 0, %s89
    %s90 = sphi 0, %s87
    %s91 = sphi 0, %s90
    %s107 = sphi 0, %s91
  $region4: #{tpu_custom_call.1} parent=0 // loop_header_branch
    %12 = sbr.rel (%p10) target = $region8
  $region5: #{tpu_custom_call.1} parent=0 // loop_body
    %s14 = ssub.s32 %s9, 1
    %s15 = ssub.s32 %s9, 2
    %s16 = sadd.s32 %s9, 1
    %s17 = ssub.s32 %s9, %s16
    %p18 = scmp.eq.s32.totalorder %s17, 0
    %s20 = sadd.s32 %s19, 1
    %s21 = scalar_select %p18, %s19, %s20
    %p24 = pneg %p18
    %p25 = scmp.eq.s32.totalorder %s9, 1
    %p26 = por %p24, %p25
    %p27 = scmp.ne.s32.totalorder %s19, %s22
    %p28 = scmp.eq.s32.totalorder %s9, 0
    %p29 = por %p27, %p28
    %p30 = scmp.ne.s32.totalorder %s19, %s22
    %p31 = scmp.eq.s32.totalorder %s14, 1
    %p32 = por %p30, %p31
    %p33 = scmp.ne.s32.totalorder %s22, %s23
    %p34 = scmp.eq.s32.totalorder %s14, 0
    %p35 = por %p33, %p34
    %p36 = scmp.ne.s32.totalorder %s22, %s23
    %p37 = scmp.eq.s32.totalorder %s15, 1
    %p38 = por %p36, %p37
    %p40 = scmp.ne.s32.totalorder %s23, %s39
    %p41 = scmp.eq.s32.totalorder %s15, 0
    %p42 = por %p40, %p41
    %s44 = sadd.s32 %s43, 1
    %p47 = scmp.eq.s32.totalorder %s9, 1
    %p48 = scmp.ne.s32.totalorder %s43, %s45
    %p49 = scmp.eq.s32.totalorder %s9, 0
    %p50 = por %p48, %p49
    %p51 = scmp.ne.s32.totalorder %s43, %s45
    %p52 = scmp.eq.s32.totalorder %s14, 1
    %p53 = por %p51, %p52
    %p54 = scmp.ne.s32.totalorder %s45, %s46
    %p55 = scmp.eq.s32.totalorder %s14, 0
    %p56 = por %p54, %p55
    %p57 = scmp.ne.s32.totalorder %s45, %s46
    %p58 = scmp.eq.s32.totalorder %s15, 1
    %p59 = por %p57, %p58
    %p61 = scmp.ne.s32.totalorder %s46, %s60
    %p62 = scmp.eq.s32.totalorder %s15, 0
    %p63 = por %p61, %p62
    %s65 = sadd.s32 %s64, 1
    %p68 = scmp.eq.s32.totalorder %s9, 1
    %p69 = scmp.ne.s32.totalorder %s64, %s66
    %p70 = scmp.eq.s32.totalorder %s9, 0
    %p71 = por %p69, %p70
    %p72 = scmp.ne.s32.totalorder %s64, %s66
    %p73 = scmp.eq.s32.totalorder %s14, 1
    %p74 = por %p72, %p73
    %p75 = scmp.ne.s32.totalorder %s66, %s67
    %p76 = scmp.eq.s32.totalorder %s14, 0
    %p77 = por %p75, %p76
    %p78 = scmp.ne.s32.totalorder %s66, %s67
    %p79 = scmp.eq.s32.totalorder %s15, 1
    %p80 = por %p78, %p79
    %p82 = scmp.ne.s32.totalorder %s67, %s81
    %p83 = scmp.eq.s32.totalorder %s15, 0
    %p84 = por %p82, %p83
    %s85 = ssub.s32 %s9, %s16
    %p86 = scmp.eq.s32.totalorder %s85, 0
    %s88 = sadd.s32 %s87, 1
    %s89 = scalar_select %p86, %s87, %s88
    %p92 = pneg %p86
    %p93 = scmp.eq.s32.totalorder %s9, 1
    %p94 = por %p92, %p93
    %p95 = scmp.ne.s32.totalorder %s87, %s90
    %p96 = scmp.eq.s32.totalorder %s9, 0
    %p97 = por %p95, %p96
    %p98 = scmp.ne.s32.totalorder %s87, %s90
    %p99 = scmp.eq.s32.totalorder %s14, 1
    %p100 = por %p98, %p99
    %p101 = scmp.ne.s32.totalorder %s90, %s91
    %p102 = scmp.eq.s32.totalorder %s14, 0
    %p103 = por %p101, %p102
    %p104 = scmp.ne.s32.totalorder %s90, %s91
    %p105 = scmp.eq.s32.totalorder %s15, 1
    %p106 = por %p104, %p105
    %p108 = scmp.ne.s32.totalorder %s91, %s107
    %p109 = scmp.eq.s32.totalorder %s15, 0
    %p110 = por %p108, %p109
    %p111 = scmp.le.s32.totalorder 1, %s9
    %p112 = scmp.lt.s32.totalorder %s9, 3
    %p113 = pnand %p111, %p112
    %p114 = pneg %p113
    // Predicated region
    $region9: #{tpu_custom_call.1} parent=5 // pred_check
      _
    $region10: #{tpu_custom_call.1} parent=5 // pred_check_branch
      %116 = sbr.rel (%p113) target = $region12
    $region11: #{tpu_custom_call.1} parent=5 // pred_region
      %s117 = ssub.s32 %s9, 1
      // Predicated region
      $region13: #{tpu_custom_call.1} parent=11 // pred_check
        %p118 = pneg %p56
      $region14: #{tpu_custom_call.1} parent=11 // pred_check_branch
        %120 = sbr.rel (%p118) target = $region16
      $region15: #{tpu_custom_call.1} parent=11 // pred_region
        _
      $region16: #{tpu_custom_call.1} parent=11 // pred_fallthru
        _
      // Predicated region
      $region17: #{tpu_custom_call.1} parent=11 // pred_check
        %p121 = pneg %p77
      $region18: #{tpu_custom_call.1} parent=11 // pred_check_branch
        %123 = sbr.rel (%p121) target = $region20
      $region19: #{tpu_custom_call.1} parent=11 // pred_region
        _
      $region20: #{tpu_custom_call.1} parent=11 // pred_fallthru
        _
    $region12: #{tpu_custom_call.1} parent=5 // pred_fallthru
      _
    %p124 = scmp.lt.s32.totalorder %s9, 2
    // Predicated region
    $region21: #{tpu_custom_call.1} parent=5 // pred_check
      %p125 = pneg %p124
    $region22: #{tpu_custom_call.1} parent=5 // pred_check_branch
      %127 = sbr.rel (%p125) target = $region24
    $region23: #{tpu_custom_call.1} parent=5 // pred_region
      // Predicated region
      $region25: #{tpu_custom_call.1} parent=23 // pred_check
        %p128 = pneg %p29
      $region26: #{tpu_custom_call.1} parent=23 // pred_check_branch
        %130 = sbr.rel (%p128) target = $region28
      $region27: #{tpu_custom_call.1} parent=23 // pred_region
        %p131 = scmp.lt.s32.totalorder %s9, 1
        %s132 = scalar_select %p131, %s9, 1
        %s133 = smul.addr %s132, 32
        %s134 = smul.addr %s133, 8
        %s135 = scalar_lea.vmem %s0, %s134
      $region28: #{tpu_custom_call.1} parent=23 // pred_fallthru
        _
    $region24: #{tpu_custom_call.1} parent=5 // pred_fallthru
      _
    %p136 = scmp.le.s32.totalorder 1, %s9
    %p137 = scmp.lt.s32.totalorder %s9, 3
    %p138 = pnand %p136, %p137
    %p139 = pneg %p138
    // Predicated region
    $region29: #{tpu_custom_call.1} parent=5 // pred_check
      _
    $region30: #{tpu_custom_call.1} parent=5 // pred_check_branch
      %141 = sbr.rel (%p138) target = $region32
    $region31: #{tpu_custom_call.1} parent=5 // pred_region
      %s142 = ssub.s32 %s9, 1
      %p143 = scmp.lt.s32.totalorder %s14, 1
      %s144 = scalar_select %p143, %s14, 1
      %s145 = smul.addr %s144, 32
      %s146 = smul.addr %s145, 8
      %s147 = scalar_lea.vmem %s0, %s146
      %p148 = pneg %p35
      %p149 = pneg %p32
      %p150 = pneg %p56
      %p151 = pneg %p53
      %p152 = pneg %p77
      %p153 = pneg %p74
      %p154 = pneg %p103
      %p155 = pneg %p100
      %p156 = scmp.lt.s32.totalorder %s14, 1
      %s157 = scalar_select %p156, %s14, 1
      %s158 = smul.addr %s157, 32
      %s159 = smul.addr %s158, 8
      %s160 = scalar_lea.vmem %s3, %s159
      %p161 = scmp.lt.s32.totalorder %s14, 1
      %s162 = scalar_select %p161, %s14, 1
      %s163 = smul.addr %s162, 32
      %s164 = smul.addr %s163, 8
      %s165 = scalar_lea.vmem %s0, %s164
      %p166 = scmp.lt.s32.totalorder %s14, 1
      %s167 = scalar_select %p166, %s14, 1
      %s168 = smul.addr %s167, 32
      %s169 = smul.addr %s168, 8
      %s170 = scalar_lea.vmem %s3, %s169
      %v171 = vld [vmem:[%s165] sm:$0xff]
      %v172 = vld [vmem:[%s165 + $0x8] sm:$0xff]
      %v173 = vld [vmem:[%s165 + $0x10] sm:$0xff]
      %v174 = vld [vmem:[%s165 + $0x18] sm:$0xff]
      %v175 = vld [vmem:[%s165 + $0x20] sm:$0xff]
      %v176 = vld [vmem:[%s165 + $0x28] sm:$0xff]
      %v177 = vld [vmem:[%s165 + $0x30] sm:$0xff]
      %v178 = vld [vmem:[%s165 + $0x38] sm:$0xff]
      %v179 = vld [vmem:[%s165 + $0x40] sm:$0xff]
      %v180 = vld [vmem:[%s165 + $0x48] sm:$0xff]
      %v181 = vld [vmem:[%s165 + $0x50] sm:$0xff]
      %v182 = vld [vmem:[%s165 + $0x58] sm:$0xff]
      %v183 = vld [vmem:[%s165 + $0x60] sm:$0xff]
      %v184 = vld [vmem:[%s165 + $0x68] sm:$0xff]
      %v185 = vld [vmem:[%s165 + $0x70] sm:$0xff]
      %v186 = vld [vmem:[%s165 + $0x78] sm:$0xff]
      %v187 = vld [vmem:[%s165 + $0x80] sm:$0xff]
      %v188 = vld [vmem:[%s165 + $0x88] sm:$0xff]
      %v189 = vld [vmem:[%s165 + $0x90] sm:$0xff]
      %v190 = vld [vmem:[%s165 + $0x98] sm:$0xff]
      %v191 = vld [vmem:[%s165 + $0xa0] sm:$0xff]
      %v192 = vld [vmem:[%s165 + $0xa8] sm:$0xff]
      %v193 = vld [vmem:[%s165 + $0xb0] sm:$0xff]
      %v194 = vld [vmem:[%s165 + $0xb8] sm:$0xff]
      %v195 = vld [vmem:[%s165 + $0xc0] sm:$0xff]
      %v196 = vld [vmem:[%s165 + $0xc8] sm:$0xff]
      %v197 = vld [vmem:[%s165 + $0xd0] sm:$0xff]
      %v198 = vld [vmem:[%s165 + $0xd8] sm:$0xff]
      %v199 = vld [vmem:[%s165 + $0xe0] sm:$0xff]
      %v200 = vld [vmem:[%s165 + $0xe8] sm:$0xff]
      %v201 = vld [vmem:[%s165 + $0xf0] sm:$0xff]
      %v202 = vld [vmem:[%s165 + $0xf8] sm:$0xff]
      %s203 = scalar_lea.vmem [#allocation2], 24
      %vm204 = vcmask 31744
      %205 = vst.msk [vmem:[%s203 + $0x1] sm:$0xff] %vm204, %v171
      %206 = vst.msk [vmem:[%s203 + $0x9] sm:$0xff] %vm204, %v172
      %207 = vst.msk [vmem:[%s203 + $0x19] sm:$0xff] %vm204, %v173
      %208 = vst.msk [vmem:[%s203 + $0x21] sm:$0xff] %vm204, %v174
      %209 = vst.msk [vmem:[%s203 + $0x31] sm:$0xff] %vm204, %v175
      %210 = vst.msk [vmem:[%s203 + $0x39] sm:$0xff] %vm204, %v176
      %211 = vst.msk [vmem:[%s203 + $0x49] sm:$0xff] %vm204, %v177
      %212 = vst.msk [vmem:[%s203 + $0x51] sm:$0xff] %vm204, %v178
      %213 = vst.msk [vmem:[%s203 + $0x61] sm:$0xff] %vm204, %v179
      %214 = vst.msk [vmem:[%s203 + $0x69] sm:$0xff] %vm204, %v180
      %215 = vst.msk [vmem:[%s203 + $0x79] sm:$0xff] %vm204, %v181
      %216 = vst.msk [vmem:[%s203 + $0x81] sm:$0xff] %vm204, %v182
      %217 = vst.msk [vmem:[%s203 + $0x91] sm:$0xff] %vm204, %v183
      %218 = vst.msk [vmem:[%s203 + $0x99] sm:$0xff] %vm204, %v184
      %219 = vst.msk [vmem:[%s203 + $0xa9] sm:$0xff] %vm204, %v185
      %220 = vst.msk [vmem:[%s203 + $0xb1] sm:$0xff] %vm204, %v186
      %221 = vst.msk [vmem:[%s203 + $0xc1] sm:$0xff] %vm204, %v187
      %222 = vst.msk [vmem:[%s203 + $0xc9] sm:$0xff] %vm204, %v188
      %223 = vst.msk [vmem:[%s203 + $0xd9] sm:$0xff] %vm204, %v189
      %224 = vst.msk [vmem:[%s203 + $0xe1] sm:$0xff] %vm204, %v190
      %225 = vst.msk [vmem:[%s203 + $0xf1] sm:$0xff] %vm204, %v191
      %226 = vst.msk [vmem:[%s203 + $0xf9] sm:$0xff] %vm204, %v192
      %227 = vst.msk [vmem:[%s203 + $0x109] sm:$0xff] %vm204, %v193
      %228 = vst.msk [vmem:[%s203 + $0x111] sm:$0xff] %vm204, %v194
      %229 = vst.msk [vmem:[%s203 + $0x121] sm:$0xff] %vm204, %v195
      %230 = vst.msk [vmem:[%s203 + $0x129] sm:$0xff] %vm204, %v196
      %231 = vst.msk [vmem:[%s203 + $0x139] sm:$0xff] %vm204, %v197
      %232 = vst.msk [vmem:[%s203 + $0x141] sm:$0xff] %vm204, %v198
      %233 = vst.msk [vmem:[%s203 + $0x151] sm:$0xff] %vm204, %v199
      %234 = vst.msk [vmem:[%s203 + $0x159] sm:$0xff] %vm204, %v200
      %235 = vst.msk [vmem:[%s203 + $0x169] sm:$0xff] %vm204, %v201
      %236 = vst.msk [vmem:[%s203 + $0x171] sm:$0xff] %vm204, %v202
      %vm237 = vcmask 25601
      %238 = vst.msk [vmem:[%s203 - $0x1] sm:$0x2] %vm237, %v171
      %239 = vst.msk [vmem:[%s203 + $0x17] sm:$0x2] %vm237, %v173
      %240 = vst.msk [vmem:[%s203 + $0x2f] sm:$0x2] %vm237, %v175
      %241 = vst.msk [vmem:[%s203 + $0x47] sm:$0x2] %vm237, %v177
      %242 = vst.msk [vmem:[%s203 + $0x5f] sm:$0x2] %vm237, %v179
      %243 = vst.msk [vmem:[%s203 + $0x77] sm:$0x2] %vm237, %v181
      %244 = vst.msk [vmem:[%s203 + $0x8f] sm:$0x2] %vm237, %v183
      %245 = vst.msk [vmem:[%s203 + $0xa7] sm:$0x2] %vm237, %v185
      %246 = vst.msk [vmem:[%s203 + $0xbf] sm:$0x2] %vm237, %v187
      %247 = vst.msk [vmem:[%s203 + $0xd7] sm:$0x2] %vm237, %v189
      %248 = vst.msk [vmem:[%s203 + $0xef] sm:$0x2] %vm237, %v191
      %249 = vst.msk [vmem:[%s203 + $0x107] sm:$0x2] %vm237, %v193
      %250 = vst.msk [vmem:[%s203 + $0x11f] sm:$0x2] %vm237, %v195
      %251 = vst.msk [vmem:[%s203 + $0x137] sm:$0x2] %vm237, %v197
      %252 = vst.msk [vmem:[%s203 + $0x14f] sm:$0x2] %vm237, %v199
      %253 = vst.msk [vmem:[%s203 + $0x167] sm:$0x2] %vm237, %v201
      %vm254 = vcmask 30726
      %255 = vst.msk [vmem:[%s203 + $0xb] sm:$0x40] %vm254, %v172
      %256 = vst.msk [vmem:[%s203 + $0x23] sm:$0x40] %vm254, %v174
      %257 = vst.msk [vmem:[%s203 + $0x3b] sm:$0x40] %vm254, %v176
      %258 = vst.msk [vmem:[%s203 + $0x53] sm:$0x40] %vm254, %v178
      %259 = vst.msk [vmem:[%s203 + $0x6b] sm:$0x40] %vm254, %v180
      %260 = vst.msk [vmem:[%s203 + $0x83] sm:$0x40] %vm254, %v182
      %261 = vst.msk [vmem:[%s203 + $0x9b] sm:$0x40] %vm254, %v184
      %262 = vst.msk [vmem:[%s203 + $0xb3] sm:$0x40] %vm254, %v186
      %263 = vst.msk [vmem:[%s203 + $0xcb] sm:$0x40] %vm254, %v188
      %264 = vst.msk [vmem:[%s203 + $0xe3] sm:$0x40] %vm254, %v190
      %265 = vst.msk [vmem:[%s203 + $0xfb] sm:$0x40] %vm254, %v192
      %266 = vst.msk [vmem:[%s203 + $0x113] sm:$0x40] %vm254, %v194
      %267 = vst.msk [vmem:[%s203 + $0x12b] sm:$0x40] %vm254, %v196
      %268 = vst.msk [vmem:[%s203 + $0x143] sm:$0x40] %vm254, %v198
      %269 = vst.msk [vmem:[%s203 + $0x15b] sm:$0x40] %vm254, %v200
      %270 = vst.msk [vmem:[%s203 + $0x173] sm:$0x40] %vm254, %v202
      %s271 = scalar_lea.vmem [#allocation2], 48
      %v272 = vld [vmem:[%s271] sm:$0xff]
      %v273 = vld [vmem:[%s271 + $0x8] sm:$0xff]
      %v274 = vld [vmem:[%s271 + $0x10] sm:$0x3]
      %275 = vst.msk [vmem:[#allocation2] sm:$0xff] %vm204, %v272
      %276 = vst.msk [vmem:[#allocation2 + $0x8] sm:$0xff] %vm204, %v273
      %vm277 = vcmask 25600
      %278 = vst.msk [vmem:[#allocation2 + $0x10] sm:$0x3] %vm277, %v274
      %s279 = scalar_lea.vmem [#allocation2], 360
      %v280 = vld [vmem:[%s279] sm:$0xff]
      %v281 = vld [vmem:[%s279 + $0x8] sm:$0xff]
      %v282 = vld [vmem:[%s279 + $0x10] sm:$0x3]
      %s283 = scalar_lea.vmem [#allocation2], 408
      %284 = vst.msk [vmem:[%s283] sm:$0xff] %vm204, %v280
      %285 = vst.msk [vmem:[%s283 + $0x8] sm:$0xff] %vm204, %v281
      %286 = vst.msk [vmem:[%s283 + $0x10] sm:$0x3] %vm277, %v282
      %v287 = vld [vmem:[#allocation2] sm:$0xff]
      %v288 = vld [vmem:[#allocation2 + $0x8] sm:$0xff]
      %v289 = vld [vmem:[#allocation2 + $0x10] sm:$0x3]
      %v290 = vld [vmem:[#allocation2 + $0x18] sm:$0xff]
      %v291 = vld [vmem:[#allocation2 + $0x20] sm:$0xff]
      %v292 = vld [vmem:[#allocation2 + $0x28] sm:$0x3]
      %v293 = vld [vmem:[#allocation2 + $0x30] sm:$0xff]
      %v294 = vld [vmem:[#allocation2 + $0x38] sm:$0xff]
      %v295 = vld [vmem:[#allocation2 + $0x40] sm:$0x3]
      %v296 = vld [vmem:[#allocation2 + $0x48] sm:$0xff]
      %v297 = vld [vmem:[#allocation2 + $0x50] sm:$0xff]
      %v298 = vld [vmem:[#allocation2 + $0x58] sm:$0x3]
      %v299 = vld [vmem:[#allocation2 + $0x60] sm:$0xff]
      %v300 = vld [vmem:[#allocation2 + $0x68] sm:$0xff]
      %v301 = vld [vmem:[#allocation2 + $0x70] sm:$0x3]
      %v302 = vld [vmem:[#allocation2 + $0x78] sm:$0xff]
      %v303 = vld [vmem:[#allocation2 + $0x80] sm:$0xff]
      %v304 = vld [vmem:[#allocation2 + $0x88] sm:$0x3]
      %v305 = vld [vmem:[#allocation2 + $0x90] sm:$0xff]
      %v306 = vld [vmem:[#allocation2 + $0x98] sm:$0xff]
      %v307 = vld [vmem:[#allocation2 + $0xa0] sm:$0x3]
      %v308 = vld [vmem:[#allocation2 + $0xa8] sm:$0xff]
      %v309 = vld [vmem:[#allocation2 + $0xb0] sm:$0xff]
      %v310 = vld [vmem:[#allocation2 + $0xb8] sm:$0x3]
      %v311 = vld [vmem:[#allocation2 + $0xc0] sm:$0xff]
      %v312 = vld [vmem:[#allocation2 + $0xc8] sm:$0xff]
      %v313 = vld [vmem:[#allocation2 + $0xd0] sm:$0x3]
      %v314 = vld [vmem:[#allocation2 + $0xd8] sm:$0xff]
      %v315 = vld [vmem:[#allocation2 + $0xe0] sm:$0xff]
      %v316 = vld [vmem:[#allocation2 + $0xe8] sm:$0x3]
      %v317 = vld [vmem:[#allocation2 + $0xf0] sm:$0xff]
      %v318 = vld [vmem:[#allocation2 + $0xf8] sm:$0xff]
      %v319 = vld [vmem:[#allocation2 + $0x100] sm:$0x3]
      %v320 = vld [vmem:[#allocation2 + $0x108] sm:$0xff]
      %v321 = vld [vmem:[#allocation2 + $0x110] sm:$0xff]
      %v322 = vld [vmem:[#allocation2 + $0x118] sm:$0x3]
      %v323 = vld [vmem:[#allocation2 + $0x120] sm:$0xff]
      %v324 = vld [vmem:[#allocation2 + $0x128] sm:$0xff]
      %v325 = vld [vmem:[#allocation2 + $0x130] sm:$0x3]
      %v326 = vld [vmem:[#allocation2 + $0x138] sm:$0xff]
      %v327 = vld [vmem:[#allocation2 + $0x140] sm:$0xff]
      %v328 = vld [vmem:[#allocation2 + $0x148] sm:$0x3]
      %v329 = vld [vmem:[#allocation2 + $0x150] sm:$0xff]
      %v330 = vld [vmem:[#allocation2 + $0x158] sm:$0xff]
      %v331 = vld [vmem:[#allocation2 + $0x160] sm:$0x3]
      %v332 = vld [vmem:[#allocation2 + $0x168] sm:$0xff]
      %v333 = vld [vmem:[#allocation2 + $0x170] sm:$0xff]
      %v334 = vld [vmem:[#allocation2 + $0x178] sm:$0x3]
      %v335 = vld [vmem:[#allocation2 + $0x180] sm:$0xff]
      %v336 = vld [vmem:[#allocation2 + $0x188] sm:$0xff]
      %v337 = vld [vmem:[#allocation2 + $0x190] sm:$0x3]
      %v338 = vld [vmem:[#allocation2 + $0x198] sm:$0xff]
      %v339 = vld [vmem:[#allocation2 + $0x1a0] sm:$0xff]
      %v340 = vld [vmem:[#allocation2 + $0x1a8] sm:$0x3]
      %vm395 = vcmask 1046528
      %v396 = vrot.slane %v287, 1
      %v397 = vrot.slane %v288, 1
      %v398 = vsel %vm395, %v396, %v397
      %v399 = vrot.slane %v289, 1
      %v400 = vsel %vm395, %v397, %v399
      %v401 = vrot.slane %v290, 1
      %v402 = vrot.slane %v291, 1
      %v403 = vsel %vm395, %v401, %v402
      %v404 = vrot.slane %v292, 1
      %v405 = vsel %vm395, %v402, %v404
      %v406 = vrot.slane %v293, 1
      %v407 = vrot.slane %v294, 1
      %v408 = vsel %vm395, %v406, %v407
      %v409 = vrot.slane %v295, 1
      %v410 = vsel %vm395, %v407, %v409
      %v411 = vrot.slane %v296, 1
      %v412 = vrot.slane %v297, 1
      %v413 = vsel %vm395, %v411, %v412
      %v414 = vrot.slane %v298, 1
      %v415 = vsel %vm395, %v412, %v414
      %v416 = vrot.slane %v299, 1
      %v417 = vrot.slane %v300, 1
      %v418 = vsel %vm395, %v416, %v417
      %v419 = vrot.slane %v301, 1
      %v420 = vsel %vm395, %v417, %v419
      %v421 = vrot.slane %v302, 1
      %v422 = vrot.slane %v303, 1
      %v423 = vsel %vm395, %v421, %v422
      %v424 = vrot.slane %v304, 1
      %v425 = vsel %vm395, %v422, %v424
      %v426 = vrot.slane %v305, 1
      %v427 = vrot.slane %v306, 1
      %v428 = vsel %vm395, %v426, %v427
      %v429 = vrot.slane %v307, 1
      %v430 = vsel %vm395, %v427, %v429
      %v431 = vrot.slane %v308, 1
      %v432 = vrot.slane %v309, 1
      %v433 = vsel %vm395, %v431, %v432
      %v434 = vrot.slane %v310, 1
      %v435 = vsel %vm395, %v432, %v434
      %v436 = vrot.slane %v311, 1
      %v437 = vrot.slane %v312, 1
      %v438 = vsel %vm395, %v436, %v437
      %v439 = vrot.slane %v313, 1
      %v440 = vsel %vm395, %v437, %v439
      %v441 = vrot.slane %v314, 1
      %v442 = vrot.slane %v315, 1
      %v443 = vsel %vm395, %v441, %v442
      %v444 = vrot.slane %v316, 1
      %v445 = vsel %vm395, %v442, %v444
      %v446 = vrot.slane %v317, 1
      %v447 = vrot.slane %v318, 1
      %v448 = vsel %vm395, %v446, %v447
      %v449 = vrot.slane %v319, 1
      %v450 = vsel %vm395, %v447, %v449
      %v451 = vrot.slane %v320, 1
      %v452 = vrot.slane %v321, 1
      %v453 = vsel %vm395, %v451, %v452
      %v454 = vrot.slane %v322, 1
      %v455 = vsel %vm395, %v452, %v454
      %v456 = vrot.slane %v323, 1
      %v457 = vrot.slane %v324, 1
      %v458 = vsel %vm395, %v456, %v457
      %v459 = vrot.slane %v325, 1
      %v460 = vsel %vm395, %v457, %v459
      %v461 = vrot.slane %v326, 1
      %v462 = vrot.slane %v327, 1
      %v463 = vsel %vm395, %v461, %v462
      %v464 = vrot.slane %v328, 1
      %v465 = vsel %vm395, %v462, %v464
      %v466 = vrot.slane %v329, 1
      %v467 = vrot.slane %v330, 1
      %v468 = vsel %vm395, %v466, %v467
      %v469 = vrot.slane %v331, 1
      %v470 = vsel %vm395, %v467, %v469
      %v471 = vrot.slane %v332, 1
      %v472 = vrot.slane %v333, 1
      %v473 = vsel %vm395, %v471, %v472
      %v474 = vrot.slane %v334, 1
      %v475 = vsel %vm395, %v472, %v474
      %v476 = vrot.slane %v335, 1
      %v477 = vrot.slane %v336, 1
      %v478 = vsel %vm395, %v476, %v477
      %v479 = vrot.slane %v337, 1
      %v480 = vsel %vm395, %v477, %v479
      %v481 = vrot.slane %v338, 1
      %v482 = vrot.slane %v339, 1
      %v483 = vsel %vm395, %v481, %v482
      %v484 = vrot.slane %v340, 1
      %v485 = vsel %vm395, %v482, %v484
      %486 = vrot.lane.b32.xlu0 %v398, 4
      %v487 = vpop.permute.xlu0 %486
      %488 = vrot.lane.b32.xlu0 %v400, 4
      %v489 = vpop.permute.xlu0 %488
      %490 = vrot.lane.b32.xlu0 %v403, 4
      %v491 = vpop.permute.xlu0 %490
      %492 = vrot.lane.b32.xlu0 %v405, 4
      %v493 = vpop.permute.xlu0 %492
      %494 = vrot.lane.b32.xlu0 %v408, 4
      %v495 = vpop.permute.xlu0 %494
      %496 = vrot.lane.b32.xlu0 %v410, 4
      %v497 = vpop.permute.xlu0 %496
      %498 = vrot.lane.b32.xlu0 %v413, 4
      %v499 = vpop.permute.xlu0 %498
      %500 = vrot.lane.b32.xlu0 %v415, 4
      %v501 = vpop.permute.xlu0 %500
      %502 = vrot.lane.b32.xlu0 %v418, 4
      %v503 = vpop.permute.xlu0 %502
      %504 = vrot.lane.b32.xlu0 %v420, 4
      %v505 = vpop.permute.xlu0 %504
      %506 = vrot.lane.b32.xlu0 %v423, 4
      %v507 = vpop.permute.xlu0 %506
      %508 = vrot.lane.b32.xlu0 %v425, 4
      %v509 = vpop.permute.xlu0 %508
      %510 = vrot.lane.b32.xlu0 %v428, 4
      %v511 = vpop.permute.xlu0 %510
      %512 = vrot.lane.b32.xlu0 %v430, 4
      %v513 = vpop.permute.xlu0 %512
      %514 = vrot.lane.b32.xlu0 %v433, 4
      %v515 = vpop.permute.xlu0 %514
      %516 = vrot.lane.b32.xlu0 %v435, 4
      %v517 = vpop.permute.xlu0 %516
      %518 = vrot.lane.b32.xlu0 %v438, 4
      %v519 = vpop.permute.xlu0 %518
      %520 = vrot.lane.b32.xlu0 %v440, 4
      %v521 = vpop.permute.xlu0 %520
      %522 = vrot.lane.b32.xlu0 %v443, 4
      %v523 = vpop.permute.xlu0 %522
      %524 = vrot.lane.b32.xlu0 %v445, 4
      %v525 = vpop.permute.xlu0 %524
      %526 = vrot.lane.b32.xlu0 %v448, 4
      %v527 = vpop.permute.xlu0 %526
      %528 = vrot.lane.b32.xlu0 %v450, 4
      %v529 = vpop.permute.xlu0 %528
      %530 = vrot.lane.b32.xlu0 %v453, 4
      %v531 = vpop.permute.xlu0 %530
      %532 = vrot.lane.b32.xlu0 %v455, 4
      %v533 = vpop.permute.xlu0 %532
      %534 = vrot.lane.b32.xlu0 %v458, 4
      %v535 = vpop.permute.xlu0 %534
      %536 = vrot.lane.b32.xlu0 %v460, 4
      %v537 = vpop.permute.xlu0 %536
      %538 = vrot.lane.b32.xlu0 %v463, 4
      %v539 = vpop.permute.xlu0 %538
      %540 = vrot.lane.b32.xlu0 %v465, 4
      %v541 = vpop.permute.xlu0 %540
      %542 = vrot.lane.b32.xlu0 %v468, 4
      %v543 = vpop.permute.xlu0 %542
      %544 = vrot.lane.b32.xlu0 %v470, 4
      %v545 = vpop.permute.xlu0 %544
      %546 = vrot.lane.b32.xlu0 %v473, 4
      %v547 = vpop.permute.xlu0 %546
      %548 = vrot.lane.b32.xlu0 %v475, 4
      %v549 = vpop.permute.xlu0 %548
      %550 = vrot.lane.b32.xlu0 %v478, 4
      %v551 = vpop.permute.xlu0 %550
      %552 = vrot.lane.b32.xlu0 %v480, 4
      %v553 = vpop.permute.xlu0 %552
      %554 = vrot.lane.b32.xlu0 %v483, 4
      %v555 = vpop.permute.xlu0 %554
      %556 = vrot.lane.b32.xlu0 %v485, 4
      %v557 = vpop.permute.xlu0 %556
      %vm594 = vcmask 1045504
      %v595 = vrot.slane %v287, 2
      %v596 = vrot.slane %v288, 2
      %v597 = vsel %vm594, %v595, %v596
      %v598 = vrot.slane %v289, 2
      %v599 = vsel %vm594, %v596, %v598
      %v600 = vrot.slane %v290, 2
      %v601 = vrot.slane %v291, 2
      %v602 = vsel %vm594, %v600, %v601
      %v603 = vrot.slane %v292, 2
      %v604 = vsel %vm594, %v601, %v603
      %v605 = vrot.slane %v293, 2
      %v606 = vrot.slane %v294, 2
      %v607 = vsel %vm594, %v605, %v606
      %v608 = vrot.slane %v295, 2
      %v609 = vsel %vm594, %v606, %v608
      %v610 = vrot.slane %v296, 2
      %v611 = vrot.slane %v297, 2
      %v612 = vsel %vm594, %v610, %v611
      %v613 = vrot.slane %v298, 2
      %v614 = vsel %vm594, %v611, %v613
      %v615 = vrot.slane %v299, 2
      %v616 = vrot.slane %v300, 2
      %v617 = vsel %vm594, %v615, %v616
      %v618 = vrot.slane %v301, 2
      %v619 = vsel %vm594, %v616, %v618
      %v620 = vrot.slane %v302, 2
      %v621 = vrot.slane %v303, 2
      %v622 = vsel %vm594, %v620, %v621
      %v623 = vrot.slane %v304, 2
      %v624 = vsel %vm594, %v621, %v623
      %v625 = vrot.slane %v305, 2
      %v626 = vrot.slane %v306, 2
      %v627 = vsel %vm594, %v625, %v626
      %v628 = vrot.slane %v307, 2
      %v629 = vsel %vm594, %v626, %v628
      %v630 = vrot.slane %v308, 2
      %v631 = vrot.slane %v309, 2
      %v632 = vsel %vm594, %v630, %v631
      %v633 = vrot.slane %v310, 2
      %v634 = vsel %vm594, %v631, %v633
      %v635 = vrot.slane %v311, 2
      %v636 = vrot.slane %v312, 2
      %v637 = vsel %vm594, %v635, %v636
      %v638 = vrot.slane %v313, 2
      %v639 = vsel %vm594, %v636, %v638
      %v640 = vrot.slane %v314, 2
      %v641 = vrot.slane %v315, 2
      %v642 = vsel %vm594, %v640, %v641
      %v643 = vrot.slane %v316, 2
      %v644 = vsel %vm594, %v641, %v643
      %v645 = vrot.slane %v317, 2
      %v646 = vrot.slane %v318, 2
      %v647 = vsel %vm594, %v645, %v646
      %v648 = vrot.slane %v319, 2
      %v649 = vsel %vm594, %v646, %v648
      %v650 = vrot.slane %v320, 2
      %v651 = vrot.slane %v321, 2
      %v652 = vsel %vm594, %v650, %v651
      %v653 = vrot.slane %v322, 2
      %v654 = vsel %vm594, %v651, %v653
      %v655 = vrot.slane %v323, 2
      %v656 = vrot.slane %v324, 2
      %v657 = vsel %vm594, %v655, %v656
      %v658 = vrot.slane %v325, 2
      %v659 = vsel %vm594, %v656, %v658
      %v660 = vrot.slane %v326, 2
      %v661 = vrot.slane %v327, 2
      %v662 = vsel %vm594, %v660, %v661
      %v663 = vrot.slane %v328, 2
      %v664 = vsel %vm594, %v661, %v663
      %v665 = vrot.slane %v329, 2
      %v666 = vrot.slane %v330, 2
      %v667 = vsel %vm594, %v665, %v666
      %v668 = vrot.slane %v331, 2
      %v669 = vsel %vm594, %v666, %v668
      %v670 = vrot.slane %v332, 2
      %v671 = vrot.slane %v333, 2
      %v672 = vsel %vm594, %v670, %v671
      %v673 = vrot.slane %v334, 2
      %v674 = vsel %vm594, %v671, %v673
      %v675 = vrot.slane %v335, 2
      %v676 = vrot.slane %v336, 2
      %v677 = vsel %vm594, %v675, %v676
      %v678 = vrot.slane %v337, 2
      %v679 = vsel %vm594, %v676, %v678
      %v680 = vrot.slane %v338, 2
      %v681 = vrot.slane %v339, 2
      %v682 = vsel %vm594, %v680, %v681
      %v683 = vrot.slane %v340, 2
      %v684 = vsel %vm594, %v681, %v683
      %685 = vrot.lane.b32.xlu0 %v597, 8
      %v686 = vpop.permute.xlu0 %685
      %687 = vrot.lane.b32.xlu0 %v599, 8
      %v688 = vpop.permute.xlu0 %687
      %689 = vrot.lane.b32.xlu0 %v602, 8
      %v690 = vpop.permute.xlu0 %689
      %691 = vrot.lane.b32.xlu0 %v604, 8
      %v692 = vpop.permute.xlu0 %691
      %693 = vrot.lane.b32.xlu0 %v607, 8
      %v694 = vpop.permute.xlu0 %693
      %695 = vrot.lane.b32.xlu0 %v609, 8
      %v696 = vpop.permute.xlu0 %695
      %697 = vrot.lane.b32.xlu0 %v612, 8
      %v698 = vpop.permute.xlu0 %697
      %699 = vrot.lane.b32.xlu0 %v614, 8
      %v700 = vpop.permute.xlu0 %699
      %701 = vrot.lane.b32.xlu0 %v617, 8
      %v702 = vpop.permute.xlu0 %701
      %703 = vrot.lane.b32.xlu0 %v619, 8
      %v704 = vpop.permute.xlu0 %703
      %705 = vrot.lane.b32.xlu0 %v622, 8
      %v706 = vpop.permute.xlu0 %705
      %707 = vrot.lane.b32.xlu0 %v624, 8
      %v708 = vpop.permute.xlu0 %707
      %709 = vrot.lane.b32.xlu0 %v627, 8
      %v710 = vpop.permute.xlu0 %709
      %711 = vrot.lane.b32.xlu0 %v629, 8
      %v712 = vpop.permute.xlu0 %711
      %713 = vrot.lane.b32.xlu0 %v632, 8
      %v714 = vpop.permute.xlu0 %713
      %715 = vrot.lane.b32.xlu0 %v634, 8
      %v716 = vpop.permute.xlu0 %715
      %717 = vrot.lane.b32.xlu0 %v637, 8
      %v718 = vpop.permute.xlu0 %717
      %719 = vrot.lane.b32.xlu0 %v639, 8
      %v720 = vpop.permute.xlu0 %719
      %721 = vrot.lane.b32.xlu0 %v642, 8
      %v722 = vpop.permute.xlu0 %721
      %723 = vrot.lane.b32.xlu0 %v644, 8
      %v724 = vpop.permute.xlu0 %723
      %725 = vrot.lane.b32.xlu0 %v647, 8
      %v726 = vpop.permute.xlu0 %725
      %727 = vrot.lane.b32.xlu0 %v649, 8
      %v728 = vpop.permute.xlu0 %727
      %729 = vrot.lane.b32.xlu0 %v652, 8
      %v730 = vpop.permute.xlu0 %729
      %731 = vrot.lane.b32.xlu0 %v654, 8
      %v732 = vpop.permute.xlu0 %731
      %733 = vrot.lane.b32.xlu0 %v657, 8
      %v734 = vpop.permute.xlu0 %733
      %735 = vrot.lane.b32.xlu0 %v659, 8
      %v736 = vpop.permute.xlu0 %735
      %737 = vrot.lane.b32.xlu0 %v662, 8
      %v738 = vpop.permute.xlu0 %737
      %739 = vrot.lane.b32.xlu0 %v664, 8
      %v740 = vpop.permute.xlu0 %739
      %741 = vrot.lane.b32.xlu0 %v667, 8
      %v742 = vpop.permute.xlu0 %741
      %743 = vrot.lane.b32.xlu0 %v669, 8
      %v744 = vpop.permute.xlu0 %743
      %745 = vrot.lane.b32.xlu0 %v672, 8
      %v746 = vpop.permute.xlu0 %745
      %747 = vrot.lane.b32.xlu0 %v674, 8
      %v748 = vpop.permute.xlu0 %747
      %749 = vrot.lane.b32.xlu0 %v677, 8
      %v750 = vpop.permute.xlu0 %749
      %751 = vrot.lane.b32.xlu0 %v679, 8
      %v752 = vpop.permute.xlu0 %751
      %753 = vrot.lane.b32.xlu0 %v682, 8
      %v754 = vpop.permute.xlu0 %753
      %755 = vrot.lane.b32.xlu0 %v684, 8
      %v756 = vpop.permute.xlu0 %755
      %v793 = vsel %vm204, %v287, %v487
      %v794 = vsel %vm204, %v288, %v489
      %v795 = vsel %vm204, %v290, %v491
      %v796 = vsel %vm204, %v291, %v493
      %v797 = vsel %vm204, %v293, %v495
      %v798 = vsel %vm204, %v294, %v497
      %v799 = vsel %vm204, %v296, %v499
      %v800 = vsel %vm204, %v297, %v501
      %v801 = vsel %vm204, %v299, %v503
      %v802 = vsel %vm204, %v300, %v505
      %v803 = vsel %vm204, %v302, %v507
      %v804 = vsel %vm204, %v303, %v509
      %v805 = vsel %vm204, %v305, %v511
      %v806 = vsel %vm204, %v306, %v513
      %v807 = vsel %vm204, %v308, %v515
      %v808 = vsel %vm204, %v309, %v517
      %v809 = vsel %vm204, %v311, %v519
      %v810 = vsel %vm204, %v312, %v521
      %v811 = vsel %vm204, %v314, %v523
      %v812 = vsel %vm204, %v315, %v525
      %v813 = vsel %vm204, %v317, %v527
      %v814 = vsel %vm204, %v318, %v529
      %v815 = vsel %vm204, %v320, %v531
      %v816 = vsel %vm204, %v321, %v533
      %v817 = vsel %vm204, %v323, %v535
      %v818 = vsel %vm204, %v324, %v537
      %v819 = vsel %vm204, %v326, %v539
      %v820 = vsel %vm204, %v327, %v541
      %v821 = vsel %vm204, %v329, %v543
      %v822 = vsel %vm204, %v330, %v545
      %v823 = vsel %vm204, %v332, %v547
      %v824 = vsel %vm204, %v333, %v549
      %v825 = vsel %vm204, %v335, %v551
      %v826 = vsel %vm204, %v336, %v553
      %v827 = vsel %vm204, %v338, %v555
      %v828 = vsel %vm204, %v339, %v557
      %vm829 = vcmask 64512
      %v830 = vsel %vm829, %v793, %v686
      %v831 = vsel %vm829, %v794, %v688
      %v832 = vsel %vm829, %v795, %v690
      %v833 = vsel %vm829, %v796, %v692
      %v834 = vsel %vm829, %v797, %v694
      %v835 = vsel %vm829, %v798, %v696
      %v836 = vsel %vm829, %v799, %v698
      %v837 = vsel %vm829, %v800, %v700
      %v838 = vsel %vm829, %v801, %v702
      %v839 = vsel %vm829, %v802, %v704
      %v840 = vsel %vm829, %v803, %v706
      %v841 = vsel %vm829, %v804, %v708
      %v842 = vsel %vm829, %v805, %v710
      %v843 = vsel %vm829, %v806, %v712
      %v844 = vsel %vm829, %v807, %v714
      %v845 = vsel %vm829, %v808, %v716
      %v846 = vsel %vm829, %v809, %v718
      %v847 = vsel %vm829, %v810, %v720
      %v848 = vsel %vm829, %v811, %v722
      %v849 = vsel %vm829, %v812, %v724
      %v850 = vsel %vm829, %v813, %v726
      %v851 = vsel %vm829, %v814, %v728
      %v852 = vsel %vm829, %v815, %v730
      %v853 = vsel %vm829, %v816, %v732
      %v854 = vsel %vm829, %v817, %v734
      %v855 = vsel %vm829, %v818, %v736
      %v856 = vsel %vm829, %v819, %v738
      %v857 = vsel %vm829, %v820, %v740
      %v858 = vsel %vm829, %v821, %v742
      %v859 = vsel %vm829, %v822, %v744
      %v860 = vsel %vm829, %v823, %v746
      %v861 = vsel %vm829, %v824, %v748
      %v862 = vsel %vm829, %v825, %v750
      %v863 = vsel %vm829, %v826, %v752
      %v864 = vsel %vm829, %v827, %v754
      %v865 = vsel %vm829, %v828, %v756
      %v866 = vld [vmem:[%s1] sm:$0xff]
      %v867 = vld [vmem:[%s1 + $0x8] sm:$0xf]
      %s868 = scalar_lea.vmem %s1, 16
      %v869 = vld [vmem:[%s868] sm:$0xff]
      %v870 = vld [vmem:[%s868 + $0x8] sm:$0xf]
      %vm871 = vcmask 97280
      %v873 = vsel %vm871, %v832, 0
      %v876 = vsel %vm871, %v833, 0
      %v879 = vsel %vm871, %v834, 0
      %v882 = vsel %vm871, %v835, 0
      %v885 = vsel %vm871, %v836, 0
      %v888 = vsel %vm871, %v837, 0
      %v891 = vsel %vm871, %v838, 0
      %v894 = vsel %vm871, %v839, 0
      %v897 = vsel %vm871, %v840, 0
      %v900 = vsel %vm871, %v841, 0
      %v903 = vsel %vm871, %v842, 0
      %v906 = vsel %vm871, %v843, 0
      %v909 = vsel %vm871, %v844, 0
      %v912 = vsel %vm871, %v845, 0
      %v915 = vsel %vm871, %v846, 0
      %v918 = vsel %vm871, %v847, 0
      %v921 = vsel %vm871, %v848, 0
      %v924 = vsel %vm871, %v849, 0
      %v927 = vsel %vm871, %v850, 0
      %v930 = vsel %vm871, %v851, 0
      %v933 = vsel %vm871, %v852, 0
      %v936 = vsel %vm871, %v853, 0
      %v939 = vsel %vm871, %v854, 0
      %v942 = vsel %vm871, %v855, 0
      %v945 = vsel %vm871, %v856, 0
      %v948 = vsel %vm871, %v857, 0
      %v951 = vsel %vm871, %v858, 0
      %v954 = vsel %vm871, %v859, 0
      %v957 = vsel %vm871, %v860, 0
      %v960 = vsel %vm871, %v861, 0
      %v963 = vsel %vm871, %v862, 0
      %v966 = vsel %vm871, %v863, 0
      %vm968 = vcmask 1043456
      %v970 = vsel %vm968, %v870, 0
      %972 = vmatpush.msra.mxu0 0.0
      %973 = vmatpush.msra.mxu0 0.0
      %974 = vmatpush.msra.mxu0 0.0
      %975 = vmatpush.msra.mxu0 0.0
      %976 = vmatpush.msra.mxu0 0.0
      %977 = vmatpush.msra.mxu0 0.0
      %978 = vmatpush.msra.mxu0 0.0
      %979 = vmatpush.msra.mxu0 0.0
      %980 = vmatpush.msra.mxu0 0.0
      %981 = vmatpush.msra.mxu0 0.0
      %982 = vmatpush.msra.mxu0 0.0
      %983 = vmatpush.msra.mxu0 0.0
      %984 = vmatpush.msra.mxu0 0.0
      %985 = vmatpush.msra.mxu0 0.0
      %986 = vmatpush.msra.mxu0 %v970
      %987 = vmatpush.msra.mxu0 %v869
      %988 = vmatmul.f32.gmra.mxu0 %v873
      %v989 = vpop.f32.mrf.mxu0
      %v990 = vadd.f32 0.0, %v989
      %991 = vmatmul.f32.gmra.mxu0 %v876
      %v992 = vpop.f32.mrf.mxu0
      %v993 = vadd.f32 0.0, %v992
      %994 = vmatmul.f32.gmra.mxu0 %v879
      %v995 = vpop.f32.mrf.mxu0
      %v996 = vadd.f32 0.0, %v995
      %997 = vmatmul.f32.gmra.mxu0 %v882
      %v998 = vpop.f32.mrf.mxu0
      %v999 = vadd.f32 0.0, %v998
      %1000 = vmatmul.f32.gmra.mxu0 %v885
      %v1001 = vpop.f32.mrf.mxu0
      %v1002 = vadd.f32 0.0, %v1001
      %1003 = vmatmul.f32.gmra.mxu0 %v888
      %v1004 = vpop.f32.mrf.mxu0
      %v1005 = vadd.f32 0.0, %v1004
      %1006 = vmatmul.f32.gmra.mxu0 %v891
      %v1007 = vpop.f32.mrf.mxu0
      %v1008 = vadd.f32 0.0, %v1007
      %1009 = vmatmul.f32.gmra.mxu0 %v894
      %v1010 = vpop.f32.mrf.mxu0
      %v1011 = vadd.f32 0.0, %v1010
      %1012 = vmatmul.f32.gmra.mxu0 %v897
      %v1013 = vpop.f32.mrf.mxu0
      %v1014 = vadd.f32 0.0, %v1013
      %1015 = vmatmul.f32.gmra.mxu0 %v900
      %v1016 = vpop.f32.mrf.mxu0
      %v1017 = vadd.f32 0.0, %v1016
      %1018 = vmatmul.f32.gmra.mxu0 %v903
      %v1019 = vpop.f32.mrf.mxu0
      %v1020 = vadd.f32 0.0, %v1019
      %1021 = vmatmul.f32.gmra.mxu0 %v906
      %v1022 = vpop.f32.mrf.mxu0
      %v1023 = vadd.f32 0.0, %v1022
      %1024 = vmatmul.f32.gmra.mxu0 %v909
      %v1025 = vpop.f32.mrf.mxu0
      %v1026 = vadd.f32 0.0, %v1025
      %1027 = vmatmul.f32.gmra.mxu0 %v912
      %v1028 = vpop.f32.mrf.mxu0
      %v1029 = vadd.f32 0.0, %v1028
      %1030 = vmatmul.f32.gmra.mxu0 %v915
      %v1031 = vpop.f32.mrf.mxu0
      %v1032 = vadd.f32 0.0, %v1031
      %1033 = vmatmul.f32.gmra.mxu0 %v918
      %v1034 = vpop.f32.mrf.mxu0
      %v1035 = vadd.f32 0.0, %v1034
      %1036 = vmatmul.f32.gmra.mxu0 %v921
      %v1037 = vpop.f32.mrf.mxu0
      %v1038 = vadd.f32 0.0, %v1037
      %1039 = vmatmul.f32.gmra.mxu0 %v924
      %v1040 = vpop.f32.mrf.mxu0
      %v1041 = vadd.f32 0.0, %v1040
      %1042 = vmatmul.f32.gmra.mxu0 %v927
      %v1043 = vpop.f32.mrf.mxu0
      %v1044 = vadd.f32 0.0, %v1043
      %1045 = vmatmul.f32.gmra.mxu0 %v930
      %v1046 = vpop.f32.mrf.mxu0
      %v1047 = vadd.f32 0.0, %v1046
      %1048 = vmatmul.f32.gmra.mxu0 %v933
      %v1049 = vpop.f32.mrf.mxu0
      %v1050 = vadd.f32 0.0, %v1049
      %1051 = vmatmul.f32.gmra.mxu0 %v936
      %v1052 = vpop.f32.mrf.mxu0
      %v1053 = vadd.f32 0.0, %v1052
      %1054 = vmatmul.f32.gmra.mxu0 %v939
      %v1055 = vpop.f32.mrf.mxu0
      %v1056 = vadd.f32 0.0, %v1055
      %1057 = vmatmul.f32.gmra.mxu0 %v942
      %v1058 = vpop.f32.mrf.mxu0
      %v1059 = vadd.f32 0.0, %v1058
      %1060 = vmatmul.f32.gmra.mxu0 %v945
      %v1061 = vpop.f32.mrf.mxu0
      %v1062 = vadd.f32 0.0, %v1061
      %1063 = vmatmul.f32.gmra.mxu0 %v948
      %v1064 = vpop.f32.mrf.mxu0
      %v1065 = vadd.f32 0.0, %v1064
      %1066 = vmatmul.f32.gmra.mxu0 %v951
      %v1067 = vpop.f32.mrf.mxu0
      %v1068 = vadd.f32 0.0, %v1067
      %1069 = vmatmul.f32.gmra.mxu0 %v954
      %v1070 = vpop.f32.mrf.mxu0
      %v1071 = vadd.f32 0.0, %v1070
      %1072 = vmatmul.f32.gmra.mxu0 %v957
      %v1073 = vpop.f32.mrf.mxu0
      %v1074 = vadd.f32 0.0, %v1073
      %1075 = vmatmul.f32.gmra.mxu0 %v960
      %v1076 = vpop.f32.mrf.mxu0
      %v1077 = vadd.f32 0.0, %v1076
      %1078 = vmatmul.f32.gmra.mxu0 %v963
      %v1079 = vpop.f32.mrf.mxu0
      %v1080 = vadd.f32 0.0, %v1079
      %1081 = vmatmul.f32.gmra.mxu0 %v966
      %v1082 = vpop.f32.mrf.mxu0
      %v1083 = vadd.f32 0.0, %v1082
      %1084 = vdwg.mxu0
      %v1086 = vsel %vm871, %v830, 0
      %v1089 = vsel %vm871, %v831, 0
      %v1092 = vsel %vm968, %v867, 0
      %1094 = vmatpush.msra.mxu0 0.0
      %1095 = vmatpush.msra.mxu0 0.0
      %1096 = vmatpush.msra.mxu0 0.0
      %1097 = vmatpush.msra.mxu0 0.0
      %1098 = vmatpush.msra.mxu0 0.0
      %1099 = vmatpush.msra.mxu0 0.0
      %1100 = vmatpush.msra.mxu0 0.0
      %1101 = vmatpush.msra.mxu0 0.0
      %1102 = vmatpush.msra.mxu0 0.0
      %1103 = vmatpush.msra.mxu0 0.0
      %1104 = vmatpush.msra.mxu0 0.0
      %1105 = vmatpush.msra.mxu0 0.0
      %1106 = vmatpush.msra.mxu0 0.0
      %1107 = vmatpush.msra.mxu0 0.0
      %1108 = vmatpush.msra.mxu0 %v1092
      %1109 = vmatpush.msra.mxu0 %v866
      %1110 = vmatmul.f32.gmra.mxu0 %v1086
      %v1111 = vpop.f32.mrf.mxu0
      %v1112 = vadd.f32 %v990, %v1111
      %1113 = vmatmul.f32.gmra.mxu0 %v1089
      %v1114 = vpop.f32.mrf.mxu0
      %v1115 = vadd.f32 %v993, %v1114
      %1116 = vmatmul.f32.gmra.mxu0 %v873
      %v1117 = vpop.f32.mrf.mxu0
      %v1118 = vadd.f32 %v996, %v1117
      %1119 = vmatmul.f32.gmra.mxu0 %v876
      %v1120 = vpop.f32.mrf.mxu0
      %v1121 = vadd.f32 %v999, %v1120
      %1122 = vmatmul.f32.gmra.mxu0 %v879
      %v1123 = vpop.f32.mrf.mxu0
      %v1124 = vadd.f32 %v1002, %v1123
      %1125 = vmatmul.f32.gmra.mxu0 %v882
      %v1126 = vpop.f32.mrf.mxu0
      %v1127 = vadd.f32 %v1005, %v1126
      %1128 = vmatmul.f32.gmra.mxu0 %v885
      %v1129 = vpop.f32.mrf.mxu0
      %v1130 = vadd.f32 %v1008, %v1129
      %1131 = vmatmul.f32.gmra.mxu0 %v888
      %v1132 = vpop.f32.mrf.mxu0
      %v1133 = vadd.f32 %v1011, %v1132
      %1134 = vmatmul.f32.gmra.mxu0 %v891
      %v1135 = vpop.f32.mrf.mxu0
      %v1136 = vadd.f32 %v1014, %v1135
      %1137 = vmatmul.f32.gmra.mxu0 %v894
      %v1138 = vpop.f32.mrf.mxu0
      %v1139 = vadd.f32 %v1017, %v1138
      %1140 = vmatmul.f32.gmra.mxu0 %v897
      %v1141 = vpop.f32.mrf.mxu0
      %v1142 = vadd.f32 %v1020, %v1141
      %1143 = vmatmul.f32.gmra.mxu0 %v900
      %v1144 = vpop.f32.mrf.mxu0
      %v1145 = vadd.f32 %v1023, %v1144
      %1146 = vmatmul.f32.gmra.mxu0 %v903
      %v1147 = vpop.f32.mrf.mxu0
      %v1148 = vadd.f32 %v1026, %v1147
      %1149 = vmatmul.f32.gmra.mxu0 %v906
      %v1150 = vpop.f32.mrf.mxu0
      %v1151 = vadd.f32 %v1029, %v1150
      %1152 = vmatmul.f32.gmra.mxu0 %v909
      %v1153 = vpop.f32.mrf.mxu0
      %v1154 = vadd.f32 %v1032, %v1153
      %1155 = vmatmul.f32.gmra.mxu0 %v912
      %v1156 = vpop.f32.mrf.mxu0
      %v1157 = vadd.f32 %v1035, %v1156
      %1158 = vmatmul.f32.gmra.mxu0 %v915
      %v1159 = vpop.f32.mrf.mxu0
      %v1160 = vadd.f32 %v1038, %v1159
      %1161 = vmatmul.f32.gmra.mxu0 %v918
      %v1162 = vpop.f32.mrf.mxu0
      %v1163 = vadd.f32 %v1041, %v1162
      %1164 = vmatmul.f32.gmra.mxu0 %v921
      %v1165 = vpop.f32.mrf.mxu0
      %v1166 = vadd.f32 %v1044, %v1165
      %1167 = vmatmul.f32.gmra.mxu0 %v924
      %v1168 = vpop.f32.mrf.mxu0
      %v1169 = vadd.f32 %v1047, %v1168
      %1170 = vmatmul.f32.gmra.mxu0 %v927
      %v1171 = vpop.f32.mrf.mxu0
      %v1172 = vadd.f32 %v1050, %v1171
      %1173 = vmatmul.f32.gmra.mxu0 %v930
      %v1174 = vpop.f32.mrf.mxu0
      %v1175 = vadd.f32 %v1053, %v1174
      %1176 = vmatmul.f32.gmra.mxu0 %v933
      %v1177 = vpop.f32.mrf.mxu0
      %v1178 = vadd.f32 %v1056, %v1177
      %1179 = vmatmul.f32.gmra.mxu0 %v936
      %v1180 = vpop.f32.mrf.mxu0
      %v1181 = vadd.f32 %v1059, %v1180
      %1182 = vmatmul.f32.gmra.mxu0 %v939
      %v1183 = vpop.f32.mrf.mxu0
      %v1184 = vadd.f32 %v1062, %v1183
      %1185 = vmatmul.f32.gmra.mxu0 %v942
      %v1186 = vpop.f32.mrf.mxu0
      %v1187 = vadd.f32 %v1065, %v1186
      %1188 = vmatmul.f32.gmra.mxu0 %v945
      %v1189 = vpop.f32.mrf.mxu0
      %v1190 = vadd.f32 %v1068, %v1189
      %1191 = vmatmul.f32.gmra.mxu0 %v948
      %v1192 = vpop.f32.mrf.mxu0
      %v1193 = vadd.f32 %v1071, %v1192
      %1194 = vmatmul.f32.gmra.mxu0 %v951
      %v1195 = vpop.f32.mrf.mxu0
      %v1196 = vadd.f32 %v1074, %v1195
      %1197 = vmatmul.f32.gmra.mxu0 %v954
      %v1198 = vpop.f32.mrf.mxu0
      %v1199 = vadd.f32 %v1077, %v1198
      %1200 = vmatmul.f32.gmra.mxu0 %v957
      %v1201 = vpop.f32.mrf.mxu0
      %v1202 = vadd.f32 %v1080, %v1201
      %1203 = vmatmul.f32.gmra.mxu0 %v960
      %v1204 = vpop.f32.mrf.mxu0
      %v1205 = vadd.f32 %v1083, %v1204
      %1206 = vdwg.mxu0
      %s1207 = scalar_lea.vmem %s1, 32
      %v1208 = vld [vmem:[%s1207] sm:$0xff]
      %v1209 = vld [vmem:[%s1207 + $0x8] sm:$0xf]
      %v1211 = vsel %vm871, %v864, 0
      %v1214 = vsel %vm871, %v865, 0
      %v1217 = vsel %vm968, %v1209, 0
      %1219 = vmatpush.msra.mxu0 0.0
      %1220 = vmatpush.msra.mxu0 0.0
      %1221 = vmatpush.msra.mxu0 0.0
      %1222 = vmatpush.msra.mxu0 0.0
      %1223 = vmatpush.msra.mxu0 0.0
      %1224 = vmatpush.msra.mxu0 0.0
      %1225 = vmatpush.msra.mxu0 0.0
      %1226 = vmatpush.msra.mxu0 0.0
      %1227 = vmatpush.msra.mxu0 0.0
      %1228 = vmatpush.msra.mxu0 0.0
      %1229 = vmatpush.msra.mxu0 0.0
      %1230 = vmatpush.msra.mxu0 0.0
      %1231 = vmatpush.msra.mxu0 0.0
      %1232 = vmatpush.msra.mxu0 0.0
      %1233 = vmatpush.msra.mxu0 %v1217
      %1234 = vmatpush.msra.mxu0 %v1208
      %1235 = vmatmul.f32.gmra.mxu0 %v879
      %v1236 = vpop.f32.mrf.mxu0
      %v1237 = vadd.f32 0.0, %v1236
      %1238 = vmatmul.f32.gmra.mxu0 %v882
      %v1239 = vpop.f32.mrf.mxu0
      %v1240 = vadd.f32 0.0, %v1239
      %1241 = vmatmul.f32.gmra.mxu0 %v885
      %v1242 = vpop.f32.mrf.mxu0
      %v1243 = vadd.f32 0.0, %v1242
      %1244 = vmatmul.f32.gmra.mxu0 %v888
      %v1245 = vpop.f32.mrf.mxu0
      %v1246 = vadd.f32 0.0, %v1245
      %1247 = vmatmul.f32.gmra.mxu0 %v891
      %v1248 = vpop.f32.mrf.mxu0
      %v1249 = vadd.f32 0.0, %v1248
      %1250 = vmatmul.f32.gmra.mxu0 %v894
      %v1251 = vpop.f32.mrf.mxu0
      %v1252 = vadd.f32 0.0, %v1251
      %1253 = vmatmul.f32.gmra.mxu0 %v897
      %v1254 = vpop.f32.mrf.mxu0
      %v1255 = vadd.f32 0.0, %v1254
      %1256 = vmatmul.f32.gmra.mxu0 %v900
      %v1257 = vpop.f32.mrf.mxu0
      %v1258 = vadd.f32 0.0, %v1257
      %1259 = vmatmul.f32.gmra.mxu0 %v903
      %v1260 = vpop.f32.mrf.mxu0
      %v1261 = vadd.f32 0.0, %v1260
      %1262 = vmatmul.f32.gmra.mxu0 %v906
      %v1263 = vpop.f32.mrf.mxu0
      %v1264 = vadd.f32 0.0, %v1263
      %1265 = vmatmul.f32.gmra.mxu0 %v909
      %v1266 = vpop.f32.mrf.mxu0
      %v1267 = vadd.f32 0.0, %v1266
      %1268 = vmatmul.f32.gmra.mxu0 %v912
      %v1269 = vpop.f32.mrf.mxu0
      %v1270 = vadd.f32 0.0, %v1269
      %1271 = vmatmul.f32.gmra.mxu0 %v915
      %v1272 = vpop.f32.mrf.mxu0
      %v1273 = vadd.f32 0.0, %v1272
      %1274 = vmatmul.f32.gmra.mxu0 %v918
      %v1275 = vpop.f32.mrf.mxu0
      %v1276 = vadd.f32 0.0, %v1275
      %1277 = vmatmul.f32.gmra.mxu0 %v921
      %v1278 = vpop.f32.mrf.mxu0
      %v1279 = vadd.f32 0.0, %v1278
      %1280 = vmatmul.f32.gmra.mxu0 %v924
      %v1281 = vpop.f32.mrf.mxu0
      %v1282 = vadd.f32 0.0, %v1281
      %1283 = vmatmul.f32.gmra.mxu0 %v927
      %v1284 = vpop.f32.mrf.mxu0
      %v1285 = vadd.f32 0.0, %v1284
      %1286 = vmatmul.f32.gmra.mxu0 %v930
      %v1287 = vpop.f32.mrf.mxu0
      %v1288 = vadd.f32 0.0, %v1287
      %1289 = vmatmul.f32.gmra.mxu0 %v933
      %v1290 = vpop.f32.mrf.mxu0
      %v1291 = vadd.f32 0.0, %v1290
      %1292 = vmatmul.f32.gmra.mxu0 %v936
      %v1293 = vpop.f32.mrf.mxu0
      %v1294 = vadd.f32 0.0, %v1293
      %1295 = vmatmul.f32.gmra.mxu0 %v939
      %v1296 = vpop.f32.mrf.mxu0
      %v1297 = vadd.f32 0.0, %v1296
      %1298 = vmatmul.f32.gmra.mxu0 %v942
      %v1299 = vpop.f32.mrf.mxu0
      %v1300 = vadd.f32 0.0, %v1299
      %1301 = vmatmul.f32.gmra.mxu0 %v945
      %v1302 = vpop.f32.mrf.mxu0
      %v1303 = vadd.f32 0.0, %v1302
      %1304 = vmatmul.f32.gmra.mxu0 %v948
      %v1305 = vpop.f32.mrf.mxu0
      %v1306 = vadd.f32 0.0, %v1305
      %1307 = vmatmul.f32.gmra.mxu0 %v951
      %v1308 = vpop.f32.mrf.mxu0
      %v1309 = vadd.f32 0.0, %v1308
      %1310 = vmatmul.f32.gmra.mxu0 %v954
      %v1311 = vpop.f32.mrf.mxu0
      %v1312 = vadd.f32 0.0, %v1311
      %1313 = vmatmul.f32.gmra.mxu0 %v957
      %v1314 = vpop.f32.mrf.mxu0
      %v1315 = vadd.f32 0.0, %v1314
      %1316 = vmatmul.f32.gmra.mxu0 %v960
      %v1317 = vpop.f32.mrf.mxu0
      %v1318 = vadd.f32 0.0, %v1317
      %1319 = vmatmul.f32.gmra.mxu0 %v963
      %v1320 = vpop.f32.mrf.mxu0
      %v1321 = vadd.f32 0.0, %v1320
      %1322 = vmatmul.f32.gmra.mxu0 %v966
      %v1323 = vpop.f32.mrf.mxu0
      %v1324 = vadd.f32 0.0, %v1323
      %1325 = vmatmul.f32.gmra.mxu0 %v1211
      %v1326 = vpop.f32.mrf.mxu0
      %v1327 = vadd.f32 0.0, %v1326
      %1328 = vmatmul.f32.gmra.mxu0 %v1214
      %v1329 = vpop.f32.mrf.mxu0
      %v1330 = vadd.f32 0.0, %v1329
      %1331 = vdwg.mxu0
      %v1332 = vadd.f32 %v1112, %v1237
      %v1333 = vadd.f32 %v1115, %v1240
      %v1334 = vadd.f32 %v1118, %v1243
      %v1335 = vadd.f32 %v1121, %v1246
      %v1336 = vadd.f32 %v1124, %v1249
      %v1337 = vadd.f32 %v1127, %v1252
      %v1338 = vadd.f32 %v1130, %v1255
      %v1339 = vadd.f32 %v1133, %v1258
      %v1340 = vadd.f32 %v1136, %v1261
      %v1341 = vadd.f32 %v1139, %v1264
      %v1342 = vadd.f32 %v1142, %v1267
      %v1343 = vadd.f32 %v1145, %v1270
      %v1344 = vadd.f32 %v1148, %v1273
      %v1345 = vadd.f32 %v1151, %v1276
      %v1346 = vadd.f32 %v1154, %v1279
      %v1347 = vadd.f32 %v1157, %v1282
      %v1348 = vadd.f32 %v1160, %v1285
      %v1349 = vadd.f32 %v1163, %v1288
      %v1350 = vadd.f32 %v1166, %v1291
      %v1351 = vadd.f32 %v1169, %v1294
      %v1352 = vadd.f32 %v1172, %v1297
      %v1353 = vadd.f32 %v1175, %v1300
      %v1354 = vadd.f32 %v1178, %v1303
      %v1355 = vadd.f32 %v1181, %v1306
      %v1356 = vadd.f32 %v1184, %v1309
      %v1357 = vadd.f32 %v1187, %v1312
      %v1358 = vadd.f32 %v1190, %v1315
      %v1359 = vadd.f32 %v1193, %v1318
      %v1360 = vadd.f32 %v1196, %v1321
      %v1361 = vadd.f32 %v1199, %v1324
      %v1362 = vadd.f32 %v1202, %v1327
      %v1363 = vadd.f32 %v1205, %v1330
      %v1364 = vsel %vm204, %v1332, 0.0
      %v1365 = vsel %vm204, %v1333, 0.0
      %v1366 = vadd.f32 %v1364, %v1365
      %v1367 = vsel %vm204, %v1334, 0.0
      %v1368 = vadd.f32 %v1366, %v1367
      %v1369 = vsel %vm204, %v1335, 0.0
      %v1370 = vadd.f32 %v1368, %v1369
      %v1371 = vsel %vm204, %v1336, 0.0
      %v1372 = vadd.f32 %v1370, %v1371
      %v1373 = vsel %vm204, %v1337, 0.0
      %v1374 = vadd.f32 %v1372, %v1373
      %v1375 = vsel %vm204, %v1338, 0.0
      %v1376 = vadd.f32 %v1374, %v1375
      %v1377 = vsel %vm204, %v1339, 0.0
      %v1378 = vadd.f32 %v1376, %v1377
      %v1379 = vsel %vm204, %v1340, 0.0
      %v1380 = vadd.f32 %v1378, %v1379
      %v1381 = vsel %vm204, %v1341, 0.0
      %v1382 = vadd.f32 %v1380, %v1381
      %v1383 = vsel %vm204, %v1342, 0.0
      %v1384 = vadd.f32 %v1382, %v1383
      %v1385 = vsel %vm204, %v1343, 0.0
      %v1386 = vadd.f32 %v1384, %v1385
      %v1387 = vsel %vm204, %v1344, 0.0
      %v1388 = vadd.f32 %v1386, %v1387
      %v1389 = vsel %vm204, %v1345, 0.0
      %v1390 = vadd.f32 %v1388, %v1389
      %v1391 = vsel %vm204, %v1346, 0.0
      %v1392 = vadd.f32 %v1390, %v1391
      %v1393 = vsel %vm204, %v1347, 0.0
      %v1394 = vadd.f32 %v1392, %v1393
      %v1395 = vsel %vm204, %v1348, 0.0
      %v1396 = vadd.f32 %v1394, %v1395
      %v1397 = vsel %vm204, %v1349, 0.0
      %v1398 = vadd.f32 %v1396, %v1397
      %v1399 = vsel %vm204, %v1350, 0.0
      %v1400 = vadd.f32 %v1398, %v1399
      %v1401 = vsel %vm204, %v1351, 0.0
      %v1402 = vadd.f32 %v1400, %v1401
      %v1403 = vsel %vm204, %v1352, 0.0
      %v1404 = vadd.f32 %v1402, %v1403
      %v1405 = vsel %vm204, %v1353, 0.0
      %v1406 = vadd.f32 %v1404, %v1405
      %v1407 = vsel %vm204, %v1354, 0.0
      %v1408 = vadd.f32 %v1406, %v1407
      %v1409 = vsel %vm204, %v1355, 0.0
      %v1410 = vadd.f32 %v1408, %v1409
      %v1411 = vsel %vm204, %v1356, 0.0
      %v1412 = vadd.f32 %v1410, %v1411
      %v1413 = vsel %vm204, %v1357, 0.0
      %v1414 = vadd.f32 %v1412, %v1413
      %v1415 = vsel %vm204, %v1358, 0.0
      %v1416 = vadd.f32 %v1414, %v1415
      %v1417 = vsel %vm204, %v1359, 0.0
      %v1418 = vadd.f32 %v1416, %v1417
      %v1419 = vsel %vm204, %v1360, 0.0
      %v1420 = vadd.f32 %v1418, %v1419
      %v1421 = vsel %vm204, %v1361, 0.0
      %v1422 = vadd.f32 %v1420, %v1421
      %v1423 = vsel %vm204, %v1362, 0.0
      %v1424 = vadd.f32 %v1422, %v1423
      %v1425 = vsel %vm204, %v1363, 0.0
      %v1426 = vadd.f32 %v1424, %v1425
      %v1427 = vrot.slane %v1426, 4
      %v1428 = vadd.f32 %v1426, %v1427
      %v1429 = vrot.slane %v1428, 2
      %v1430 = vadd.f32 %v1428, %v1429
      %v1431 = vrot.slane %v1430, 1
      %v1432 = vadd.f32 %v1430, %v1431
      %v1433 = vmul.f32 %v1332, %v1332
      %v1434 = vmul.f32 %v1333, %v1333
      %v1435 = vmul.f32 %v1334, %v1334
      %v1436 = vmul.f32 %v1335, %v1335
      %v1437 = vmul.f32 %v1336, %v1336
      %v1438 = vmul.f32 %v1337, %v1337
      %v1439 = vmul.f32 %v1338, %v1338
      %v1440 = vmul.f32 %v1339, %v1339
      %v1441 = vmul.f32 %v1340, %v1340
      %v1442 = vmul.f32 %v1341, %v1341
      %v1443 = vmul.f32 %v1342, %v1342
      %v1444 = vmul.f32 %v1343, %v1343
      %v1445 = vmul.f32 %v1344, %v1344
      %v1446 = vmul.f32 %v1345, %v1345
      %v1447 = vmul.f32 %v1346, %v1346
      %v1448 = vmul.f32 %v1347, %v1347
      %v1449 = vmul.f32 %v1348, %v1348
      %v1450 = vmul.f32 %v1349, %v1349
      %v1451 = vmul.f32 %v1350, %v1350
      %v1452 = vmul.f32 %v1351, %v1351
      %v1453 = vmul.f32 %v1352, %v1352
      %v1454 = vmul.f32 %v1353, %v1353
      %v1455 = vmul.f32 %v1354, %v1354
      %v1456 = vmul.f32 %v1355, %v1355
      %v1457 = vmul.f32 %v1356, %v1356
      %v1458 = vmul.f32 %v1357, %v1357
      %v1459 = vmul.f32 %v1358, %v1358
      %v1460 = vmul.f32 %v1359, %v1359
      %v1461 = vmul.f32 %v1360, %v1360
      %v1462 = vmul.f32 %v1361, %v1361
      %v1463 = vmul.f32 %v1362, %v1362
      %v1464 = vmul.f32 %v1363, %v1363
      %v1465 = vsel %vm204, %v1433, 0.0
      %v1466 = vsel %vm204, %v1434, 0.0
      %v1467 = vadd.f32 %v1465, %v1466
      %v1468 = vsel %vm204, %v1435, 0.0
      %v1469 = vadd.f32 %v1467, %v1468
      %v1470 = vsel %vm204, %v1436, 0.0
      %v1471 = vadd.f32 %v1469, %v1470
      %v1472 = vsel %vm204, %v1437, 0.0
      %v1473 = vadd.f32 %v1471, %v1472
      %v1474 = vsel %vm204, %v1438, 0.0
      %v1475 = vadd.f32 %v1473, %v1474
      %v1476 = vsel %vm204, %v1439, 0.0
      %v1477 = vadd.f32 %v1475, %v1476
      %v1478 = vsel %vm204, %v1440, 0.0
      %v1479 = vadd.f32 %v1477, %v1478
      %v1480 = vsel %vm204, %v1441, 0.0
      %v1481 = vadd.f32 %v1479, %v1480
      %v1482 = vsel %vm204, %v1442, 0.0
      %v1483 = vadd.f32 %v1481, %v1482
      %v1484 = vsel %vm204, %v1443, 0.0
      %v1485 = vadd.f32 %v1483, %v1484
      %v1486 = vsel %vm204, %v1444, 0.0
      %v1487 = vadd.f32 %v1485, %v1486
      %v1488 = vsel %vm204, %v1445, 0.0
      %v1489 = vadd.f32 %v1487, %v1488
      %v1490 = vsel %vm204, %v1446, 0.0
      %v1491 = vadd.f32 %v1489, %v1490
      %v1492 = vsel %vm204, %v1447, 0.0
      %v1493 = vadd.f32 %v1491, %v1492
      %v1494 = vsel %vm204, %v1448, 0.0
      %v1495 = vadd.f32 %v1493, %v1494
      %v1496 = vsel %vm204, %v1449, 0.0
      %v1497 = vadd.f32 %v1495, %v1496
      %v1498 = vsel %vm204, %v1450, 0.0
      %v1499 = vadd.f32 %v1497, %v1498
      %v1500 = vsel %vm204, %v1451, 0.0
      %v1501 = vadd.f32 %v1499, %v1500
      %v1502 = vsel %vm204, %v1452, 0.0
      %v1503 = vadd.f32 %v1501, %v1502
      %v1504 = vsel %vm204, %v1453, 0.0
      %v1505 = vadd.f32 %v1503, %v1504
      %v1506 = vsel %vm204, %v1454, 0.0
      %v1507 = vadd.f32 %v1505, %v1506
      %v1508 = vsel %vm204, %v1455, 0.0
      %v1509 = vadd.f32 %v1507, %v1508
      %v1510 = vsel %vm204, %v1456, 0.0
      %v1511 = vadd.f32 %v1509, %v1510
      %v1512 = vsel %vm204, %v1457, 0.0
      %v1513 = vadd.f32 %v1511, %v1512
      %v1514 = vsel %vm204, %v1458, 0.0
      %v1515 = vadd.f32 %v1513, %v1514
      %v1516 = vsel %vm204, %v1459, 0.0
      %v1517 = vadd.f32 %v1515, %v1516
      %v1518 = vsel %vm204, %v1460, 0.0
      %v1519 = vadd.f32 %v1517, %v1518
      %v1520 = vsel %vm204, %v1461, 0.0
      %v1521 = vadd.f32 %v1519, %v1520
      %v1522 = vsel %vm204, %v1462, 0.0
      %v1523 = vadd.f32 %v1521, %v1522
      %v1524 = vsel %vm204, %v1463, 0.0
      %v1525 = vadd.f32 %v1523, %v1524
      %v1526 = vsel %vm204, %v1464, 0.0
      %v1527 = vadd.f32 %v1525, %v1526
      %v1528 = vrot.slane %v1527, 4
      %v1529 = vadd.f32 %v1527, %v1528
      %v1530 = vrot.slane %v1529, 2
      %v1531 = vadd.f32 %v1529, %v1530
      %v1532 = vrot.slane %v1531, 1
      %v1533 = vadd.f32 %v1531, %v1532
      %v1534 = vmul.f32 %v1432, 0.00390625
      %v1535 = vmul.f32 %v1533, 0.00390625
      %v1536 = vmul.f32 %v1534, %v1534
      %v1537 = vsub.f32 %v1535, %v1536
      %v1538 = vmax.f32 %v1537, 0.0
      %v1539 = vsub.f32 %v1332, %v1534
      %v1540 = vsub.f32 %v1333, %v1534
      %v1541 = vsub.f32 %v1334, %v1534
      %v1542 = vsub.f32 %v1335, %v1534
      %v1543 = vsub.f32 %v1336, %v1534
      %v1544 = vsub.f32 %v1337, %v1534
      %v1545 = vsub.f32 %v1338, %v1534
      %v1546 = vsub.f32 %v1339, %v1534
      %v1547 = vsub.f32 %v1340, %v1534
      %v1548 = vsub.f32 %v1341, %v1534
      %v1549 = vsub.f32 %v1342, %v1534
      %v1550 = vsub.f32 %v1343, %v1534
      %v1551 = vsub.f32 %v1344, %v1534
      %v1552 = vsub.f32 %v1345, %v1534
      %v1553 = vsub.f32 %v1346, %v1534
      %v1554 = vsub.f32 %v1347, %v1534
      %v1555 = vsub.f32 %v1348, %v1534
      %v1556 = vsub.f32 %v1349, %v1534
      %v1557 = vsub.f32 %v1350, %v1534
      %v1558 = vsub.f32 %v1351, %v1534
      %v1559 = vsub.f32 %v1352, %v1534
      %v1560 = vsub.f32 %v1353, %v1534
      %v1561 = vsub.f32 %v1354, %v1534
      %v1562 = vsub.f32 %v1355, %v1534
      %v1563 = vsub.f32 %v1356, %v1534
      %v1564 = vsub.f32 %v1357, %v1534
      %v1565 = vsub.f32 %v1358, %v1534
      %v1566 = vsub.f32 %v1359, %v1534
      %v1567 = vsub.f32 %v1360, %v1534
      %v1568 = vsub.f32 %v1361, %v1534
      %v1569 = vsub.f32 %v1362, %v1534
      %v1570 = vsub.f32 %v1363, %v1534
      %v1571 = vadd.f32 %v1538, 1e-05
      %v1572 = vrsqrt.pop %v1571
      %v1573 = vmul.f32 %v1572, %v1571
      %v1574 = vmul.f32 %v1573, %v1572
      %v1575 = vmul.f32 0.5, %v1574
      %v1576 = vsub.f32 1.5, %v1575
      %v1577 = vmul.f32 %v1572, %v1576
      %vm1578 = vweird.f32 %v1571
      %vm1579 = vweird.f32 %v1572
      %vm1580 = vmor %vm1578, %vm1579
      %v1581 = vsel %vm1580, %v1572, %v1577
      %v1582 = vmul.f32 %v1539, %v1581
      %v1583 = vmul.f32 %v1540, %v1581
      %v1584 = vmul.f32 %v1541, %v1581
      %v1585 = vmul.f32 %v1542, %v1581
      %v1586 = vmul.f32 %v1543, %v1581
      %v1587 = vmul.f32 %v1544, %v1581
      %v1588 = vmul.f32 %v1545, %v1581
      %v1589 = vmul.f32 %v1546, %v1581
      %v1590 = vmul.f32 %v1547, %v1581
      %v1591 = vmul.f32 %v1548, %v1581
      %v1592 = vmul.f32 %v1549, %v1581
      %v1593 = vmul.f32 %v1550, %v1581
      %v1594 = vmul.f32 %v1551, %v1581
      %v1595 = vmul.f32 %v1552, %v1581
      %v1596 = vmul.f32 %v1553, %v1581
      %v1597 = vmul.f32 %v1554, %v1581
      %v1598 = vmul.f32 %v1555, %v1581
      %v1599 = vmul.f32 %v1556, %v1581
      %v1600 = vmul.f32 %v1557, %v1581
      %v1601 = vmul.f32 %v1558, %v1581
      %v1602 = vmul.f32 %v1559, %v1581
      %v1603 = vmul.f32 %v1560, %v1581
      %v1604 = vmul.f32 %v1561, %v1581
      %v1605 = vmul.f32 %v1562, %v1581
      %v1606 = vmul.f32 %v1563, %v1581
      %v1607 = vmul.f32 %v1564, %v1581
      %v1608 = vmul.f32 %v1565, %v1581
      %v1609 = vmul.f32 %v1566, %v1581
      %v1610 = vmul.f32 %v1567, %v1581
      %v1611 = vmul.f32 %v1568, %v1581
      %v1612 = vmul.f32 %v1569, %v1581
      %v1613 = vmul.f32 %v1570, %v1581
      %v1614 = vmax.f32 %v1582, 0.0
      %v1615 = vmax.f32 %v1583, 0.0
      %v1616 = vmax.f32 %v1584, 0.0
      %v1617 = vmax.f32 %v1585, 0.0
      %v1618 = vmax.f32 %v1586, 0.0
      %v1619 = vmax.f32 %v1587, 0.0
      %v1620 = vmax.f32 %v1588, 0.0
      %v1621 = vmax.f32 %v1589, 0.0
      %v1622 = vmax.f32 %v1590, 0.0
      %v1623 = vmax.f32 %v1591, 0.0
      %v1624 = vmax.f32 %v1592, 0.0
      %v1625 = vmax.f32 %v1593, 0.0
      %v1626 = vmax.f32 %v1594, 0.0
      %v1627 = vmax.f32 %v1595, 0.0
      %v1628 = vmax.f32 %v1596, 0.0
      %v1629 = vmax.f32 %v1597, 0.0
      %v1630 = vmax.f32 %v1598, 0.0
      %v1631 = vmax.f32 %v1599, 0.0
      %v1632 = vmax.f32 %v1600, 0.0
      %v1633 = vmax.f32 %v1601, 0.0
      %v1634 = vmax.f32 %v1602, 0.0
      %v1635 = vmax.f32 %v1603, 0.0
      %v1636 = vmax.f32 %v1604, 0.0
      %v1637 = vmax.f32 %v1605, 0.0
      %v1638 = vmax.f32 %v1606, 0.0
      %v1639 = vmax.f32 %v1607, 0.0
      %v1640 = vmax.f32 %v1608, 0.0
      %v1641 = vmax.f32 %v1609, 0.0
      %v1642 = vmax.f32 %v1610, 0.0
      %v1643 = vmax.f32 %v1611, 0.0
      %v1644 = vmax.f32 %v1612, 0.0
      %v1645 = vmax.f32 %v1613, 0.0
      %1646 = vst.msk [vmem:[%s203 + $0x1] sm:$0xff] %vm204, %v1614
      %1647 = vst.msk [vmem:[%s203 + $0x9] sm:$0xff] %vm204, %v1615
      %1648 = vst.msk [vmem:[%s203 + $0x19] sm:$0xff] %vm204, %v1616
      %1649 = vst.msk [vmem:[%s203 + $0x21] sm:$0xff] %vm204, %v1617
      %1650 = vst.msk [vmem:[%s203 + $0x31] sm:$0xff] %vm204, %v1618
      %1651 = vst.msk [vmem:[%s203 + $0x39] sm:$0xff] %vm204, %v1619
      %1652 = vst.msk [vmem:[%s203 + $0x49] sm:$0xff] %vm204, %v1620
      %1653 = vst.msk [vmem:[%s203 + $0x51] sm:$0xff] %vm204, %v1621
      %1654 = vst.msk [vmem:[%s203 + $0x61] sm:$0xff] %vm204, %v1622
      %1655 = vst.msk [vmem:[%s203 + $0x69] sm:$0xff] %vm204, %v1623
      %1656 = vst.msk [vmem:[%s203 + $0x79] sm:$0xff] %vm204, %v1624
      %1657 = vst.msk [vmem:[%s203 + $0x81] sm:$0xff] %vm204, %v1625
      %1658 = vst.msk [vmem:[%s203 + $0x91] sm:$0xff] %vm204, %v1626
      %1659 = vst.msk [vmem:[%s203 + $0x99] sm:$0xff] %vm204, %v1627
      %1660 = vst.msk [vmem:[%s203 + $0xa9] sm:$0xff] %vm204, %v1628
      %1661 = vst.msk [vmem:[%s203 + $0xb1] sm:$0xff] %vm204, %v1629
      %1662 = vst.msk [vmem:[%s203 + $0xc1] sm:$0xff] %vm204, %v1630
      %1663 = vst.msk [vmem:[%s203 + $0xc9] sm:$0xff] %vm204, %v1631
      %1664 = vst.msk [vmem:[%s203 + $0xd9] sm:$0xff] %vm204, %v1632
      %1665 = vst.msk [vmem:[%s203 + $0xe1] sm:$0xff] %vm204, %v1633
      %1666 = vst.msk [vmem:[%s203 + $0xf1] sm:$0xff] %vm204, %v1634
      %1667 = vst.msk [vmem:[%s203 + $0xf9] sm:$0xff] %vm204, %v1635
      %1668 = vst.msk [vmem:[%s203 + $0x109] sm:$0xff] %vm204, %v1636
      %1669 = vst.msk [vmem:[%s203 + $0x111] sm:$0xff] %vm204, %v1637
      %1670 = vst.msk [vmem:[%s203 + $0x121] sm:$0xff] %vm204, %v1638
      %1671 = vst.msk [vmem:[%s203 + $0x129] sm:$0xff] %vm204, %v1639
      %1672 = vst.msk [vmem:[%s203 + $0x139] sm:$0xff] %vm204, %v1640
      %1673 = vst.msk [vmem:[%s203 + $0x141] sm:$0xff] %vm204, %v1641
      %1674 = vst.msk [vmem:[%s203 + $0x151] sm:$0xff] %vm204, %v1642
      %1675 = vst.msk [vmem:[%s203 + $0x159] sm:$0xff] %vm204, %v1643
      %1676 = vst.msk [vmem:[%s203 + $0x169] sm:$0xff] %vm204, %v1644
      %1677 = vst.msk [vmem:[%s203 + $0x171] sm:$0xff] %vm204, %v1645
      %1678 = vst.msk [vmem:[%s203 - $0x1] sm:$0x2] %vm237, %v1614
      %1679 = vst.msk [vmem:[%s203 + $0x17] sm:$0x2] %vm237, %v1616
      %1680 = vst.msk [vmem:[%s203 + $0x2f] sm:$0x2] %vm237, %v1618
      %1681 = vst.msk [vmem:[%s203 + $0x47] sm:$0x2] %vm237, %v1620
      %1682 = vst.msk [vmem:[%s203 + $0x5f] sm:$0x2] %vm237, %v1622
      %1683 = vst.msk [vmem:[%s203 + $0x77] sm:$0x2] %vm237, %v1624
      %1684 = vst.msk [vmem:[%s203 + $0x8f] sm:$0x2] %vm237, %v1626
      %1685 = vst.msk [vmem:[%s203 + $0xa7] sm:$0x2] %vm237, %v1628
      %1686 = vst.msk [vmem:[%s203 + $0xbf] sm:$0x2] %vm237, %v1630
      %1687 = vst.msk [vmem:[%s203 + $0xd7] sm:$0x2] %vm237, %v1632
      %1688 = vst.msk [vmem:[%s203 + $0xef] sm:$0x2] %vm237, %v1634
      %1689 = vst.msk [vmem:[%s203 + $0x107] sm:$0x2] %vm237, %v1636
      %1690 = vst.msk [vmem:[%s203 + $0x11f] sm:$0x2] %vm237, %v1638
      %1691 = vst.msk [vmem:[%s203 + $0x137] sm:$0x2] %vm237, %v1640
      %1692 = vst.msk [vmem:[%s203 + $0x14f] sm:$0x2] %vm237, %v1642
      %1693 = vst.msk [vmem:[%s203 + $0x167] sm:$0x2] %vm237, %v1644
      %1694 = vst.msk [vmem:[%s203 + $0xb] sm:$0x40] %vm254, %v1615
      %1695 = vst.msk [vmem:[%s203 + $0x23] sm:$0x40] %vm254, %v1617
      %1696 = vst.msk [vmem:[%s203 + $0x3b] sm:$0x40] %vm254, %v1619
      %1697 = vst.msk [vmem:[%s203 + $0x53] sm:$0x40] %vm254, %v1621
      %1698 = vst.msk [vmem:[%s203 + $0x6b] sm:$0x40] %vm254, %v1623
      %1699 = vst.msk [vmem:[%s203 + $0x83] sm:$0x40] %vm254, %v1625
      %1700 = vst.msk [vmem:[%s203 + $0x9b] sm:$0x40] %vm254, %v1627
      %1701 = vst.msk [vmem:[%s203 + $0xb3] sm:$0x40] %vm254, %v1629
      %1702 = vst.msk [vmem:[%s203 + $0xcb] sm:$0x40] %vm254, %v1631
      %1703 = vst.msk [vmem:[%s203 + $0xe3] sm:$0x40] %vm254, %v1633
      %1704 = vst.msk [vmem:[%s203 + $0xfb] sm:$0x40] %vm254, %v1635
      %1705 = vst.msk [vmem:[%s203 + $0x113] sm:$0x40] %vm254, %v1637
      %1706 = vst.msk [vmem:[%s203 + $0x12b] sm:$0x40] %vm254, %v1639
      %1707 = vst.msk [vmem:[%s203 + $0x143] sm:$0x40] %vm254, %v1641
      %1708 = vst.msk [vmem:[%s203 + $0x15b] sm:$0x40] %vm254, %v1643
      %1709 = vst.msk [vmem:[%s203 + $0x173] sm:$0x40] %vm254, %v1645
      %v1710 = vld [vmem:[%s271] sm:$0xff]
      %v1711 = vld [vmem:[%s271 + $0x8] sm:$0xff]
      %v1712 = vld [vmem:[%s271 + $0x10] sm:$0x3]
      %1713 = vst.msk [vmem:[#allocation2] sm:$0xff] %vm204, %v1710
      %1714 = vst.msk [vmem:[#allocation2 + $0x8] sm:$0xff] %vm204, %v1711
      %1715 = vst.msk [vmem:[#allocation2 + $0x10] sm:$0x3] %vm277, %v1712
      %v1716 = vld [vmem:[%s279] sm:$0xff]
      %v1717 = vld [vmem:[%s279 + $0x8] sm:$0xff]
      %v1718 = vld [vmem:[%s279 + $0x10] sm:$0x3]
      %1719 = vst.msk [vmem:[%s283] sm:$0xff] %vm204, %v1716
      %1720 = vst.msk [vmem:[%s283 + $0x8] sm:$0xff] %vm204, %v1717
      %1721 = vst.msk [vmem:[%s283 + $0x10] sm:$0x3] %vm277, %v1718
      %v1722 = vld [vmem:[#allocation2] sm:$0xff]
      %v1723 = vld [vmem:[#allocation2 + $0x8] sm:$0xff]
      %v1724 = vld [vmem:[#allocation2 + $0x10] sm:$0x3]
      %v1725 = vld [vmem:[#allocation2 + $0x18] sm:$0xff]
      %v1726 = vld [vmem:[#allocation2 + $0x20] sm:$0xff]
      %v1727 = vld [vmem:[#allocation2 + $0x28] sm:$0x3]
      %v1728 = vld [vmem:[#allocation2 + $0x30] sm:$0xff]
      %v1729 = vld [vmem:[#allocation2 + $0x38] sm:$0xff]
      %v1730 = vld [vmem:[#allocation2 + $0x40] sm:$0x3]
      %v1731 = vld [vmem:[#allocation2 + $0x48] sm:$0xff]
      %v1732 = vld [vmem:[#allocation2 + $0x50] sm:$0xff]
      %v1733 = vld [vmem:[#allocation2 + $0x58] sm:$0x3]
      %v1734 = vld [vmem:[#allocation2 + $0x60] sm:$0xff]
      %v1735 = vld [vmem:[#allocation2 + $0x68] sm:$0xff]
      %v1736 = vld [vmem:[#allocation2 + $0x70] sm:$0x3]
      %v1737 = vld [vmem:[#allocation2 + $0x78] sm:$0xff]
      %v1738 = vld [vmem:[#allocation2 + $0x80] sm:$0xff]
      %v1739 = vld [vmem:[#allocation2 + $0x88] sm:$0x3]
      %v1740 = vld [vmem:[#allocation2 + $0x90] sm:$0xff]
      %v1741 = vld [vmem:[#allocation2 + $0x98] sm:$0xff]
      %v1742 = vld [vmem:[#allocation2 + $0xa0] sm:$0x3]
      %v1743 = vld [vmem:[#allocation2 + $0xa8] sm:$0xff]
      %v1744 = vld [vmem:[#allocation2 + $0xb0] sm:$0xff]
      %v1745 = vld [vmem:[#allocation2 + $0xb8] sm:$0x3]
      %v1746 = vld [vmem:[#allocation2 + $0xc0] sm:$0xff]
      %v1747 = vld [vmem:[#allocation2 + $0xc8] sm:$0xff]
      %v1748 = vld [vmem:[#allocation2 + $0xd0] sm:$0x3]
      %v1749 = vld [vmem:[#allocation2 + $0xd8] sm:$0xff]
      %v1750 = vld [vmem:[#allocation2 + $0xe0] sm:$0xff]
      %v1751 = vld [vmem:[#allocation2 + $0xe8] sm:$0x3]
      %v1752 = vld [vmem:[#allocation2 + $0xf0] sm:$0xff]
      %v1753 = vld [vmem:[#allocation2 + $0xf8] sm:$0xff]
      %v1754 = vld [vmem:[#allocation2 + $0x100] sm:$0x3]
      %v1755 = vld [vmem:[#allocation2 + $0x108] sm:$0xff]
      %v1756 = vld [vmem:[#allocation2 + $0x110] sm:$0xff]
      %v1757 = vld [vmem:[#allocation2 + $0x118] sm:$0x3]
      %v1758 = vld [vmem:[#allocation2 + $0x120] sm:$0xff]
      %v1759 = vld [vmem:[#allocation2 + $0x128] sm:$0xff]
      %v1760 = vld [vmem:[#allocation2 + $0x130] sm:$0x3]
      %v1761 = vld [vmem:[#allocation2 + $0x138] sm:$0xff]
      %v1762 = vld [vmem:[#allocation2 + $0x140] sm:$0xff]
      %v1763 = vld [vmem:[#allocation2 + $0x148] sm:$0x3]
      %v1764 = vld [vmem:[#allocation2 + $0x150] sm:$0xff]
      %v1765 = vld [vmem:[#allocation2 + $0x158] sm:$0xff]
      %v1766 = vld [vmem:[#allocation2 + $0x160] sm:$0x3]
      %v1767 = vld [vmem:[#allocation2 + $0x168] sm:$0xff]
      %v1768 = vld [vmem:[#allocation2 + $0x170] sm:$0xff]
      %v1769 = vld [vmem:[#allocation2 + $0x178] sm:$0x3]
      %v1770 = vld [vmem:[#allocation2 + $0x180] sm:$0xff]
      %v1771 = vld [vmem:[#allocation2 + $0x188] sm:$0xff]
      %v1772 = vld [vmem:[#allocation2 + $0x190] sm:$0x3]
      %v1773 = vld [vmem:[#allocation2 + $0x198] sm:$0xff]
      %v1774 = vld [vmem:[#allocation2 + $0x1a0] sm:$0xff]
      %v1775 = vld [vmem:[#allocation2 + $0x1a8] sm:$0x3]
      %v1830 = vrot.slane %v1722, 1
      %v1831 = vrot.slane %v1723, 1
      %v1832 = vsel %vm395, %v1830, %v1831
      %v1833 = vrot.slane %v1724, 1
      %v1834 = vsel %vm395, %v1831, %v1833
      %v1835 = vrot.slane %v1725, 1
      %v1836 = vrot.slane %v1726, 1
      %v1837 = vsel %vm395, %v1835, %v1836
      %v1838 = vrot.slane %v1727, 1
      %v1839 = vsel %vm395, %v1836, %v1838
      %v1840 = vrot.slane %v1728, 1
      %v1841 = vrot.slane %v1729, 1
      %v1842 = vsel %vm395, %v1840, %v1841
      %v1843 = vrot.slane %v1730, 1
      %v1844 = vsel %vm395, %v1841, %v1843
      %v1845 = vrot.slane %v1731, 1
      %v1846 = vrot.slane %v1732, 1
      %v1847 = vsel %vm395, %v1845, %v1846
      %v1848 = vrot.slane %v1733, 1
      %v1849 = vsel %vm395, %v1846, %v1848
      %v1850 = vrot.slane %v1734, 1
      %v1851 = vrot.slane %v1735, 1
      %v1852 = vsel %vm395, %v1850, %v1851
      %v1853 = vrot.slane %v1736, 1
      %v1854 = vsel %vm395, %v1851, %v1853
      %v1855 = vrot.slane %v1737, 1
      %v1856 = vrot.slane %v1738, 1
      %v1857 = vsel %vm395, %v1855, %v1856
      %v1858 = vrot.slane %v1739, 1
      %v1859 = vsel %vm395, %v1856, %v1858
      %v1860 = vrot.slane %v1740, 1
      %v1861 = vrot.slane %v1741, 1
      %v1862 = vsel %vm395, %v1860, %v1861
      %v1863 = vrot.slane %v1742, 1
      %v1864 = vsel %vm395, %v1861, %v1863
      %v1865 = vrot.slane %v1743, 1
      %v1866 = vrot.slane %v1744, 1
      %v1867 = vsel %vm395, %v1865, %v1866
      %v1868 = vrot.slane %v1745, 1
      %v1869 = vsel %vm395, %v1866, %v1868
      %v1870 = vrot.slane %v1746, 1
      %v1871 = vrot.slane %v1747, 1
      %v1872 = vsel %vm395, %v1870, %v1871
      %v1873 = vrot.slane %v1748, 1
      %v1874 = vsel %vm395, %v1871, %v1873
      %v1875 = vrot.slane %v1749, 1
      %v1876 = vrot.slane %v1750, 1
      %v1877 = vsel %vm395, %v1875, %v1876
      %v1878 = vrot.slane %v1751, 1
      %v1879 = vsel %vm395, %v1876, %v1878
      %v1880 = vrot.slane %v1752, 1
      %v1881 = vrot.slane %v1753, 1
      %v1882 = vsel %vm395, %v1880, %v1881
      %v1883 = vrot.slane %v1754, 1
      %v1884 = vsel %vm395, %v1881, %v1883
      %v1885 = vrot.slane %v1755, 1
      %v1886 = vrot.slane %v1756, 1
      %v1887 = vsel %vm395, %v1885, %v1886
      %v1888 = vrot.slane %v1757, 1
      %v1889 = vsel %vm395, %v1886, %v1888
      %v1890 = vrot.slane %v1758, 1
      %v1891 = vrot.slane %v1759, 1
      %v1892 = vsel %vm395, %v1890, %v1891
      %v1893 = vrot.slane %v1760, 1
      %v1894 = vsel %vm395, %v1891, %v1893
      %v1895 = vrot.slane %v1761, 1
      %v1896 = vrot.slane %v1762, 1
      %v1897 = vsel %vm395, %v1895, %v1896
      %v1898 = vrot.slane %v1763, 1
      %v1899 = vsel %vm395, %v1896, %v1898
      %v1900 = vrot.slane %v1764, 1
      %v1901 = vrot.slane %v1765, 1
      %v1902 = vsel %vm395, %v1900, %v1901
      %v1903 = vrot.slane %v1766, 1
      %v1904 = vsel %vm395, %v1901, %v1903
      %v1905 = vrot.slane %v1767, 1
      %v1906 = vrot.slane %v1768, 1
      %v1907 = vsel %vm395, %v1905, %v1906
      %v1908 = vrot.slane %v1769, 1
      %v1909 = vsel %vm395, %v1906, %v1908
      %v1910 = vrot.slane %v1770, 1
      %v1911 = vrot.slane %v1771, 1
      %v1912 = vsel %vm395, %v1910, %v1911
      %v1913 = vrot.slane %v1772, 1
      %v1914 = vsel %vm395, %v1911, %v1913
      %v1915 = vrot.slane %v1773, 1
      %v1916 = vrot.slane %v1774, 1
      %v1917 = vsel %vm395, %v1915, %v1916
      %v1918 = vrot.slane %v1775, 1
      %v1919 = vsel %vm395, %v1916, %v1918
      %1920 = vrot.lane.b32.xlu0 %v1832, 4
      %v1921 = vpop.permute.xlu0 %1920
      %1922 = vrot.lane.b32.xlu0 %v1834, 4
      %v1923 = vpop.permute.xlu0 %1922
      %1924 = vrot.lane.b32.xlu0 %v1837, 4
      %v1925 = vpop.permute.xlu0 %1924
      %1926 = vrot.lane.b32.xlu0 %v1839, 4
      %v1927 = vpop.permute.xlu0 %1926
      %1928 = vrot.lane.b32.xlu0 %v1842, 4
      %v1929 = vpop.permute.xlu0 %1928
      %1930 = vrot.lane.b32.xlu0 %v1844, 4
      %v1931 = vpop.permute.xlu0 %1930
      %1932 = vrot.lane.b32.xlu0 %v1847, 4
      %v1933 = vpop.permute.xlu0 %1932
      %1934 = vrot.lane.b32.xlu0 %v1849, 4
      %v1935 = vpop.permute.xlu0 %1934
      %1936 = vrot.lane.b32.xlu0 %v1852, 4
      %v1937 = vpop.permute.xlu0 %1936
      %1938 = vrot.lane.b32.xlu0 %v1854, 4
      %v1939 = vpop.permute.xlu0 %1938
      %1940 = vrot.lane.b32.xlu0 %v1857, 4
      %v1941 = vpop.permute.xlu0 %1940
      %1942 = vrot.lane.b32.xlu0 %v1859, 4
      %v1943 = vpop.permute.xlu0 %1942
      %1944 = vrot.lane.b32.xlu0 %v1862, 4
      %v1945 = vpop.permute.xlu0 %1944
      %1946 = vrot.lane.b32.xlu0 %v1864, 4
      %v1947 = vpop.permute.xlu0 %1946
      %1948 = vrot.lane.b32.xlu0 %v1867, 4
      %v1949 = vpop.permute.xlu0 %1948
      %1950 = vrot.lane.b32.xlu0 %v1869, 4
      %v1951 = vpop.permute.xlu0 %1950
      %1952 = vrot.lane.b32.xlu0 %v1872, 4
      %v1953 = vpop.permute.xlu0 %1952
      %1954 = vrot.lane.b32.xlu0 %v1874, 4
      %v1955 = vpop.permute.xlu0 %1954
      %1956 = vrot.lane.b32.xlu0 %v1877, 4
      %v1957 = vpop.permute.xlu0 %1956
      %1958 = vrot.lane.b32.xlu0 %v1879, 4
      %v1959 = vpop.permute.xlu0 %1958
      %1960 = vrot.lane.b32.xlu0 %v1882, 4
      %v1961 = vpop.permute.xlu0 %1960
      %1962 = vrot.lane.b32.xlu0 %v1884, 4
      %v1963 = vpop.permute.xlu0 %1962
      %1964 = vrot.lane.b32.xlu0 %v1887, 4
      %v1965 = vpop.permute.xlu0 %1964
      %1966 = vrot.lane.b32.xlu0 %v1889, 4
      %v1967 = vpop.permute.xlu0 %1966
      %1968 = vrot.lane.b32.xlu0 %v1892, 4
      %v1969 = vpop.permute.xlu0 %1968
      %1970 = vrot.lane.b32.xlu0 %v1894, 4
      %v1971 = vpop.permute.xlu0 %1970
      %1972 = vrot.lane.b32.xlu0 %v1897, 4
      %v1973 = vpop.permute.xlu0 %1972
      %1974 = vrot.lane.b32.xlu0 %v1899, 4
      %v1975 = vpop.permute.xlu0 %1974
      %1976 = vrot.lane.b32.xlu0 %v1902, 4
      %v1977 = vpop.permute.xlu0 %1976
      %1978 = vrot.lane.b32.xlu0 %v1904, 4
      %v1979 = vpop.permute.xlu0 %1978
      %1980 = vrot.lane.b32.xlu0 %v1907, 4
      %v1981 = vpop.permute.xlu0 %1980
      %1982 = vrot.lane.b32.xlu0 %v1909, 4
      %v1983 = vpop.permute.xlu0 %1982
      %1984 = vrot.lane.b32.xlu0 %v1912, 4
      %v1985 = vpop.permute.xlu0 %1984
      %1986 = vrot.lane.b32.xlu0 %v1914, 4
      %v1987 = vpop.permute.xlu0 %1986
      %1988 = vrot.lane.b32.xlu0 %v1917, 4
      %v1989 = vpop.permute.xlu0 %1988
      %1990 = vrot.lane.b32.xlu0 %v1919, 4
      %v1991 = vpop.permute.xlu0 %1990
      %v2028 = vrot.slane %v1722, 2
      %v2029 = vrot.slane %v1723, 2
      %v2030 = vsel %vm594, %v2028, %v2029
      %v2031 = vrot.slane %v1724, 2
      %v2032 = vsel %vm594, %v2029, %v2031
      %v2033 = vrot.slane %v1725, 2
      %v2034 = vrot.slane %v1726, 2
      %v2035 = vsel %vm594, %v2033, %v2034
      %v2036 = vrot.slane %v1727, 2
      %v2037 = vsel %vm594, %v2034, %v2036
      %v2038 = vrot.slane %v1728, 2
      %v2039 = vrot.slane %v1729, 2
      %v2040 = vsel %vm594, %v2038, %v2039
      %v2041 = vrot.slane %v1730, 2
      %v2042 = vsel %vm594, %v2039, %v2041
      %v2043 = vrot.slane %v1731, 2
      %v2044 = vrot.slane %v1732, 2
      %v2045 = vsel %vm594, %v2043, %v2044
      %v2046 = vrot.slane %v1733, 2
      %v2047 = vsel %vm594, %v2044, %v2046
      %v2048 = vrot.slane %v1734, 2
      %v2049 = vrot.slane %v1735, 2
      %v2050 = vsel %vm594, %v2048, %v2049
      %v2051 = vrot.slane %v1736, 2
      %v2052 = vsel %vm594, %v2049, %v2051
      %v2053 = vrot.slane %v1737, 2
      %v2054 = vrot.slane %v1738, 2
      %v2055 = vsel %vm594, %v2053, %v2054
      %v2056 = vrot.slane %v1739, 2
      %v2057 = vsel %vm594, %v2054, %v2056
      %v2058 = vrot.slane %v1740, 2
      %v2059 = vrot.slane %v1741, 2
      %v2060 = vsel %vm594, %v2058, %v2059
      %v2061 = vrot.slane %v1742, 2
      %v2062 = vsel %vm594, %v2059, %v2061
      %v2063 = vrot.slane %v1743, 2
      %v2064 = vrot.slane %v1744, 2
      %v2065 = vsel %vm594, %v2063, %v2064
      %v2066 = vrot.slane %v1745, 2
      %v2067 = vsel %vm594, %v2064, %v2066
      %v2068 = vrot.slane %v1746, 2
      %v2069 = vrot.slane %v1747, 2
      %v2070 = vsel %vm594, %v2068, %v2069
      %v2071 = vrot.slane %v1748, 2
      %v2072 = vsel %vm594, %v2069, %v2071
      %v2073 = vrot.slane %v1749, 2
      %v2074 = vrot.slane %v1750, 2
      %v2075 = vsel %vm594, %v2073, %v2074
      %v2076 = vrot.slane %v1751, 2
      %v2077 = vsel %vm594, %v2074, %v2076
      %v2078 = vrot.slane %v1752, 2
      %v2079 = vrot.slane %v1753, 2
      %v2080 = vsel %vm594, %v2078, %v2079
      %v2081 = vrot.slane %v1754, 2
      %v2082 = vsel %vm594, %v2079, %v2081
      %v2083 = vrot.slane %v1755, 2
      %v2084 = vrot.slane %v1756, 2
      %v2085 = vsel %vm594, %v2083, %v2084
      %v2086 = vrot.slane %v1757, 2
      %v2087 = vsel %vm594, %v2084, %v2086
      %v2088 = vrot.slane %v1758, 2
      %v2089 = vrot.slane %v1759, 2
      %v2090 = vsel %vm594, %v2088, %v2089
      %v2091 = vrot.slane %v1760, 2
      %v2092 = vsel %vm594, %v2089, %v2091
      %v2093 = vrot.slane %v1761, 2
      %v2094 = vrot.slane %v1762, 2
      %v2095 = vsel %vm594, %v2093, %v2094
      %v2096 = vrot.slane %v1763, 2
      %v2097 = vsel %vm594, %v2094, %v2096
      %v2098 = vrot.slane %v1764, 2
      %v2099 = vrot.slane %v1765, 2
      %v2100 = vsel %vm594, %v2098, %v2099
      %v2101 = vrot.slane %v1766, 2
      %v2102 = vsel %vm594, %v2099, %v2101
      %v2103 = vrot.slane %v1767, 2
      %v2104 = vrot.slane %v1768, 2
      %v2105 = vsel %vm594, %v2103, %v2104
      %v2106 = vrot.slane %v1769, 2
      %v2107 = vsel %vm594, %v2104, %v2106
      %v2108 = vrot.slane %v1770, 2
      %v2109 = vrot.slane %v1771, 2
      %v2110 = vsel %vm594, %v2108, %v2109
      %v2111 = vrot.slane %v1772, 2
      %v2112 = vsel %vm594, %v2109, %v2111
      %v2113 = vrot.slane %v1773, 2
      %v2114 = vrot.slane %v1774, 2
      %v2115 = vsel %vm594, %v2113, %v2114
      %v2116 = vrot.slane %v1775, 2
      %v2117 = vsel %vm594, %v2114, %v2116
      %2118 = vrot.lane.b32.xlu0 %v2030, 8
      %v2119 = vpop.permute.xlu0 %2118
      %2120 = vrot.lane.b32.xlu0 %v2032, 8
      %v2121 = vpop.permute.xlu0 %2120
      %2122 = vrot.lane.b32.xlu0 %v2035, 8
      %v2123 = vpop.permute.xlu0 %2122
      %2124 = vrot.lane.b32.xlu0 %v2037, 8
      %v2125 = vpop.permute.xlu0 %2124
      %2126 = vrot.lane.b32.xlu0 %v2040, 8
      %v2127 = vpop.permute.xlu0 %2126
      %2128 = vrot.lane.b32.xlu0 %v2042, 8
      %v2129 = vpop.permute.xlu0 %2128
      %2130 = vrot.lane.b32.xlu0 %v2045, 8
      %v2131 = vpop.permute.xlu0 %2130
      %2132 = vrot.lane.b32.xlu0 %v2047, 8
      %v2133 = vpop.permute.xlu0 %2132
      %2134 = vrot.lane.b32.xlu0 %v2050, 8
      %v2135 = vpop.permute.xlu0 %2134
      %2136 = vrot.lane.b32.xlu0 %v2052, 8
      %v2137 = vpop.permute.xlu0 %2136
      %2138 = vrot.lane.b32.xlu0 %v2055, 8
      %v2139 = vpop.permute.xlu0 %2138
      %2140 = vrot.lane.b32.xlu0 %v2057, 8
      %v2141 = vpop.permute.xlu0 %2140
      %2142 = vrot.lane.b32.xlu0 %v2060, 8
      %v2143 = vpop.permute.xlu0 %2142
      %2144 = vrot.lane.b32.xlu0 %v2062, 8
      %v2145 = vpop.permute.xlu0 %2144
      %2146 = vrot.lane.b32.xlu0 %v2065, 8
      %v2147 = vpop.permute.xlu0 %2146
      %2148 = vrot.lane.b32.xlu0 %v2067, 8
      %v2149 = vpop.permute.xlu0 %2148
      %2150 = vrot.lane.b32.xlu0 %v2070, 8
      %v2151 = vpop.permute.xlu0 %2150
      %2152 = vrot.lane.b32.xlu0 %v2072, 8
      %v2153 = vpop.permute.xlu0 %2152
      %2154 = vrot.lane.b32.xlu0 %v2075, 8
      %v2155 = vpop.permute.xlu0 %2154
      %2156 = vrot.lane.b32.xlu0 %v2077, 8
      %v2157 = vpop.permute.xlu0 %2156
      %2158 = vrot.lane.b32.xlu0 %v2080, 8
      %v2159 = vpop.permute.xlu0 %2158
      %2160 = vrot.lane.b32.xlu0 %v2082, 8
      %v2161 = vpop.permute.xlu0 %2160
      %2162 = vrot.lane.b32.xlu0 %v2085, 8
      %v2163 = vpop.permute.xlu0 %2162
      %2164 = vrot.lane.b32.xlu0 %v2087, 8
      %v2165 = vpop.permute.xlu0 %2164
      %2166 = vrot.lane.b32.xlu0 %v2090, 8
      %v2167 = vpop.permute.xlu0 %2166
      %2168 = vrot.lane.b32.xlu0 %v2092, 8
      %v2169 = vpop.permute.xlu0 %2168
      %2170 = vrot.lane.b32.xlu0 %v2095, 8
      %v2171 = vpop.permute.xlu0 %2170
      %2172 = vrot.lane.b32.xlu0 %v2097, 8
      %v2173 = vpop.permute.xlu0 %2172
      %2174 = vrot.lane.b32.xlu0 %v2100, 8
      %v2175 = vpop.permute.xlu0 %2174
      %2176 = vrot.lane.b32.xlu0 %v2102, 8
      %v2177 = vpop.permute.xlu0 %2176
      %2178 = vrot.lane.b32.xlu0 %v2105, 8
      %v2179 = vpop.permute.xlu0 %2178
      %2180 = vrot.lane.b32.xlu0 %v2107, 8
      %v2181 = vpop.permute.xlu0 %2180
      %2182 = vrot.lane.b32.xlu0 %v2110, 8
      %v2183 = vpop.permute.xlu0 %2182
      %2184 = vrot.lane.b32.xlu0 %v2112, 8
      %v2185 = vpop.permute.xlu0 %2184
      %2186 = vrot.lane.b32.xlu0 %v2115, 8
      %v2187 = vpop.permute.xlu0 %2186
      %2188 = vrot.lane.b32.xlu0 %v2117, 8
      %v2189 = vpop.permute.xlu0 %2188
      %v2226 = vsel %vm204, %v1722, %v1921
      %v2227 = vsel %vm204, %v1723, %v1923
      %v2228 = vsel %vm204, %v1725, %v1925
      %v2229 = vsel %vm204, %v1726, %v1927
      %v2230 = vsel %vm204, %v1728, %v1929
      %v2231 = vsel %vm204, %v1729, %v1931
      %v2232 = vsel %vm204, %v1731, %v1933
      %v2233 = vsel %vm204, %v1732, %v1935
      %v2234 = vsel %vm204, %v1734, %v1937
      %v2235 = vsel %vm204, %v1735, %v1939
      %v2236 = vsel %vm204, %v1737, %v1941
      %v2237 = vsel %vm204, %v1738, %v1943
      %v2238 = vsel %vm204, %v1740, %v1945
      %v2239 = vsel %vm204, %v1741, %v1947
      %v2240 = vsel %vm204, %v1743, %v1949
      %v2241 = vsel %vm204, %v1744, %v1951
      %v2242 = vsel %vm204, %v1746, %v1953
      %v2243 = vsel %vm204, %v1747, %v1955
      %v2244 = vsel %vm204, %v1749, %v1957
      %v2245 = vsel %vm204, %v1750, %v1959
      %v2246 = vsel %vm204, %v1752, %v1961
      %v2247 = vsel %vm204, %v1753, %v1963
      %v2248 = vsel %vm204, %v1755, %v1965
      %v2249 = vsel %vm204, %v1756, %v1967
      %v2250 = vsel %vm204, %v1758, %v1969
      %v2251 = vsel %vm204, %v1759, %v1971
      %v2252 = vsel %vm204, %v1761, %v1973
      %v2253 = vsel %vm204, %v1762, %v1975
      %v2254 = vsel %vm204, %v1764, %v1977
      %v2255 = vsel %vm204, %v1765, %v1979
      %v2256 = vsel %vm204, %v1767, %v1981
      %v2257 = vsel %vm204, %v1768, %v1983
      %v2258 = vsel %vm204, %v1770, %v1985
      %v2259 = vsel %vm204, %v1771, %v1987
      %v2260 = vsel %vm204, %v1773, %v1989
      %v2261 = vsel %vm204, %v1774, %v1991
      %v2262 = vsel %vm829, %v2226, %v2119
      %v2263 = vsel %vm829, %v2227, %v2121
      %v2264 = vsel %vm829, %v2228, %v2123
      %v2265 = vsel %vm829, %v2229, %v2125
      %v2266 = vsel %vm829, %v2230, %v2127
      %v2267 = vsel %vm829, %v2231, %v2129
      %v2268 = vsel %vm829, %v2232, %v2131
      %v2269 = vsel %vm829, %v2233, %v2133
      %v2270 = vsel %vm829, %v2234, %v2135
      %v2271 = vsel %vm829, %v2235, %v2137
      %v2272 = vsel %vm829, %v2236, %v2139
      %v2273 = vsel %vm829, %v2237, %v2141
      %v2274 = vsel %vm829, %v2238, %v2143
      %v2275 = vsel %vm829, %v2239, %v2145
      %v2276 = vsel %vm829, %v2240, %v2147
      %v2277 = vsel %vm829, %v2241, %v2149
      %v2278 = vsel %vm829, %v2242, %v2151
      %v2279 = vsel %vm829, %v2243, %v2153
      %v2280 = vsel %vm829, %v2244, %v2155
      %v2281 = vsel %vm829, %v2245, %v2157
      %v2282 = vsel %vm829, %v2246, %v2159
      %v2283 = vsel %vm829, %v2247, %v2161
      %v2284 = vsel %vm829, %v2248, %v2163
      %v2285 = vsel %vm829, %v2249, %v2165
      %v2286 = vsel %vm829, %v2250, %v2167
      %v2287 = vsel %vm829, %v2251, %v2169
      %v2288 = vsel %vm829, %v2252, %v2171
      %v2289 = vsel %vm829, %v2253, %v2173
      %v2290 = vsel %vm829, %v2254, %v2175
      %v2291 = vsel %vm829, %v2255, %v2177
      %v2292 = vsel %vm829, %v2256, %v2179
      %v2293 = vsel %vm829, %v2257, %v2181
      %v2294 = vsel %vm829, %v2258, %v2183
      %v2295 = vsel %vm829, %v2259, %v2185
      %v2296 = vsel %vm829, %v2260, %v2187
      %v2297 = vsel %vm829, %v2261, %v2189
      %v2298 = vld [vmem:[%s2] sm:$0xff]
      %v2299 = vld [vmem:[%s2 + $0x8] sm:$0xf]
      %s2300 = scalar_lea.vmem %s2, 16
      %v2301 = vld [vmem:[%s2300] sm:$0xff]
      %v2302 = vld [vmem:[%s2300 + $0x8] sm:$0xf]
      %v2304 = vsel %vm871, %v2264, 0
      %v2307 = vsel %vm871, %v2265, 0
      %v2310 = vsel %vm871, %v2266, 0
      %v2313 = vsel %vm871, %v2267, 0
      %v2316 = vsel %vm871, %v2268, 0
      %v2319 = vsel %vm871, %v2269, 0
      %v2322 = vsel %vm871, %v2270, 0
      %v2325 = vsel %vm871, %v2271, 0
      %v2328 = vsel %vm871, %v2272, 0
      %v2331 = vsel %vm871, %v2273, 0
      %v2334 = vsel %vm871, %v2274, 0
      %v2337 = vsel %vm871, %v2275, 0
      %v2340 = vsel %vm871, %v2276, 0
      %v2343 = vsel %vm871, %v2277, 0
      %v2346 = vsel %vm871, %v2278, 0
      %v2349 = vsel %vm871, %v2279, 0
      %v2352 = vsel %vm871, %v2280, 0
      %v2355 = vsel %vm871, %v2281, 0
      %v2358 = vsel %vm871, %v2282, 0
      %v2361 = vsel %vm871, %v2283, 0
      %v2364 = vsel %vm871, %v2284, 0
      %v2367 = vsel %vm871, %v2285, 0
      %v2370 = vsel %vm871, %v2286, 0
      %v2373 = vsel %vm871, %v2287, 0
      %v2376 = vsel %vm871, %v2288, 0
      %v2379 = vsel %vm871, %v2289, 0
      %v2382 = vsel %vm871, %v2290, 0
      %v2385 = vsel %vm871, %v2291, 0
      %v2388 = vsel %vm871, %v2292, 0
      %v2391 = vsel %vm871, %v2293, 0
      %v2394 = vsel %vm871, %v2294, 0
      %v2397 = vsel %vm871, %v2295, 0
      %v2400 = vsel %vm968, %v2302, 0
      %2402 = vmatpush.msra.mxu0 0.0
      %2403 = vmatpush.msra.mxu0 0.0
      %2404 = vmatpush.msra.mxu0 0.0
      %2405 = vmatpush.msra.mxu0 0.0
      %2406 = vmatpush.msra.mxu0 0.0
      %2407 = vmatpush.msra.mxu0 0.0
      %2408 = vmatpush.msra.mxu0 0.0
      %2409 = vmatpush.msra.mxu0 0.0
      %2410 = vmatpush.msra.mxu0 0.0
      %2411 = vmatpush.msra.mxu0 0.0
      %2412 = vmatpush.msra.mxu0 0.0
      %2413 = vmatpush.msra.mxu0 0.0
      %2414 = vmatpush.msra.mxu0 0.0
      %2415 = vmatpush.msra.mxu0 0.0
      %2416 = vmatpush.msra.mxu0 %v2400
      %2417 = vmatpush.msra.mxu0 %v2301
      %2418 = vmatmul.f32.gmra.mxu0 %v2304
      %v2419 = vpop.f32.mrf.mxu0
      %v2420 = vadd.f32 0.0, %v2419
      %2421 = vmatmul.f32.gmra.mxu0 %v2307
      %v2422 = vpop.f32.mrf.mxu0
      %v2423 = vadd.f32 0.0, %v2422
      %2424 = vmatmul.f32.gmra.mxu0 %v2310
      %v2425 = vpop.f32.mrf.mxu0
      %v2426 = vadd.f32 0.0, %v2425
      %2427 = vmatmul.f32.gmra.mxu0 %v2313
      %v2428 = vpop.f32.mrf.mxu0
      %v2429 = vadd.f32 0.0, %v2428
      %2430 = vmatmul.f32.gmra.mxu0 %v2316
      %v2431 = vpop.f32.mrf.mxu0
      %v2432 = vadd.f32 0.0, %v2431
      %2433 = vmatmul.f32.gmra.mxu0 %v2319
      %v2434 = vpop.f32.mrf.mxu0
      %v2435 = vadd.f32 0.0, %v2434
      %2436 = vmatmul.f32.gmra.mxu0 %v2322
      %v2437 = vpop.f32.mrf.mxu0
      %v2438 = vadd.f32 0.0, %v2437
      %2439 = vmatmul.f32.gmra.mxu0 %v2325
      %v2440 = vpop.f32.mrf.mxu0
      %v2441 = vadd.f32 0.0, %v2440
      %2442 = vmatmul.f32.gmra.mxu0 %v2328
      %v2443 = vpop.f32.mrf.mxu0
      %v2444 = vadd.f32 0.0, %v2443
      %2445 = vmatmul.f32.gmra.mxu0 %v2331
      %v2446 = vpop.f32.mrf.mxu0
      %v2447 = vadd.f32 0.0, %v2446
      %2448 = vmatmul.f32.gmra.mxu0 %v2334
      %v2449 = vpop.f32.mrf.mxu0
      %v2450 = vadd.f32 0.0, %v2449
      %2451 = vmatmul.f32.gmra.mxu0 %v2337
      %v2452 = vpop.f32.mrf.mxu0
      %v2453 = vadd.f32 0.0, %v2452
      %2454 = vmatmul.f32.gmra.mxu0 %v2340
      %v2455 = vpop.f32.mrf.mxu0
      %v2456 = vadd.f32 0.0, %v2455
      %2457 = vmatmul.f32.gmra.mxu0 %v2343
      %v2458 = vpop.f32.mrf.mxu0
      %v2459 = vadd.f32 0.0, %v2458
      %2460 = vmatmul.f32.gmra.mxu0 %v2346
      %v2461 = vpop.f32.mrf.mxu0
      %v2462 = vadd.f32 0.0, %v2461
      %2463 = vmatmul.f32.gmra.mxu0 %v2349
      %v2464 = vpop.f32.mrf.mxu0
      %v2465 = vadd.f32 0.0, %v2464
      %2466 = vmatmul.f32.gmra.mxu0 %v2352
      %v2467 = vpop.f32.mrf.mxu0
      %v2468 = vadd.f32 0.0, %v2467
      %2469 = vmatmul.f32.gmra.mxu0 %v2355
      %v2470 = vpop.f32.mrf.mxu0
      %v2471 = vadd.f32 0.0, %v2470
      %2472 = vmatmul.f32.gmra.mxu0 %v2358
      %v2473 = vpop.f32.mrf.mxu0
      %v2474 = vadd.f32 0.0, %v2473
      %2475 = vmatmul.f32.gmra.mxu0 %v2361
      %v2476 = vpop.f32.mrf.mxu0
      %v2477 = vadd.f32 0.0, %v2476
      %2478 = vmatmul.f32.gmra.mxu0 %v2364
      %v2479 = vpop.f32.mrf.mxu0
      %v2480 = vadd.f32 0.0, %v2479
      %2481 = vmatmul.f32.gmra.mxu0 %v2367
      %v2482 = vpop.f32.mrf.mxu0
      %v2483 = vadd.f32 0.0, %v2482
      %2484 = vmatmul.f32.gmra.mxu0 %v2370
      %v2485 = vpop.f32.mrf.mxu0
      %v2486 = vadd.f32 0.0, %v2485
      %2487 = vmatmul.f32.gmra.mxu0 %v2373
      %v2488 = vpop.f32.mrf.mxu0
      %v2489 = vadd.f32 0.0, %v2488
      %2490 = vmatmul.f32.gmra.mxu0 %v2376
      %v2491 = vpop.f32.mrf.mxu0
      %v2492 = vadd.f32 0.0, %v2491
      %2493 = vmatmul.f32.gmra.mxu0 %v2379
      %v2494 = vpop.f32.mrf.mxu0
      %v2495 = vadd.f32 0.0, %v2494
      %2496 = vmatmul.f32.gmra.mxu0 %v2382
      %v2497 = vpop.f32.mrf.mxu0
      %v2498 = vadd.f32 0.0, %v2497
      %2499 = vmatmul.f32.gmra.mxu0 %v2385
      %v2500 = vpop.f32.mrf.mxu0
      %v2501 = vadd.f32 0.0, %v2500
      %2502 = vmatmul.f32.gmra.mxu0 %v2388
      %v2503 = vpop.f32.mrf.mxu0
      %v2504 = vadd.f32 0.0, %v2503
      %2505 = vmatmul.f32.gmra.mxu0 %v2391
      %v2506 = vpop.f32.mrf.mxu0
      %v2507 = vadd.f32 0.0, %v2506
      %2508 = vmatmul.f32.gmra.mxu0 %v2394
      %v2509 = vpop.f32.mrf.mxu0
      %v2510 = vadd.f32 0.0, %v2509
      %2511 = vmatmul.f32.gmra.mxu0 %v2397
      %v2512 = vpop.f32.mrf.mxu0
      %v2513 = vadd.f32 0.0, %v2512
      %2514 = vdwg.mxu0
      %v2516 = vsel %vm871, %v2262, 0
      %v2519 = vsel %vm871, %v2263, 0
      %v2522 = vsel %vm968, %v2299, 0
      %2524 = vmatpush.msra.mxu0 0.0
      %2525 = vmatpush.msra.mxu0 0.0
      %2526 = vmatpush.msra.mxu0 0.0
      %2527 = vmatpush.msra.mxu0 0.0
      %2528 = vmatpush.msra.mxu0 0.0
      %2529 = vmatpush.msra.mxu0 0.0
      %2530 = vmatpush.msra.mxu0 0.0
      %2531 = vmatpush.msra.mxu0 0.0
      %2532 = vmatpush.msra.mxu0 0.0
      %2533 = vmatpush.msra.mxu0 0.0
      %2534 = vmatpush.msra.mxu0 0.0
      %2535 = vmatpush.msra.mxu0 0.0
      %2536 = vmatpush.msra.mxu0 0.0
      %2537 = vmatpush.msra.mxu0 0.0
      %2538 = vmatpush.msra.mxu0 %v2522
      %2539 = vmatpush.msra.mxu0 %v2298
      %2540 = vmatmul.f32.gmra.mxu0 %v2516
      %v2541 = vpop.f32.mrf.mxu0
      %v2542 = vadd.f32 %v2420, %v2541
      %2543 = vmatmul.f32.gmra.mxu0 %v2519
      %v2544 = vpop.f32.mrf.mxu0
      %v2545 = vadd.f32 %v2423, %v2544
      %2546 = vmatmul.f32.gmra.mxu0 %v2304
      %v2547 = vpop.f32.mrf.mxu0
      %v2548 = vadd.f32 %v2426, %v2547
      %2549 = vmatmul.f32.gmra.mxu0 %v2307
      %v2550 = vpop.f32.mrf.mxu0
      %v2551 = vadd.f32 %v2429, %v2550
      %2552 = vmatmul.f32.gmra.mxu0 %v2310
      %v2553 = vpop.f32.mrf.mxu0
      %v2554 = vadd.f32 %v2432, %v2553
      %2555 = vmatmul.f32.gmra.mxu0 %v2313
      %v2556 = vpop.f32.mrf.mxu0
      %v2557 = vadd.f32 %v2435, %v2556
      %2558 = vmatmul.f32.gmra.mxu0 %v2316
      %v2559 = vpop.f32.mrf.mxu0
      %v2560 = vadd.f32 %v2438, %v2559
      %2561 = vmatmul.f32.gmra.mxu0 %v2319
      %v2562 = vpop.f32.mrf.mxu0
      %v2563 = vadd.f32 %v2441, %v2562
      %2564 = vmatmul.f32.gmra.mxu0 %v2322
      %v2565 = vpop.f32.mrf.mxu0
      %v2566 = vadd.f32 %v2444, %v2565
      %2567 = vmatmul.f32.gmra.mxu0 %v2325
      %v2568 = vpop.f32.mrf.mxu0
      %v2569 = vadd.f32 %v2447, %v2568
      %2570 = vmatmul.f32.gmra.mxu0 %v2328
      %v2571 = vpop.f32.mrf.mxu0
      %v2572 = vadd.f32 %v2450, %v2571
      %2573 = vmatmul.f32.gmra.mxu0 %v2331
      %v2574 = vpop.f32.mrf.mxu0
      %v2575 = vadd.f32 %v2453, %v2574
      %2576 = vmatmul.f32.gmra.mxu0 %v2334
      %v2577 = vpop.f32.mrf.mxu0
      %v2578 = vadd.f32 %v2456, %v2577
      %2579 = vmatmul.f32.gmra.mxu0 %v2337
      %v2580 = vpop.f32.mrf.mxu0
      %v2581 = vadd.f32 %v2459, %v2580
      %2582 = vmatmul.f32.gmra.mxu0 %v2340
      %v2583 = vpop.f32.mrf.mxu0
      %v2584 = vadd.f32 %v2462, %v2583
      %2585 = vmatmul.f32.gmra.mxu0 %v2343
      %v2586 = vpop.f32.mrf.mxu0
      %v2587 = vadd.f32 %v2465, %v2586
      %2588 = vmatmul.f32.gmra.mxu0 %v2346
      %v2589 = vpop.f32.mrf.mxu0
      %v2590 = vadd.f32 %v2468, %v2589
      %2591 = vmatmul.f32.gmra.mxu0 %v2349
      %v2592 = vpop.f32.mrf.mxu0
      %v2593 = vadd.f32 %v2471, %v2592
      %2594 = vmatmul.f32.gmra.mxu0 %v2352
      %v2595 = vpop.f32.mrf.mxu0
      %v2596 = vadd.f32 %v2474, %v2595
      %2597 = vmatmul.f32.gmra.mxu0 %v2355
      %v2598 = vpop.f32.mrf.mxu0
      %v2599 = vadd.f32 %v2477, %v2598
      %2600 = vmatmul.f32.gmra.mxu0 %v2358
      %v2601 = vpop.f32.mrf.mxu0
      %v2602 = vadd.f32 %v2480, %v2601
      %2603 = vmatmul.f32.gmra.mxu0 %v2361
      %v2604 = vpop.f32.mrf.mxu0
      %v2605 = vadd.f32 %v2483, %v2604
      %2606 = vmatmul.f32.gmra.mxu0 %v2364
      %v2607 = vpop.f32.mrf.mxu0
      %v2608 = vadd.f32 %v2486, %v2607
      %2609 = vmatmul.f32.gmra.mxu0 %v2367
      %v2610 = vpop.f32.mrf.mxu0
      %v2611 = vadd.f32 %v2489, %v2610
      %2612 = vmatmul.f32.gmra.mxu0 %v2370
      %v2613 = vpop.f32.mrf.mxu0
      %v2614 = vadd.f32 %v2492, %v2613
      %2615 = vmatmul.f32.gmra.mxu0 %v2373
      %v2616 = vpop.f32.mrf.mxu0
      %v2617 = vadd.f32 %v2495, %v2616
      %2618 = vmatmul.f32.gmra.mxu0 %v2376
      %v2619 = vpop.f32.mrf.mxu0
      %v2620 = vadd.f32 %v2498, %v2619
      %2621 = vmatmul.f32.gmra.mxu0 %v2379
      %v2622 = vpop.f32.mrf.mxu0
      %v2623 = vadd.f32 %v2501, %v2622
      %2624 = vmatmul.f32.gmra.mxu0 %v2382
      %v2625 = vpop.f32.mrf.mxu0
      %v2626 = vadd.f32 %v2504, %v2625
      %2627 = vmatmul.f32.gmra.mxu0 %v2385
      %v2628 = vpop.f32.mrf.mxu0
      %v2629 = vadd.f32 %v2507, %v2628
      %2630 = vmatmul.f32.gmra.mxu0 %v2388
      %v2631 = vpop.f32.mrf.mxu0
      %v2632 = vadd.f32 %v2510, %v2631
      %2633 = vmatmul.f32.gmra.mxu0 %v2391
      %v2634 = vpop.f32.mrf.mxu0
      %v2635 = vadd.f32 %v2513, %v2634
      %2636 = vdwg.mxu0
      %s2637 = scalar_lea.vmem %s2, 32
      %v2638 = vld [vmem:[%s2637] sm:$0xff]
      %v2639 = vld [vmem:[%s2637 + $0x8] sm:$0xf]
      %v2641 = vsel %vm871, %v2296, 0
      %v2644 = vsel %vm871, %v2297, 0
      %v2647 = vsel %vm968, %v2639, 0
      %2649 = vmatpush.msra.mxu0 0.0
      %2650 = vmatpush.msra.mxu0 0.0
      %2651 = vmatpush.msra.mxu0 0.0
      %2652 = vmatpush.msra.mxu0 0.0
      %2653 = vmatpush.msra.mxu0 0.0
      %2654 = vmatpush.msra.mxu0 0.0
      %2655 = vmatpush.msra.mxu0 0.0
      %2656 = vmatpush.msra.mxu0 0.0
      %2657 = vmatpush.msra.mxu0 0.0
      %2658 = vmatpush.msra.mxu0 0.0
      %2659 = vmatpush.msra.mxu0 0.0
      %2660 = vmatpush.msra.mxu0 0.0
      %2661 = vmatpush.msra.mxu0 0.0
      %2662 = vmatpush.msra.mxu0 0.0
      %2663 = vmatpush.msra.mxu0 %v2647
      %2664 = vmatpush.msra.mxu0 %v2638
      %2665 = vmatmul.f32.gmra.mxu0 %v2310
      %v2666 = vpop.f32.mrf.mxu0
      %v2667 = vadd.f32 0.0, %v2666
      %2668 = vmatmul.f32.gmra.mxu0 %v2313
      %v2669 = vpop.f32.mrf.mxu0
      %v2670 = vadd.f32 0.0, %v2669
      %2671 = vmatmul.f32.gmra.mxu0 %v2316
      %v2672 = vpop.f32.mrf.mxu0
      %v2673 = vadd.f32 0.0, %v2672
      %2674 = vmatmul.f32.gmra.mxu0 %v2319
      %v2675 = vpop.f32.mrf.mxu0
      %v2676 = vadd.f32 0.0, %v2675
      %2677 = vmatmul.f32.gmra.mxu0 %v2322
      %v2678 = vpop.f32.mrf.mxu0
      %v2679 = vadd.f32 0.0, %v2678
      %2680 = vmatmul.f32.gmra.mxu0 %v2325
      %v2681 = vpop.f32.mrf.mxu0
      %v2682 = vadd.f32 0.0, %v2681
      %2683 = vmatmul.f32.gmra.mxu0 %v2328
      %v2684 = vpop.f32.mrf.mxu0
      %v2685 = vadd.f32 0.0, %v2684
      %2686 = vmatmul.f32.gmra.mxu0 %v2331
      %v2687 = vpop.f32.mrf.mxu0
      %v2688 = vadd.f32 0.0, %v2687
      %2689 = vmatmul.f32.gmra.mxu0 %v2334
      %v2690 = vpop.f32.mrf.mxu0
      %v2691 = vadd.f32 0.0, %v2690
      %2692 = vmatmul.f32.gmra.mxu0 %v2337
      %v2693 = vpop.f32.mrf.mxu0
      %v2694 = vadd.f32 0.0, %v2693
      %2695 = vmatmul.f32.gmra.mxu0 %v2340
      %v2696 = vpop.f32.mrf.mxu0
      %v2697 = vadd.f32 0.0, %v2696
      %2698 = vmatmul.f32.gmra.mxu0 %v2343
      %v2699 = vpop.f32.mrf.mxu0
      %v2700 = vadd.f32 0.0, %v2699
      %2701 = vmatmul.f32.gmra.mxu0 %v2346
      %v2702 = vpop.f32.mrf.mxu0
      %v2703 = vadd.f32 0.0, %v2702
      %2704 = vmatmul.f32.gmra.mxu0 %v2349
      %v2705 = vpop.f32.mrf.mxu0
      %v2706 = vadd.f32 0.0, %v2705
      %2707 = vmatmul.f32.gmra.mxu0 %v2352
      %v2708 = vpop.f32.mrf.mxu0
      %v2709 = vadd.f32 0.0, %v2708
      %2710 = vmatmul.f32.gmra.mxu0 %v2355
      %v2711 = vpop.f32.mrf.mxu0
      %v2712 = vadd.f32 0.0, %v2711
      %2713 = vmatmul.f32.gmra.mxu0 %v2358
      %v2714 = vpop.f32.mrf.mxu0
      %v2715 = vadd.f32 0.0, %v2714
      %2716 = vmatmul.f32.gmra.mxu0 %v2361
      %v2717 = vpop.f32.mrf.mxu0
      %v2718 = vadd.f32 0.0, %v2717
      %2719 = vmatmul.f32.gmra.mxu0 %v2364
      %v2720 = vpop.f32.mrf.mxu0
      %v2721 = vadd.f32 0.0, %v2720
      %2722 = vmatmul.f32.gmra.mxu0 %v2367
      %v2723 = vpop.f32.mrf.mxu0
      %v2724 = vadd.f32 0.0, %v2723
      %2725 = vmatmul.f32.gmra.mxu0 %v2370
      %v2726 = vpop.f32.mrf.mxu0
      %v2727 = vadd.f32 0.0, %v2726
      %2728 = vmatmul.f32.gmra.mxu0 %v2373
      %v2729 = vpop.f32.mrf.mxu0
      %v2730 = vadd.f32 0.0, %v2729
      %2731 = vmatmul.f32.gmra.mxu0 %v2376
      %v2732 = vpop.f32.mrf.mxu0
      %v2733 = vadd.f32 0.0, %v2732
      %2734 = vmatmul.f32.gmra.mxu0 %v2379
      %v2735 = vpop.f32.mrf.mxu0
      %v2736 = vadd.f32 0.0, %v2735
      %2737 = vmatmul.f32.gmra.mxu0 %v2382
      %v2738 = vpop.f32.mrf.mxu0
      %v2739 = vadd.f32 0.0, %v2738
      %2740 = vmatmul.f32.gmra.mxu0 %v2385
      %v2741 = vpop.f32.mrf.mxu0
      %v2742 = vadd.f32 0.0, %v2741
      %2743 = vmatmul.f32.gmra.mxu0 %v2388
      %v2744 = vpop.f32.mrf.mxu0
      %v2745 = vadd.f32 0.0, %v2744
      %2746 = vmatmul.f32.gmra.mxu0 %v2391
      %v2747 = vpop.f32.mrf.mxu0
      %v2748 = vadd.f32 0.0, %v2747
      %2749 = vmatmul.f32.gmra.mxu0 %v2394
      %v2750 = vpop.f32.mrf.mxu0
      %v2751 = vadd.f32 0.0, %v2750
      %2752 = vmatmul.f32.gmra.mxu0 %v2397
      %v2753 = vpop.f32.mrf.mxu0
      %v2754 = vadd.f32 0.0, %v2753
      %2755 = vmatmul.f32.gmra.mxu0 %v2641
      %v2756 = vpop.f32.mrf.mxu0
      %v2757 = vadd.f32 0.0, %v2756
      %2758 = vmatmul.f32.gmra.mxu0 %v2644
      %v2759 = vpop.f32.mrf.mxu0
      %v2760 = vadd.f32 0.0, %v2759
      %2761 = vdwg.mxu0
      %v2762 = vadd.f32 %v2542, %v2667
      %v2763 = vadd.f32 %v2545, %v2670
      %v2764 = vadd.f32 %v2548, %v2673
      %v2765 = vadd.f32 %v2551, %v2676
      %v2766 = vadd.f32 %v2554, %v2679
      %v2767 = vadd.f32 %v2557, %v2682
      %v2768 = vadd.f32 %v2560, %v2685
      %v2769 = vadd.f32 %v2563, %v2688
      %v2770 = vadd.f32 %v2566, %v2691
      %v2771 = vadd.f32 %v2569, %v2694
      %v2772 = vadd.f32 %v2572, %v2697
      %v2773 = vadd.f32 %v2575, %v2700
      %v2774 = vadd.f32 %v2578, %v2703
      %v2775 = vadd.f32 %v2581, %v2706
      %v2776 = vadd.f32 %v2584, %v2709
      %v2777 = vadd.f32 %v2587, %v2712
      %v2778 = vadd.f32 %v2590, %v2715
      %v2779 = vadd.f32 %v2593, %v2718
      %v2780 = vadd.f32 %v2596, %v2721
      %v2781 = vadd.f32 %v2599, %v2724
      %v2782 = vadd.f32 %v2602, %v2727
      %v2783 = vadd.f32 %v2605, %v2730
      %v2784 = vadd.f32 %v2608, %v2733
      %v2785 = vadd.f32 %v2611, %v2736
      %v2786 = vadd.f32 %v2614, %v2739
      %v2787 = vadd.f32 %v2617, %v2742
      %v2788 = vadd.f32 %v2620, %v2745
      %v2789 = vadd.f32 %v2623, %v2748
      %v2790 = vadd.f32 %v2626, %v2751
      %v2791 = vadd.f32 %v2629, %v2754
      %v2792 = vadd.f32 %v2632, %v2757
      %v2793 = vadd.f32 %v2635, %v2760
      %v2794 = vsel %vm204, %v2762, 0.0
      %v2795 = vsel %vm204, %v2763, 0.0
      %v2796 = vadd.f32 %v2794, %v2795
      %v2797 = vsel %vm204, %v2764, 0.0
      %v2798 = vadd.f32 %v2796, %v2797
      %v2799 = vsel %vm204, %v2765, 0.0
      %v2800 = vadd.f32 %v2798, %v2799
      %v2801 = vsel %vm204, %v2766, 0.0
      %v2802 = vadd.f32 %v2800, %v2801
      %v2803 = vsel %vm204, %v2767, 0.0
      %v2804 = vadd.f32 %v2802, %v2803
      %v2805 = vsel %vm204, %v2768, 0.0
      %v2806 = vadd.f32 %v2804, %v2805
      %v2807 = vsel %vm204, %v2769, 0.0
      %v2808 = vadd.f32 %v2806, %v2807
      %v2809 = vsel %vm204, %v2770, 0.0
      %v2810 = vadd.f32 %v2808, %v2809
      %v2811 = vsel %vm204, %v2771, 0.0
      %v2812 = vadd.f32 %v2810, %v2811
      %v2813 = vsel %vm204, %v2772, 0.0
      %v2814 = vadd.f32 %v2812, %v2813
      %v2815 = vsel %vm204, %v2773, 0.0
      %v2816 = vadd.f32 %v2814, %v2815
      %v2817 = vsel %vm204, %v2774, 0.0
      %v2818 = vadd.f32 %v2816, %v2817
      %v2819 = vsel %vm204, %v2775, 0.0
      %v2820 = vadd.f32 %v2818, %v2819
      %v2821 = vsel %vm204, %v2776, 0.0
      %v2822 = vadd.f32 %v2820, %v2821
      %v2823 = vsel %vm204, %v2777, 0.0
      %v2824 = vadd.f32 %v2822, %v2823
      %v2825 = vsel %vm204, %v2778, 0.0
      %v2826 = vadd.f32 %v2824, %v2825
      %v2827 = vsel %vm204, %v2779, 0.0
      %v2828 = vadd.f32 %v2826, %v2827
      %v2829 = vsel %vm204, %v2780, 0.0
      %v2830 = vadd.f32 %v2828, %v2829
      %v2831 = vsel %vm204, %v2781, 0.0
      %v2832 = vadd.f32 %v2830, %v2831
      %v2833 = vsel %vm204, %v2782, 0.0
      %v2834 = vadd.f32 %v2832, %v2833
      %v2835 = vsel %vm204, %v2783, 0.0
      %v2836 = vadd.f32 %v2834, %v2835
      %v2837 = vsel %vm204, %v2784, 0.0
      %v2838 = vadd.f32 %v2836, %v2837
      %v2839 = vsel %vm204, %v2785, 0.0
      %v2840 = vadd.f32 %v2838, %v2839
      %v2841 = vsel %vm204, %v2786, 0.0
      %v2842 = vadd.f32 %v2840, %v2841
      %v2843 = vsel %vm204, %v2787, 0.0
      %v2844 = vadd.f32 %v2842, %v2843
      %v2845 = vsel %vm204, %v2788, 0.0
      %v2846 = vadd.f32 %v2844, %v2845
      %v2847 = vsel %vm204, %v2789, 0.0
      %v2848 = vadd.f32 %v2846, %v2847
      %v2849 = vsel %vm204, %v2790, 0.0
      %v2850 = vadd.f32 %v2848, %v2849
      %v2851 = vsel %vm204, %v2791, 0.0
      %v2852 = vadd.f32 %v2850, %v2851
      %v2853 = vsel %vm204, %v2792, 0.0
      %v2854 = vadd.f32 %v2852, %v2853
      %v2855 = vsel %vm204, %v2793, 0.0
      %v2856 = vadd.f32 %v2854, %v2855
      %v2857 = vrot.slane %v2856, 4
      %v2858 = vadd.f32 %v2856, %v2857
      %v2859 = vrot.slane %v2858, 2
      %v2860 = vadd.f32 %v2858, %v2859
      %v2861 = vrot.slane %v2860, 1
      %v2862 = vadd.f32 %v2860, %v2861
      %v2863 = vmul.f32 %v2762, %v2762
      %v2864 = vmul.f32 %v2763, %v2763
      %v2865 = vmul.f32 %v2764, %v2764
      %v2866 = vmul.f32 %v2765, %v2765
      %v2867 = vmul.f32 %v2766, %v2766
      %v2868 = vmul.f32 %v2767, %v2767
      %v2869 = vmul.f32 %v2768, %v2768
      %v2870 = vmul.f32 %v2769, %v2769
      %v2871 = vmul.f32 %v2770, %v2770
      %v2872 = vmul.f32 %v2771, %v2771
      %v2873 = vmul.f32 %v2772, %v2772
      %v2874 = vmul.f32 %v2773, %v2773
      %v2875 = vmul.f32 %v2774, %v2774
      %v2876 = vmul.f32 %v2775, %v2775
      %v2877 = vmul.f32 %v2776, %v2776
      %v2878 = vmul.f32 %v2777, %v2777
      %v2879 = vmul.f32 %v2778, %v2778
      %v2880 = vmul.f32 %v2779, %v2779
      %v2881 = vmul.f32 %v2780, %v2780
      %v2882 = vmul.f32 %v2781, %v2781
      %v2883 = vmul.f32 %v2782, %v2782
      %v2884 = vmul.f32 %v2783, %v2783
      %v2885 = vmul.f32 %v2784, %v2784
      %v2886 = vmul.f32 %v2785, %v2785
      %v2887 = vmul.f32 %v2786, %v2786
      %v2888 = vmul.f32 %v2787, %v2787
      %v2889 = vmul.f32 %v2788, %v2788
      %v2890 = vmul.f32 %v2789, %v2789
      %v2891 = vmul.f32 %v2790, %v2790
      %v2892 = vmul.f32 %v2791, %v2791
      %v2893 = vmul.f32 %v2792, %v2792
      %v2894 = vmul.f32 %v2793, %v2793
      %v2895 = vsel %vm204, %v2863, 0.0
      %v2896 = vsel %vm204, %v2864, 0.0
      %v2897 = vadd.f32 %v2895, %v2896
      %v2898 = vsel %vm204, %v2865, 0.0
      %v2899 = vadd.f32 %v2897, %v2898
      %v2900 = vsel %vm204, %v2866, 0.0
      %v2901 = vadd.f32 %v2899, %v2900
      %v2902 = vsel %vm204, %v2867, 0.0
      %v2903 = vadd.f32 %v2901, %v2902
      %v2904 = vsel %vm204, %v2868, 0.0
      %v2905 = vadd.f32 %v2903, %v2904
      %v2906 = vsel %vm204, %v2869, 0.0
      %v2907 = vadd.f32 %v2905, %v2906
      %v2908 = vsel %vm204, %v2870, 0.0
      %v2909 = vadd.f32 %v2907, %v2908
      %v2910 = vsel %vm204, %v2871, 0.0
      %v2911 = vadd.f32 %v2909, %v2910
      %v2912 = vsel %vm204, %v2872, 0.0
      %v2913 = vadd.f32 %v2911, %v2912
      %v2914 = vsel %vm204, %v2873, 0.0
      %v2915 = vadd.f32 %v2913, %v2914
      %v2916 = vsel %vm204, %v2874, 0.0
      %v2917 = vadd.f32 %v2915, %v2916
      %v2918 = vsel %vm204, %v2875, 0.0
      %v2919 = vadd.f32 %v2917, %v2918
      %v2920 = vsel %vm204, %v2876, 0.0
      %v2921 = vadd.f32 %v2919, %v2920
      %v2922 = vsel %vm204, %v2877, 0.0
      %v2923 = vadd.f32 %v2921, %v2922
      %v2924 = vsel %vm204, %v2878, 0.0
      %v2925 = vadd.f32 %v2923, %v2924
      %v2926 = vsel %vm204, %v2879, 0.0
      %v2927 = vadd.f32 %v2925, %v2926
      %v2928 = vsel %vm204, %v2880, 0.0
      %v2929 = vadd.f32 %v2927, %v2928
      %v2930 = vsel %vm204, %v2881, 0.0
      %v2931 = vadd.f32 %v2929, %v2930
      %v2932 = vsel %vm204, %v2882, 0.0
      %v2933 = vadd.f32 %v2931, %v2932
      %v2934 = vsel %vm204, %v2883, 0.0
      %v2935 = vadd.f32 %v2933, %v2934
      %v2936 = vsel %vm204, %v2884, 0.0
      %v2937 = vadd.f32 %v2935, %v2936
      %v2938 = vsel %vm204, %v2885, 0.0
      %v2939 = vadd.f32 %v2937, %v2938
      %v2940 = vsel %vm204, %v2886, 0.0
      %v2941 = vadd.f32 %v2939, %v2940
      %v2942 = vsel %vm204, %v2887, 0.0
      %v2943 = vadd.f32 %v2941, %v2942
      %v2944 = vsel %vm204, %v2888, 0.0
      %v2945 = vadd.f32 %v2943, %v2944
      %v2946 = vsel %vm204, %v2889, 0.0
      %v2947 = vadd.f32 %v2945, %v2946
      %v2948 = vsel %vm204, %v2890, 0.0
      %v2949 = vadd.f32 %v2947, %v2948
      %v2950 = vsel %vm204, %v2891, 0.0
      %v2951 = vadd.f32 %v2949, %v2950
      %v2952 = vsel %vm204, %v2892, 0.0
      %v2953 = vadd.f32 %v2951, %v2952
      %v2954 = vsel %vm204, %v2893, 0.0
      %v2955 = vadd.f32 %v2953, %v2954
      %v2956 = vsel %vm204, %v2894, 0.0
      %v2957 = vadd.f32 %v2955, %v2956
      %v2958 = vrot.slane %v2957, 4
      %v2959 = vadd.f32 %v2957, %v2958
      %v2960 = vrot.slane %v2959, 2
      %v2961 = vadd.f32 %v2959, %v2960
      %v2962 = vrot.slane %v2961, 1
      %v2963 = vadd.f32 %v2961, %v2962
      %v2964 = vmul.f32 %v2862, 0.00390625
      %v2965 = vmul.f32 %v2963, 0.00390625
      %v2966 = vmul.f32 %v2964, %v2964
      %v2967 = vsub.f32 %v2965, %v2966
      %v2968 = vmax.f32 %v2967, 0.0
      %v2969 = vsub.f32 %v2762, %v2964
      %v2970 = vsub.f32 %v2763, %v2964
      %v2971 = vsub.f32 %v2764, %v2964
      %v2972 = vsub.f32 %v2765, %v2964
      %v2973 = vsub.f32 %v2766, %v2964
      %v2974 = vsub.f32 %v2767, %v2964
      %v2975 = vsub.f32 %v2768, %v2964
      %v2976 = vsub.f32 %v2769, %v2964
      %v2977 = vsub.f32 %v2770, %v2964
      %v2978 = vsub.f32 %v2771, %v2964
      %v2979 = vsub.f32 %v2772, %v2964
      %v2980 = vsub.f32 %v2773, %v2964
      %v2981 = vsub.f32 %v2774, %v2964
      %v2982 = vsub.f32 %v2775, %v2964
      %v2983 = vsub.f32 %v2776, %v2964
      %v2984 = vsub.f32 %v2777, %v2964
      %v2985 = vsub.f32 %v2778, %v2964
      %v2986 = vsub.f32 %v2779, %v2964
      %v2987 = vsub.f32 %v2780, %v2964
      %v2988 = vsub.f32 %v2781, %v2964
      %v2989 = vsub.f32 %v2782, %v2964
      %v2990 = vsub.f32 %v2783, %v2964
      %v2991 = vsub.f32 %v2784, %v2964
      %v2992 = vsub.f32 %v2785, %v2964
      %v2993 = vsub.f32 %v2786, %v2964
      %v2994 = vsub.f32 %v2787, %v2964
      %v2995 = vsub.f32 %v2788, %v2964
      %v2996 = vsub.f32 %v2789, %v2964
      %v2997 = vsub.f32 %v2790, %v2964
      %v2998 = vsub.f32 %v2791, %v2964
      %v2999 = vsub.f32 %v2792, %v2964
      %v3000 = vsub.f32 %v2793, %v2964
      %v3001 = vadd.f32 %v2968, 1e-05
      %v3002 = vrsqrt.pop %v3001
      %v3003 = vmul.f32 %v3002, %v3001
      %v3004 = vmul.f32 %v3003, %v3002
      %v3005 = vmul.f32 0.5, %v3004
      %v3006 = vsub.f32 1.5, %v3005
      %v3007 = vmul.f32 %v3002, %v3006
      %vm3008 = vweird.f32 %v3001
      %vm3009 = vweird.f32 %v3002
      %vm3010 = vmor %vm3008, %vm3009
      %v3011 = vsel %vm3010, %v3002, %v3007
      %v3012 = vmul.f32 %v2969, %v3011
      %v3013 = vmul.f32 %v2970, %v3011
      %v3014 = vmul.f32 %v2971, %v3011
      %v3015 = vmul.f32 %v2972, %v3011
      %v3016 = vmul.f32 %v2973, %v3011
      %v3017 = vmul.f32 %v2974, %v3011
      %v3018 = vmul.f32 %v2975, %v3011
      %v3019 = vmul.f32 %v2976, %v3011
      %v3020 = vmul.f32 %v2977, %v3011
      %v3021 = vmul.f32 %v2978, %v3011
      %v3022 = vmul.f32 %v2979, %v3011
      %v3023 = vmul.f32 %v2980, %v3011
      %v3024 = vmul.f32 %v2981, %v3011
      %v3025 = vmul.f32 %v2982, %v3011
      %v3026 = vmul.f32 %v2983, %v3011
      %v3027 = vmul.f32 %v2984, %v3011
      %v3028 = vmul.f32 %v2985, %v3011
      %v3029 = vmul.f32 %v2986, %v3011
      %v3030 = vmul.f32 %v2987, %v3011
      %v3031 = vmul.f32 %v2988, %v3011
      %v3032 = vmul.f32 %v2989, %v3011
      %v3033 = vmul.f32 %v2990, %v3011
      %v3034 = vmul.f32 %v2991, %v3011
      %v3035 = vmul.f32 %v2992, %v3011
      %v3036 = vmul.f32 %v2993, %v3011
      %v3037 = vmul.f32 %v2994, %v3011
      %v3038 = vmul.f32 %v2995, %v3011
      %v3039 = vmul.f32 %v2996, %v3011
      %v3040 = vmul.f32 %v2997, %v3011
      %v3041 = vmul.f32 %v2998, %v3011
      %v3042 = vmul.f32 %v2999, %v3011
      %v3043 = vmul.f32 %v3000, %v3011
      %v3044 = vadd.f32 %v171, %v3012
      %v3045 = vadd.f32 %v172, %v3013
      %v3046 = vadd.f32 %v173, %v3014
      %v3047 = vadd.f32 %v174, %v3015
      %v3048 = vadd.f32 %v175, %v3016
      %v3049 = vadd.f32 %v176, %v3017
      %v3050 = vadd.f32 %v177, %v3018
      %v3051 = vadd.f32 %v178, %v3019
      %v3052 = vadd.f32 %v179, %v3020
      %v3053 = vadd.f32 %v180, %v3021
      %v3054 = vadd.f32 %v181, %v3022
      %v3055 = vadd.f32 %v182, %v3023
      %v3056 = vadd.f32 %v183, %v3024
      %v3057 = vadd.f32 %v184, %v3025
      %v3058 = vadd.f32 %v185, %v3026
      %v3059 = vadd.f32 %v186, %v3027
      %v3060 = vadd.f32 %v187, %v3028
      %v3061 = vadd.f32 %v188, %v3029
      %v3062 = vadd.f32 %v189, %v3030
      %v3063 = vadd.f32 %v190, %v3031
      %v3064 = vadd.f32 %v191, %v3032
      %v3065 = vadd.f32 %v192, %v3033
      %v3066 = vadd.f32 %v193, %v3034
      %v3067 = vadd.f32 %v194, %v3035
      %v3068 = vadd.f32 %v195, %v3036
      %v3069 = vadd.f32 %v196, %v3037
      %v3070 = vadd.f32 %v197, %v3038
      %v3071 = vadd.f32 %v198, %v3039
      %v3072 = vadd.f32 %v199, %v3040
      %v3073 = vadd.f32 %v200, %v3041
      %v3074 = vadd.f32 %v201, %v3042
      %v3075 = vadd.f32 %v202, %v3043
      %3076 = vst.msk [vmem:[%s170] sm:$0xff] %vm204, %v3044
      %3077 = vst.msk [vmem:[%s170 + $0x8] sm:$0xff] %vm204, %v3045
      %3078 = vst.msk [vmem:[%s170 + $0x10] sm:$0xff] %vm204, %v3046
      %3079 = vst.msk [vmem:[%s170 + $0x18] sm:$0xff] %vm204, %v3047
      %3080 = vst.msk [vmem:[%s170 + $0x20] sm:$0xff] %vm204, %v3048
      %3081 = vst.msk [vmem:[%s170 + $0x28] sm:$0xff] %vm204, %v3049
      %3082 = vst.msk [vmem:[%s170 + $0x30] sm:$0xff] %vm204, %v3050
      %3083 = vst.msk [vmem:[%s170 + $0x38] sm:$0xff] %vm204, %v3051
      %3084 = vst.msk [vmem:[%s170 + $0x40] sm:$0xff] %vm204, %v3052
      %3085 = vst.msk [vmem:[%s170 + $0x48] sm:$0xff] %vm204, %v3053
      %3086 = vst.msk [vmem:[%s170 + $0x50] sm:$0xff] %vm204, %v3054
      %3087 = vst.msk [vmem:[%s170 + $0x58] sm:$0xff] %vm204, %v3055
      %3088 = vst.msk [vmem:[%s170 + $0x60] sm:$0xff] %vm204, %v3056
      %3089 = vst.msk [vmem:[%s170 + $0x68] sm:$0xff] %vm204, %v3057
      %3090 = vst.msk [vmem:[%s170 + $0x70] sm:$0xff] %vm204, %v3058
      %3091 = vst.msk [vmem:[%s170 + $0x78] sm:$0xff] %vm204, %v3059
      %3092 = vst.msk [vmem:[%s170 + $0x80] sm:$0xff] %vm204, %v3060
      %3093 = vst.msk [vmem:[%s170 + $0x88] sm:$0xff] %vm204, %v3061
      %3094 = vst.msk [vmem:[%s170 + $0x90] sm:$0xff] %vm204, %v3062
      %3095 = vst.msk [vmem:[%s170 + $0x98] sm:$0xff] %vm204, %v3063
      %3096 = vst.msk [vmem:[%s170 + $0xa0] sm:$0xff] %vm204, %v3064
      %3097 = vst.msk [vmem:[%s170 + $0xa8] sm:$0xff] %vm204, %v3065
      %3098 = vst.msk [vmem:[%s170 + $0xb0] sm:$0xff] %vm204, %v3066
      %3099 = vst.msk [vmem:[%s170 + $0xb8] sm:$0xff] %vm204, %v3067
      %3100 = vst.msk [vmem:[%s170 + $0xc0] sm:$0xff] %vm204, %v3068
      %3101 = vst.msk [vmem:[%s170 + $0xc8] sm:$0xff] %vm204, %v3069
      %3102 = vst.msk [vmem:[%s170 + $0xd0] sm:$0xff] %vm204, %v3070
      %3103 = vst.msk [vmem:[%s170 + $0xd8] sm:$0xff] %vm204, %v3071
      %3104 = vst.msk [vmem:[%s170 + $0xe0] sm:$0xff] %vm204, %v3072
      %3105 = vst.msk [vmem:[%s170 + $0xe8] sm:$0xff] %vm204, %v3073
      %3106 = vst.msk [vmem:[%s170 + $0xf0] sm:$0xff] %vm204, %v3074
      %3107 = vst.msk [vmem:[%s170 + $0xf8] sm:$0xff] %vm204, %v3075
      %p3108 = scmp.lt.s32.totalorder %s14, 1
      %s3109 = scalar_select %p3108, %s14, 1
      %s3110 = smul.addr %s3109, 32
      %s3111 = smul.addr %s3110, 8
      %s3112 = scalar_lea.vmem %s3, %s3111
      // Predicated region
      $region33: #{tpu_custom_call.1} parent=31 // pred_check
        %p3113 = pneg %p100
      $region34: #{tpu_custom_call.1} parent=31 // pred_check_branch
        %3115 = sbr.rel (%p3113) target = $region36
      $region35: #{tpu_custom_call.1} parent=31 // pred_region
        _
      $region36: #{tpu_custom_call.1} parent=31 // pred_fallthru
        _
    $region32: #{tpu_custom_call.1} parent=5 // pred_fallthru
      _
    %p3116 = scmp.le.s32.totalorder 2, %s9
    // Predicated region
    $region37: #{tpu_custom_call.1} parent=5 // pred_check
      %p3117 = pneg %p3116
    $region38: #{tpu_custom_call.1} parent=5 // pred_check_branch
      %3119 = sbr.rel (%p3117) target = $region40
    $region39: #{tpu_custom_call.1} parent=5 // pred_region
      %s3120 = ssub.s32 %s9, 2
      // Predicated region
      $region41: #{tpu_custom_call.1} parent=39 // pred_check
        %p3121 = pneg %p106
      $region42: #{tpu_custom_call.1} parent=39 // pred_check_branch
        %3123 = sbr.rel (%p3121) target = $region44
      $region43: #{tpu_custom_call.1} parent=39 // pred_region
        %p3124 = scmp.lt.s32.totalorder %s15, 1
        %s3125 = scalar_select %p3124, %s15, 1
        %s3126 = smul.addr %s3125, 32
        %s3127 = smul.addr %s3126, 8
        %s3128 = scalar_lea.vmem %s3, %s3127
      $region44: #{tpu_custom_call.1} parent=39 // pred_fallthru
        _
    $region40: #{tpu_custom_call.1} parent=5 // pred_fallthru
      _
  $region6: #{tpu_custom_call.1} parent=0 // loop_footer
    %s13 = sadd.s32 1, %s9
  $region7: #{tpu_custom_call.1} parent=0 // loop_footer_branch
    %8 = sbr.rel target = $region3
  $region8: #{tpu_custom_call.1} parent=0 // loop_exit
    _

</llo_original>
